<compile_context>
chip_gen: v6e
topology: v6e:2x2x1
jax: 0.10.0
libtpu: 0.0.40
codegen_flags: <defaults>
</compile_context>

<pallas_src>
import functools

import jax
import jax.numpy as jnp
import numpy as np
from jax import lax
from jax.experimental import pallas as pl
from jax.experimental.pallas import tpu as pltpu

LANE = 128
SUBLANE = 8


def _round_up(x, m):
    return (x + m - 1) // m * m


# --------------------------------------------------------------------------
# Kernel
# --------------------------------------------------------------------------
def gru_model_kernel(x_ref,                                    # (TC, BB, I)
                     wih1_ref, whh1_ref, b1_ref, b1hn_ref,     # layer 1
                     w2_ref, b2rz_ref, b2in_ref, b2hn_ref,     # layer 2 (fused)
                     wfc_ref, bfc_ref,                         # final linear
                     out_ref,                                  # (BB, Op)
                     gi1_ref, h1_ref, h2_ref, gh1_ref,         # VMEM scratch
                     *, unroll, t_valid, need_mask, num_time_chunks):
    TC, BB, I = x_ref.shape
    Hp1 = whh1_ref.shape[0]
    Hp2 = b2hn_ref.shape[1]
    w_dtype = whh1_ref.dtype
    tc_idx = pl.program_id(1)

    def sigmoid(v):
        # One EUP transcendental (tanh) instead of exp + divide.
        return 0.5 * jnp.tanh(0.5 * v) + 0.5

    # ---- Stage 1: hoisted layer-1 input projection for this time chunk.
    # bih1 and the r/z half of bhh1 are folded into b1 here (the n-gate bhh1
    # must stay inside r*(...)), so no (BB, N) bias constants are held live
    # across the recurrence.
    x_flat = x_ref[...].reshape(TC * BB, I).astype(w_dtype)
    gi1_all = jnp.dot(x_flat, wih1_ref[...], preferred_element_type=jnp.float32)
    gi1_all = gi1_all + b1_ref[...].astype(jnp.float32)
    gi1_ref[...] = gi1_all.reshape(TC, BB, 3 * Hp1).astype(gi1_ref.dtype)

    # ---- Loop-invariant weight loads / (1, N) bias rows (hoisted).
    whh1 = whh1_ref[...]
    w2 = w2_ref[...]
    b1hn = b1hn_ref[...].astype(jnp.float32)     # (1, Hp1)   bhh1 n-gate
    b2rz = b2rz_ref[...].astype(jnp.float32)     # (1, 2*Hp2) bih2+bhh2 r,z
    b2in = b2in_ref[...].astype(jnp.float32)     # (1, Hp2)   bih2 n-gate
    b2hn = b2hn_ref[...].astype(jnp.float32)     # (1, Hp2)   bhh2 n-gate

    # ---- Recurrent state (persists in VMEM scratch across time chunks).
    if num_time_chunks == 1:
        h1_0 = jnp.zeros((BB, Hp1), jnp.float32)
        h2_0 = jnp.zeros((BB, Hp2), jnp.float32)
        gh1_0 = jnp.zeros((BB, 3 * Hp1), jnp.float32)
    else:
        @pl.when(tc_idx == 0)
        def _init():
            h1_ref[...] = jnp.zeros_like(h1_ref)
            h2_ref[...] = jnp.zeros_like(h2_ref)
            gh1_ref[...] = jnp.zeros_like(gh1_ref)
        h1_0 = h1_ref[...]
        h2_0 = h2_ref[...]
        gh1_0 = gh1_ref[...]

    def step(t, carry):
        h1, h2, gh1 = carry       # f32; gh1 = h1 @ Whh1 pipelined from step t-1

        # ----- layer 1 (input proj + biases hoisted; PyTorch gate order r,z,n)
        gi1 = gi1_ref[t].astype(jnp.float32)                  # (BB, 3*Hp1)
        rz1 = sigmoid(gi1[:, :2 * Hp1] + gh1[:, :2 * Hp1])
        r1 = rz1[:, :Hp1]
        z1 = rz1[:, Hp1:]
        n1 = jnp.tanh(gi1[:, 2 * Hp1:] + r1 * (gh1[:, 2 * Hp1:] + b1hn))
        h1_new = (1.0 - z1) * n1 + z1 * h1

        # ----- layer 2: ONE fused MXU op on [h1, h2] -> [rz_sum | gi_n | gh_n]
        h12 = jnp.concatenate([h1_new, h2], axis=1).astype(w_dtype)
        g2 = jnp.dot(h12, w2, preferred_element_type=jnp.float32)   # (BB, 4*Hp2)

        # Software-pipelined recurrent matmul for layer-1's NEXT step: only
        # depends on h1_new, so its MXU push overlaps layer-2's gate math.
        gh1_next = jnp.dot(h1_new.astype(w_dtype), whh1,
                           preferred_element_type=jnp.float32)

        rz2 = sigmoid(g2[:, :2 * Hp2] + b2rz)
        r2 = rz2[:, :Hp2]
        z2 = rz2[:, Hp2:]
        n2 = jnp.tanh(g2[:, 2 * Hp2:3 * Hp2] + b2in
                      + r2 * (g2[:, 3 * Hp2:] + b2hn))
        h2_new = (1.0 - z2) * n2 + z2 * h2

        if need_mask:   # only the (padded) last chunk can contain t >= t_valid
            valid = (tc_idx * TC + t) < t_valid
            h1_new = jnp.where(valid, h1_new, h1)
            h2_new = jnp.where(valid, h2_new, h2)
            gh1_next = jnp.where(valid, gh1_next, gh1)
        return (h1_new, h2_new, gh1_next)

    h1_f, h2_f, gh1_f = lax.fori_loop(0, TC, step, (h1_0, h2_0, gh1_0),
                                      unroll=unroll)

    if num_time_chunks > 1:
        h1_ref[...] = h1_f
        h2_ref[...] = h2_f
        gh1_ref[...] = gh1_f

    # out2[:, -1, :] == final hidden of GRU-2; eval-mode dropout is identity.
    def finalize():
        out_ref[...] = (jnp.dot(h2_f.astype(w_dtype), wfc_ref[...],
                                preferred_element_type=jnp.float32)
                        + bfc_ref[...].astype(jnp.float32))

    if num_time_chunks == 1:
        finalize()
    else:
        pl.when(tc_idx == num_time_chunks - 1)(finalize)


# --------------------------------------------------------------------------
# Parameter preparation (one-time: transpose, lane-align gates, fuse, pad)
# --------------------------------------------------------------------------
def _pack_gate_weight_t(w, H, Hp, in_pad, dtype):
    """w: (3H, in) PyTorch layout -> (in_pad, 3*Hp) transposed, lane-aligned gates."""
    in_dim = w.shape[1]
    out = jnp.zeros((in_pad, 3 * Hp), dtype)
    for g in range(3):
        blk = w[g * H:(g + 1) * H, :].T.astype(dtype)           # (in, H)
        out = out.at[:in_dim, g * Hp:g * Hp + H].set(blk)
    return out


def _pack_gate_bias(b, H, Hp, dtype):
    out = jnp.zeros((1, 3 * Hp), dtype)
    for g in range(3):
        out = out.at[0, g * Hp:g * Hp + H].set(b[g * H:(g + 1) * H].astype(dtype))
    return out


def prepare_params(params, dtype=jnp.float32):
    """One-time packing: transpose, gate lane-alignment, layer-2 matmul fusion.

    dtype=jnp.bfloat16 halves weight VMEM / DMA and uses the native bf16 MXU
    path on v6e/v7x (accumulation and gate math stay f32)."""
    (wih1, whh1, bih1, bhh1, wih2, whh2, bih2, bhh2, wfc, bfc) = params
    H1 = whh1.shape[1]
    H2 = whh2.shape[1]
    I = wih1.shape[1]
    O = wfc.shape[0]
    Hp1 = _round_up(H1, LANE)
    Hp2 = _round_up(H2, LANE)
    Op = _round_up(O, LANE)

    wih1_p = _pack_gate_weight_t(wih1, H1, Hp1, I, dtype)        # (I,   3*Hp1)
    whh1_p = _pack_gate_weight_t(whh1, H1, Hp1, Hp1, dtype)      # (Hp1, 3*Hp1)

    # Layer-1 biases: bih1 (all gates) + bhh1 (r,z only) fold into stage 1;
    # the n-gate bhh1 must stay inside r*(...) so it is kept separately.
    b1 = _pack_gate_bias(bih1, H1, Hp1, jnp.float32)
    bhh1_p = _pack_gate_bias(bhh1, H1, Hp1, jnp.float32)
    b1 = b1.at[:, :2 * Hp1].add(bhh1_p[:, :2 * Hp1])             # (1, 3*Hp1)
    b1hn = bhh1_p[:, 2 * Hp1:]                                   # (1, Hp1)

    # Layer-2 fused weight: [h1 | h2] @ W2 -> [rz_sum | gi_n | gh_n]
    wih2_p = _pack_gate_weight_t(wih2, H2, Hp2, Hp1, dtype)      # (Hp1, 3*Hp2)
    whh2_p = _pack_gate_weight_t(whh2, H2, Hp2, Hp2, dtype)      # (Hp2, 3*Hp2)
    w2 = jnp.zeros((Hp1 + Hp2, 4 * Hp2), dtype)
    w2 = w2.at[:Hp1, :2 * Hp2].set(wih2_p[:, :2 * Hp2])          # rz from h1
    w2 = w2.at[Hp1:, :2 * Hp2].set(whh2_p[:, :2 * Hp2])          # rz from h2
    w2 = w2.at[:Hp1, 2 * Hp2:3 * Hp2].set(wih2_p[:, 2 * Hp2:])   # gi_n (h1 only)
    w2 = w2.at[Hp1:, 3 * Hp2:].set(whh2_p[:, 2 * Hp2:])          # gh_n (h2 only)

    bih2_p = _pack_gate_bias(bih2, H2, Hp2, jnp.float32)
    bhh2_p = _pack_gate_bias(bhh2, H2, Hp2, jnp.float32)
    b2rz = (bih2_p + bhh2_p)[:, :2 * Hp2]                        # (1, 2*Hp2)
    b2in = bih2_p[:, 2 * Hp2:]                                   # (1, Hp2)
    b2hn = bhh2_p[:, 2 * Hp2:]                                   # (1, Hp2)

    wfc_p = jnp.zeros((Hp2, Op), dtype).at[:H2, :O].set(wfc.T.astype(dtype))
    bfc_p = jnp.zeros((1, Op), jnp.float32).at[0, :O].set(bfc)

    prepared = (wih1_p, whh1_p, b1, b1hn, w2, b2rz, b2in, b2hn, wfc_p, bfc_p)
    meta = dict(I=I, H1=H1, H2=H2, Hp1=Hp1, Hp2=Hp2, O=O, Op=Op)
    return prepared, meta


# --------------------------------------------------------------------------
# Forward wrapper
# --------------------------------------------------------------------------
def gru_model_forward(x, prepared, meta, *, gi_dtype=None,
                      min_batch_blocks=1, time_chunk=None):
    """x: (B, T, input_size) float32. Returns (B, output_size) float32.

    min_batch_blocks=2 splits the 'parallel' batch axis across both v7x
    TensorCores; time_chunk overrides the VMEM-budgeted time chunking."""
    B, T, I = x.shape
    Hp1, Hp2, Op, O = meta["Hp1"], meta["Hp2"], meta["Op"], meta["O"]
    w_dtype = prepared[0].dtype
    if gi_dtype is None:
        gi_dtype = w_dtype            # bf16 weights -> bf16 gi1 scratch

    # ---- batch blocking: BB up to 256 rows (fills the 256-wide MXU M dim on
    # v6e/v7x); only split over the parallel grid axis when asked or B is huge.
    B_pad = _round_up(B, SUBLANE)
    blocks = max(1, int(min_batch_blocks))
    BB = min(256, _round_up(-(-B_pad // blocks), SUBLANE))
    B_pad = _round_up(B_pad, BB)
    nb = B_pad // BB

    # ---- time chunking: bound per-chunk VMEM (2x double-buffered x chunk +
    # gi1 scratch) to ~32 MiB so the kernel also fits v7x's 64 MiB VMEM.
    if time_chunk is None:
        per_t = BB * (2 * I * 4 + 3 * Hp1 * np.dtype(gi_dtype).itemsize)
        time_chunk = int(max(1, min(T, (32 << 20) // max(per_t, 1), 512)))
    TC = max(1, min(int(time_chunk), T))
    T_pad = _round_up(T, TC)
    nt = T_pad // TC
    need_mask = T_pad != T

    # Time-major + pad.
    # TODO(synk): fold this transpose into the kernel's stage-1 read (batch-major
    # x blocks) to avoid the separate HBM pass over x.
    x_tm = jnp.transpose(x, (1, 0, 2))                           # (T, B, I)
    if T_pad != T or B_pad != B:
        x_tm = jnp.pad(x_tm, ((0, T_pad - T), (0, B_pad - B), (0, 0)))

    unroll = True if TC <= 32 else 8
    kernel = functools.partial(gru_model_kernel, unroll=unroll, t_valid=T,
                               need_mask=need_mask, num_time_chunks=nt)

    # Loop-invariant weights/biases: single resident VMEM copy (no dead
    # second pipeline buffer).
    resident = pl.BlockSpec(memory_space=pltpu.MemorySpace.VMEM)
    in_specs = [pl.BlockSpec((TC, BB, I), lambda b, tc: (tc, b, 0))]
    in_specs += [resident] * len(prepared)

    out = pl.pallas_call(
        kernel,
        out_shape=jax.ShapeDtypeStruct((B_pad, Op), jnp.float32),
        grid=(nb, nt),
        in_specs=in_specs,
        out_specs=pl.BlockSpec((BB, Op), lambda b, tc: (b, 0)),
        scratch_shapes=[
            pltpu.VMEM((TC, BB, 3 * Hp1), gi_dtype),   # hoisted layer-1 gates
            pltpu.VMEM((BB, Hp1), jnp.float32),        # h1 across time chunks
            pltpu.VMEM((BB, Hp2), jnp.float32),        # h2 across time chunks
            pltpu.VMEM((BB, 3 * Hp1), jnp.float32),    # pipelined gh1(t+1)
        ],
        compiler_params=pltpu.CompilerParams(
            dimension_semantics=("parallel", "arbitrary"),
            vmem_limit_bytes=64 << 20),
    )(x_tm, *prepared)

    return out[:B, :O]


# --------------------------------------------------------------------------
# Init + pure-JAX reference (PyTorch semantics)
# --------------------------------------------------------------------------
def init_params(key, input_size, hidden1, hidden2, output_size):
    """Deterministic init matching PyTorch shapes (uniform(-1/sqrt(H), 1/sqrt(H)))."""
    ks = jax.random.split(key, 10)

    def u(k, shape, bound):
        return jax.random.uniform(k, shape, jnp.float32, -bound, bound)

    b1 = 1.0 / np.sqrt(hidden1)
    b2 = 1.0 / np.sqrt(hidden2)
    bf = 1.0 / np.sqrt(hidden2)
    return (
        u(ks[0], (3 * hidden1, input_size), b1),   # gru1.weight_ih_l0
        u(ks[1], (3 * hidden1, hidden1), b1),      # gru1.weight_hh_l0
        u(ks[2], (3 * hidden1,), b1),              # gru1.bias_ih_l0
        u(ks[3], (3 * hidden1,), b1),              # gru1.bias_hh_l0
        u(ks[4], (3 * hidden2, hidden1), b2),      # gru2.weight_ih_l0
        u(ks[5], (3 * hidden2, hidden2), b2),      # gru2.weight_hh_l0
        u(ks[6], (3 * hidden2,), b2),              # gru2.bias_ih_l0
        u(ks[7], (3 * hidden2,), b2),              # gru2.bias_hh_l0
        u(ks[8], (output_size, hidden2), bf),      # fc.weight
        u(ks[9], (output_size,), bf),              # fc.bias
    )


def reference_forward(x, params):
    """Pure-JAX reference replicating torch.nn.GRU semantics."""
    (wih1, whh1, bih1, bhh1, wih2, whh2, bih2, bhh2, wfc, bfc) = params
    B = x.shape[0]
    H1 = whh1.shape[1]
    H2 = whh2.shape[1]

    def cell(xt, h, wih, whh, b_ih, b_hh, H):
        gi = xt @ wih.T + b_ih
        gh = h @ whh.T + b_hh
        r = jax.nn.sigmoid(gi[:, :H] + gh[:, :H])
        z = jax.nn.sigmoid(gi[:, H:2 * H] + gh[:, H:2 * H])
        n = jnp.tanh(gi[:, 2 * H:] + r * gh[:, 2 * H:])
        return (1.0 - z) * n + z * h

    h1 = jnp.zeros((B, H1), jnp.float32)
    h2 = jnp.zeros((B, H2), jnp.float32)
    for t in range(x.shape[1]):
        h1 = cell(x[:, t, :], h1, wih1, whh1, bih1, bhh1, H1)
        h2 = cell(h1, h2, wih2, whh2, bih2, bhh2, H2)
    return h2 @ wfc.T + bfc


if __name__ == "__main__":
    B, T = 2, 8
    input_size, hidden1, hidden2, output_size = 16, 32, 32, 4

    key = jax.random.PRNGKey(0)
    kx, kp = jax.random.split(key)
    x = jax.random.normal(kx, (B, T, input_size), jnp.float32)
    params = init_params(kp, input_size, hidden1, hidden2, output_size)

    ref = jax.block_until_ready(reference_forward(x, params))

    # ---- f32 weight path: strict correctness check ----
    prepared_f32, meta = prepare_params(params, dtype=jnp.float32)
    out_f32 = jax.block_until_ready(gru_model_forward(x, prepared_f32, meta))
    assert out_f32.shape == (B, output_size)
    np.testing.assert_allclose(np.asarray(out_f32), np.asarray(ref),
                               rtol=1e-4, atol=5e-5)

    # ---- bf16 weights + bf16 gi1 scratch (v6e/v7x deployment path): looser tol ----
    prepared_bf16, meta_bf16 = prepare_params(params, dtype=jnp.bfloat16)
    out_bf16 = jax.block_until_ready(gru_model_forward(x, prepared_bf16, meta_bf16))
    np.testing.assert_allclose(np.asarray(out_bf16), np.asarray(ref),
                               rtol=1e-1, atol=5e-2)

    print("KERNEL_OK")
</pallas_src>

<mosaic_0001>
module attributes {stable_mosaic.version = 11 : i64} {
  func.func @gru_model_kernel(%arg0: i32, %arg1: i32, %arg2: memref<8x8x16xf32, #tpu.memory_space<vmem>>, %arg3: memref<16x384xf32, #tpu.memory_space<vmem>>, %arg4: memref<128x384xf32, #tpu.memory_space<vmem>>, %arg5: memref<1x384xf32, #tpu.memory_space<vmem>>, %arg6: memref<1x128xf32, #tpu.memory_space<vmem>>, %arg7: memref<256x512xf32, #tpu.memory_space<vmem>>, %arg8: memref<1x256xf32, #tpu.memory_space<vmem>>, %arg9: memref<1x128xf32, #tpu.memory_space<vmem>>, %arg10: memref<1x128xf32, #tpu.memory_space<vmem>>, %arg11: memref<128x128xf32, #tpu.memory_space<vmem>>, %arg12: memref<1x128xf32, #tpu.memory_space<vmem>>, %arg13: memref<8x128xf32, #tpu.memory_space<vmem>>, %arg14: memref<8x8x384xf32, #tpu.memory_space<vmem>>, %arg15: memref<8x128xf32, #tpu.memory_space<vmem>>, %arg16: memref<8x128xf32, #tpu.memory_space<vmem>>, %arg17: memref<8x384xf32, #tpu.memory_space<vmem>>) attributes {dimension_semantics = [#tpu.dimension_semantics<parallel>, #tpu.dimension_semantics<arbitrary>], iteration_bounds = array<i64: 1, 1>, scalar_prefetch = 0 : i64, scratch_operands = 4 : i64, tpu.core_type = #tpu.core_type<tc>, window_params = [{transform_indices = @transform_0, window_bounds = array<i64: 8, 8, 16>}, {pipeline_mode = #tpu.pipeline_mode<synchronous>, transform_indices = @transform_1, window_bounds = array<i64: 16, 384>}, {pipeline_mode = #tpu.pipeline_mode<synchronous>, transform_indices = @transform_2, window_bounds = array<i64: 128, 384>}, {pipeline_mode = #tpu.pipeline_mode<synchronous>, transform_indices = @transform_3, window_bounds = array<i64: 1, 384>}, {pipeline_mode = #tpu.pipeline_mode<synchronous>, transform_indices = @transform_4, window_bounds = array<i64: 1, 128>}, {pipeline_mode = #tpu.pipeline_mode<synchronous>, transform_indices = @transform_5, window_bounds = array<i64: 256, 512>}, {pipeline_mode = #tpu.pipeline_mode<synchronous>, transform_indices = @transform_6, window_bounds = array<i64: 1, 256>}, {pipeline_mode = #tpu.pipeline_mode<synchronous>, transform_indices = @transform_7, window_bounds = array<i64: 1, 128>}, {pipeline_mode = #tpu.pipeline_mode<synchronous>, transform_indices = @transform_8, window_bounds = array<i64: 1, 128>}, {pipeline_mode = #tpu.pipeline_mode<synchronous>, transform_indices = @transform_9, window_bounds = array<i64: 128, 128>}, {pipeline_mode = #tpu.pipeline_mode<synchronous>, transform_indices = @transform_10, window_bounds = array<i64: 1, 128>}, {transform_indices = @transform_11, window_bounds = array<i64: 8, 128>}]} {
    %c0 = arith.constant 0 : index
    %c0_0 = arith.constant 0 : index
    %c0_1 = arith.constant 0 : index
    %0 = vector.load %arg2[%c0, %c0_0, %c0_1] : memref<8x8x16xf32, #tpu.memory_space<vmem>>, vector<8x8x16xf32>
    %1 = vector.shape_cast %0 : vector<8x8x16xf32> to vector<64x16xf32>
    %c0_2 = arith.constant 0 : index
    %c0_3 = arith.constant 0 : index
    %2 = vector.load %arg3[%c0_2, %c0_3] : memref<16x384xf32, #tpu.memory_space<vmem>>, vector<16x384xf32>
    %cst = arith.constant dense<0.000000e+00> : vector<64x384xf32>
    %3 = tpu.matmul %1, %2, %cst {dimension_numbers = #tpu.dot_dimension_numbers<[1], [0], [0], [1], [0, 0, 1, 1], [], []>} : vector<64x16xf32>, vector<16x384xf32>, vector<64x384xf32> -> vector<64x384xf32>
    %c0_4 = arith.constant 0 : index
    %c0_5 = arith.constant 0 : index
    %4 = vector.load %arg5[%c0_4, %c0_5] : memref<1x384xf32, #tpu.memory_space<vmem>>, vector<1x384xf32>
    %5 = vector.broadcast %4 : vector<1x384xf32> to vector<64x384xf32>
    %6 = arith.addf %3, %5 : vector<64x384xf32>
    %7 = vector.shape_cast %6 : vector<64x384xf32> to vector<8x8x384xf32>
    %c0_6 = arith.constant 0 : index
    %c0_7 = arith.constant 0 : index
    %c0_8 = arith.constant 0 : index
    %8 = vector.load %arg14[%c0_6, %c0_7, %c0_8] : memref<8x8x384xf32, #tpu.memory_space<vmem>>, vector<8x8x384xf32>
    tpu.vector_store %arg14[%c0_6, %c0_7, %c0_8], %7 {strides = array<i32>} : memref<8x8x384xf32, #tpu.memory_space<vmem>>, vector<8x8x384xf32>,
    %c0_9 = arith.constant 0 : index
    %c0_10 = arith.constant 0 : index
    %9 = vector.load %arg4[%c0_9, %c0_10] : memref<128x384xf32, #tpu.memory_space<vmem>>, vector<128x384xf32>
    %c0_11 = arith.constant 0 : index
    %c0_12 = arith.constant 0 : index
    %10 = vector.load %arg7[%c0_11, %c0_12] : memref<256x512xf32, #tpu.memory_space<vmem>>, vector<256x512xf32>
    %c0_13 = arith.constant 0 : index
    %c0_14 = arith.constant 0 : index
    %11 = vector.load %arg6[%c0_13, %c0_14] : memref<1x128xf32, #tpu.memory_space<vmem>>, vector<1x128xf32>
    %c0_15 = arith.constant 0 : index
    %c0_16 = arith.constant 0 : index
    %12 = vector.load %arg8[%c0_15, %c0_16] : memref<1x256xf32, #tpu.memory_space<vmem>>, vector<1x256xf32>
    %c0_17 = arith.constant 0 : index
    %c0_18 = arith.constant 0 : index
    %13 = vector.load %arg9[%c0_17, %c0_18] : memref<1x128xf32, #tpu.memory_space<vmem>>, vector<1x128xf32>
    %c0_19 = arith.constant 0 : index
    %c0_20 = arith.constant 0 : index
    %14 = vector.load %arg10[%c0_19, %c0_20] : memref<1x128xf32, #tpu.memory_space<vmem>>, vector<1x128xf32>
    %cst_21 = arith.constant 0.000000e+00 : f32
    %15 = vector.broadcast %cst_21 : f32 to vector<8x128xf32>
    %cst_22 = arith.constant 0.000000e+00 : f32
    %16 = vector.broadcast %cst_22 : f32 to vector<8x128xf32>
    %cst_23 = arith.constant 0.000000e+00 : f32
    %17 = vector.broadcast %cst_23 : f32 to vector<8x384xf32>
    %c0_i32 = arith.constant 0 : i32
    %18 = arith.index_cast %c0_i32 : i32 to index
    %c0_24 = arith.constant 0 : index
    %c0_25 = arith.constant 0 : index
    %19 = vector.load %arg14[%18, %c0_24, %c0_25] : memref<8x8x384xf32, #tpu.memory_space<vmem>>, vector<1x8x384xf32>
    %20 = vector.shape_cast %19 : vector<1x8x384xf32> to vector<8x384xf32>
    %21 = vector.extract_strided_slice %20 {offsets = [0, 0], sizes = [8, 256], strides = [1, 1]} : vector<8x384xf32> to vector<8x256xf32>
    %22 = vector.extract_strided_slice %17 {offsets = [0, 0], sizes = [8, 256], strides = [1, 1]} : vector<8x384xf32> to vector<8x256xf32>
    %23 = arith.addf %21, %22 : vector<8x256xf32>
    %cst_26 = arith.constant 5.000000e-01 : f32
    %24 = vector.broadcast %cst_26 : f32 to vector<8x256xf32>
    %25 = arith.mulf %24, %23 : vector<8x256xf32>
    %26 = math.tanh %25 : vector<8x256xf32>
    %cst_27 = arith.constant 5.000000e-01 : f32
    %27 = vector.broadcast %cst_27 : f32 to vector<8x256xf32>
    %28 = arith.mulf %27, %26 : vector<8x256xf32>
    %cst_28 = arith.constant 5.000000e-01 : f32
    %29 = vector.broadcast %cst_28 : f32 to vector<8x256xf32>
    %30 = arith.addf %28, %29 : vector<8x256xf32>
    %31 = vector.extract_strided_slice %30 {offsets = [0, 0], sizes = [8, 128], strides = [1, 1]} : vector<8x256xf32> to vector<8x128xf32>
    %32 = vector.extract_strided_slice %30 {offsets = [0, 128], sizes = [8, 128], strides = [1, 1]} : vector<8x256xf32> to vector<8x128xf32>
    %33 = vector.extract_strided_slice %20 {offsets = [0, 256], sizes = [8, 128], strides = [1, 1]} : vector<8x384xf32> to vector<8x128xf32>
    %34 = vector.extract_strided_slice %17 {offsets = [0, 256], sizes = [8, 128], strides = [1, 1]} : vector<8x384xf32> to vector<8x128xf32>
    %35 = vector.broadcast %11 : vector<1x128xf32> to vector<8x128xf32>
    %36 = arith.addf %34, %35 : vector<8x128xf32>
    %37 = arith.mulf %31, %36 : vector<8x128xf32>
    %38 = arith.addf %33, %37 : vector<8x128xf32>
    %39 = math.tanh %38 : vector<8x128xf32>
    %cst_29 = arith.constant 1.000000e+00 : f32
    %40 = vector.broadcast %cst_29 : f32 to vector<8x128xf32>
    %41 = arith.subf %40, %32 : vector<8x128xf32>
    %42 = arith.mulf %41, %39 : vector<8x128xf32>
    %43 = arith.mulf %32, %15 : vector<8x128xf32>
    %44 = arith.addf %42, %43 : vector<8x128xf32>
    %45 = tpu.concatenate %44, %16 in 1 : vector<8x128xf32>, vector<8x128xf32> -> vector<8x256xf32>
    %cst_30 = arith.constant dense<0.000000e+00> : vector<8x512xf32>
    %46 = tpu.matmul %45, %10, %cst_30 {dimension_numbers = #tpu.dot_dimension_numbers<[1], [0], [0], [1], [0, 0, 1, 1], [], []>} : vector<8x256xf32>, vector<256x512xf32>, vector<8x512xf32> -> vector<8x512xf32>
    %cst_31 = arith.constant dense<0.000000e+00> : vector<8x384xf32>
    %47 = tpu.matmul %44, %9, %cst_31 {dimension_numbers = #tpu.dot_dimension_numbers<[1], [0], [0], [1], [0, 0, 1, 1], [], []>} : vector<8x128xf32>, vector<128x384xf32>, vector<8x384xf32> -> vector<8x384xf32>
    %48 = vector.extract_strided_slice %46 {offsets = [0, 0], sizes = [8, 256], strides = [1, 1]} : vector<8x512xf32> to vector<8x256xf32>
    %49 = vector.broadcast %12 : vector<1x256xf32> to vector<8x256xf32>
    %50 = arith.addf %48, %49 : vector<8x256xf32>
    %cst_32 = arith.constant 5.000000e-01 : f32
    %51 = vector.broadcast %cst_32 : f32 to vector<8x256xf32>
    %52 = arith.mulf %51, %50 : vector<8x256xf32>
    %53 = math.tanh %52 : vector<8x256xf32>
    %cst_33 = arith.constant 5.000000e-01 : f32
    %54 = vector.broadcast %cst_33 : f32 to vector<8x256xf32>
    %55 = arith.mulf %54, %53 : vector<8x256xf32>
    %cst_34 = arith.constant 5.000000e-01 : f32
    %56 = vector.broadcast %cst_34 : f32 to vector<8x256xf32>
    %57 = arith.addf %55, %56 : vector<8x256xf32>
    %58 = vector.extract_strided_slice %57 {offsets = [0, 0], sizes = [8, 128], strides = [1, 1]} : vector<8x256xf32> to vector<8x128xf32>
    %59 = vector.extract_strided_slice %57 {offsets = [0, 128], sizes = [8, 128], strides = [1, 1]} : vector<8x256xf32> to vector<8x128xf32>
    %60 = vector.extract_strided_slice %46 {offsets = [0, 256], sizes = [8, 128], strides = [1, 1]} : vector<8x512xf32> to vector<8x128xf32>
    %61 = vector.broadcast %13 : vector<1x128xf32> to vector<8x128xf32>
    %62 = arith.addf %60, %61 : vector<8x128xf32>
    %63 = vector.extract_strided_slice %46 {offsets = [0, 384], sizes = [8, 128], strides = [1, 1]} : vector<8x512xf32> to vector<8x128xf32>
    %64 = vector.broadcast %14 : vector<1x128xf32> to vector<8x128xf32>
    %65 = arith.addf %63, %64 : vector<8x128xf32>
    %66 = arith.mulf %58, %65 : vector<8x128xf32>
    %67 = arith.addf %62, %66 : vector<8x128xf32>
    %68 = math.tanh %67 : vector<8x128xf32>
    %cst_35 = arith.constant 1.000000e+00 : f32
    %69 = vector.broadcast %cst_35 : f32 to vector<8x128xf32>
    %70 = arith.subf %69, %59 : vector<8x128xf32>
    %71 = arith.mulf %70, %68 : vector<8x128xf32>
    %72 = arith.mulf %59, %16 : vector<8x128xf32>
    %73 = arith.addf %71, %72 : vector<8x128xf32>
    %c1_i32 = arith.constant 1 : i32
    %74 = arith.index_cast %c1_i32 : i32 to index
    %c0_36 = arith.constant 0 : index
    %c0_37 = arith.constant 0 : index
    %75 = vector.load %arg14[%74, %c0_36, %c0_37] : memref<8x8x384xf32, #tpu.memory_space<vmem>>, vector<1x8x384xf32>
    %76 = vector.shape_cast %75 : vector<1x8x384xf32> to vector<8x384xf32>
    %77 = vector.extract_strided_slice %76 {offsets = [0, 0], sizes = [8, 256], strides = [1, 1]} : vector<8x384xf32> to vector<8x256xf32>
    %78 = vector.extract_strided_slice %47 {offsets = [0, 0], sizes = [8, 256], strides = [1, 1]} : vector<8x384xf32> to vector<8x256xf32>
    %79 = arith.addf %77, %78 : vector<8x256xf32>
    %cst_38 = arith.constant 5.000000e-01 : f32
    %80 = vector.broadcast %cst_38 : f32 to vector<8x256xf32>
    %81 = arith.mulf %80, %79 : vector<8x256xf32>
    %82 = math.tanh %81 : vector<8x256xf32>
    %cst_39 = arith.constant 5.000000e-01 : f32
    %83 = vector.broadcast %cst_39 : f32 to vector<8x256xf32>
    %84 = arith.mulf %83, %82 : vector<8x256xf32>
    %cst_40 = arith.constant 5.000000e-01 : f32
    %85 = vector.broadcast %cst_40 : f32 to vector<8x256xf32>
    %86 = arith.addf %84, %85 : vector<8x256xf32>
    %87 = vector.extract_strided_slice %86 {offsets = [0, 0], sizes = [8, 128], strides = [1, 1]} : vector<8x256xf32> to vector<8x128xf32>
    %88 = vector.extract_strided_slice %86 {offsets = [0, 128], sizes = [8, 128], strides = [1, 1]} : vector<8x256xf32> to vector<8x128xf32>
    %89 = vector.extract_strided_slice %76 {offsets = [0, 256], sizes = [8, 128], strides = [1, 1]} : vector<8x384xf32> to vector<8x128xf32>
    %90 = vector.extract_strided_slice %47 {offsets = [0, 256], sizes = [8, 128], strides = [1, 1]} : vector<8x384xf32> to vector<8x128xf32>
    %91 = vector.broadcast %11 : vector<1x128xf32> to vector<8x128xf32>
    %92 = arith.addf %90, %91 : vector<8x128xf32>
    %93 = arith.mulf %87, %92 : vector<8x128xf32>
    %94 = arith.addf %89, %93 : vector<8x128xf32>
    %95 = math.tanh %94 : vector<8x128xf32>
    %cst_41 = arith.constant 1.000000e+00 : f32
    %96 = vector.broadcast %cst_41 : f32 to vector<8x128xf32>
    %97 = arith.subf %96, %88 : vector<8x128xf32>
    %98 = arith.mulf %97, %95 : vector<8x128xf32>
    %99 = arith.mulf %88, %44 : vector<8x128xf32>
    %100 = arith.addf %98, %99 : vector<8x128xf32>
    %101 = tpu.concatenate %100, %73 in 1 : vector<8x128xf32>, vector<8x128xf32> -> vector<8x256xf32>
    %cst_42 = arith.constant dense<0.000000e+00> : vector<8x512xf32>
    %102 = tpu.matmul %101, %10, %cst_42 {dimension_numbers = #tpu.dot_dimension_numbers<[1], [0], [0], [1], [0, 0, 1, 1], [], []>} : vector<8x256xf32>, vector<256x512xf32>, vector<8x512xf32> -> vector<8x512xf32>
    %cst_43 = arith.constant dense<0.000000e+00> : vector<8x384xf32>
    %103 = tpu.matmul %100, %9, %cst_43 {dimension_numbers = #tpu.dot_dimension_numbers<[1], [0], [0], [1], [0, 0, 1, 1], [], []>} : vector<8x128xf32>, vector<128x384xf32>, vector<8x384xf32> -> vector<8x384xf32>
    %104 = vector.extract_strided_slice %102 {offsets = [0, 0], sizes = [8, 256], strides = [1, 1]} : vector<8x512xf32> to vector<8x256xf32>
    %105 = vector.broadcast %12 : vector<1x256xf32> to vector<8x256xf32>
    %106 = arith.addf %104, %105 : vector<8x256xf32>
    %cst_44 = arith.constant 5.000000e-01 : f32
    %107 = vector.broadcast %cst_44 : f32 to vector<8x256xf32>
    %108 = arith.mulf %107, %106 : vector<8x256xf32>
    %109 = math.tanh %108 : vector<8x256xf32>
    %cst_45 = arith.constant 5.000000e-01 : f32
    %110 = vector.broadcast %cst_45 : f32 to vector<8x256xf32>
    %111 = arith.mulf %110, %109 : vector<8x256xf32>
    %cst_46 = arith.constant 5.000000e-01 : f32
    %112 = vector.broadcast %cst_46 : f32 to vector<8x256xf32>
    %113 = arith.addf %111, %112 : vector<8x256xf32>
    %114 = vector.extract_strided_slice %113 {offsets = [0, 0], sizes = [8, 128], strides = [1, 1]} : vector<8x256xf32> to vector<8x128xf32>
    %115 = vector.extract_strided_slice %113 {offsets = [0, 128], sizes = [8, 128], strides = [1, 1]} : vector<8x256xf32> to vector<8x128xf32>
    %116 = vector.extract_strided_slice %102 {offsets = [0, 256], sizes = [8, 128], strides = [1, 1]} : vector<8x512xf32> to vector<8x128xf32>
    %117 = vector.broadcast %13 : vector<1x128xf32> to vector<8x128xf32>
    %118 = arith.addf %116, %117 : vector<8x128xf32>
    %119 = vector.extract_strided_slice %102 {offsets = [0, 384], sizes = [8, 128], strides = [1, 1]} : vector<8x512xf32> to vector<8x128xf32>
    %120 = vector.broadcast %14 : vector<1x128xf32> to vector<8x128xf32>
    %121 = arith.addf %119, %120 : vector<8x128xf32>
    %122 = arith.mulf %114, %121 : vector<8x128xf32>
    %123 = arith.addf %118, %122 : vector<8x128xf32>
    %124 = math.tanh %123 : vector<8x128xf32>
    %cst_47 = arith.constant 1.000000e+00 : f32
    %125 = vector.broadcast %cst_47 : f32 to vector<8x128xf32>
    %126 = arith.subf %125, %115 : vector<8x128xf32>
    %127 = arith.mulf %126, %124 : vector<8x128xf32>
    %128 = arith.mulf %115, %73 : vector<8x128xf32>
    %129 = arith.addf %127, %128 : vector<8x128xf32>
    %c2_i32 = arith.constant 2 : i32
    %130 = arith.index_cast %c2_i32 : i32 to index
    %c0_48 = arith.constant 0 : index
    %c0_49 = arith.constant 0 : index
    %131 = vector.load %arg14[%130, %c0_48, %c0_49] : memref<8x8x384xf32, #tpu.memory_space<vmem>>, vector<1x8x384xf32>
    %132 = vector.shape_cast %131 : vector<1x8x384xf32> to vector<8x384xf32>
    %133 = vector.extract_strided_slice %132 {offsets = [0, 0], sizes = [8, 256], strides = [1, 1]} : vector<8x384xf32> to vector<8x256xf32>
    %134 = vector.extract_strided_slice %103 {offsets = [0, 0], sizes = [8, 256], strides = [1, 1]} : vector<8x384xf32> to vector<8x256xf32>
    %135 = arith.addf %133, %134 : vector<8x256xf32>
    %cst_50 = arith.constant 5.000000e-01 : f32
    %136 = vector.broadcast %cst_50 : f32 to vector<8x256xf32>
    %137 = arith.mulf %136, %135 : vector<8x256xf32>
    %138 = math.tanh %137 : vector<8x256xf32>
    %cst_51 = arith.constant 5.000000e-01 : f32
    %139 = vector.broadcast %cst_51 : f32 to vector<8x256xf32>
    %140 = arith.mulf %139, %138 : vector<8x256xf32>
    %cst_52 = arith.constant 5.000000e-01 : f32
    %141 = vector.broadcast %cst_52 : f32 to vector<8x256xf32>
    %142 = arith.addf %140, %141 : vector<8x256xf32>
    %143 = vector.extract_strided_slice %142 {offsets = [0, 0], sizes = [8, 128], strides = [1, 1]} : vector<8x256xf32> to vector<8x128xf32>
    %144 = vector.extract_strided_slice %142 {offsets = [0, 128], sizes = [8, 128], strides = [1, 1]} : vector<8x256xf32> to vector<8x128xf32>
    %145 = vector.extract_strided_slice %132 {offsets = [0, 256], sizes = [8, 128], strides = [1, 1]} : vector<8x384xf32> to vector<8x128xf32>
    %146 = vector.extract_strided_slice %103 {offsets = [0, 256], sizes = [8, 128], strides = [1, 1]} : vector<8x384xf32> to vector<8x128xf32>
    %147 = vector.broadcast %11 : vector<1x128xf32> to vector<8x128xf32>
    %148 = arith.addf %146, %147 : vector<8x128xf32>
    %149 = arith.mulf %143, %148 : vector<8x128xf32>
    %150 = arith.addf %145, %149 : vector<8x128xf32>
    %151 = math.tanh %150 : vector<8x128xf32>
    %cst_53 = arith.constant 1.000000e+00 : f32
    %152 = vector.broadcast %cst_53 : f32 to vector<8x128xf32>
    %153 = arith.subf %152, %144 : vector<8x128xf32>
    %154 = arith.mulf %153, %151 : vector<8x128xf32>
    %155 = arith.mulf %144, %100 : vector<8x128xf32>
    %156 = arith.addf %154, %155 : vector<8x128xf32>
    %157 = tpu.concatenate %156, %129 in 1 : vector<8x128xf32>, vector<8x128xf32> -> vector<8x256xf32>
    %cst_54 = arith.constant dense<0.000000e+00> : vector<8x512xf32>
    %158 = tpu.matmul %157, %10, %cst_54 {dimension_numbers = #tpu.dot_dimension_numbers<[1], [0], [0], [1], [0, 0, 1, 1], [], []>} : vector<8x256xf32>, vector<256x512xf32>, vector<8x512xf32> -> vector<8x512xf32>
    %cst_55 = arith.constant dense<0.000000e+00> : vector<8x384xf32>
    %159 = tpu.matmul %156, %9, %cst_55 {dimension_numbers = #tpu.dot_dimension_numbers<[1], [0], [0], [1], [0, 0, 1, 1], [], []>} : vector<8x128xf32>, vector<128x384xf32>, vector<8x384xf32> -> vector<8x384xf32>
    %160 = vector.extract_strided_slice %158 {offsets = [0, 0], sizes = [8, 256], strides = [1, 1]} : vector<8x512xf32> to vector<8x256xf32>
    %161 = vector.broadcast %12 : vector<1x256xf32> to vector<8x256xf32>
    %162 = arith.addf %160, %161 : vector<8x256xf32>
    %cst_56 = arith.constant 5.000000e-01 : f32
    %163 = vector.broadcast %cst_56 : f32 to vector<8x256xf32>
    %164 = arith.mulf %163, %162 : vector<8x256xf32>
    %165 = math.tanh %164 : vector<8x256xf32>
    %cst_57 = arith.constant 5.000000e-01 : f32
    %166 = vector.broadcast %cst_57 : f32 to vector<8x256xf32>
    %167 = arith.mulf %166, %165 : vector<8x256xf32>
    %cst_58 = arith.constant 5.000000e-01 : f32
    %168 = vector.broadcast %cst_58 : f32 to vector<8x256xf32>
    %169 = arith.addf %167, %168 : vector<8x256xf32>
    %170 = vector.extract_strided_slice %169 {offsets = [0, 0], sizes = [8, 128], strides = [1, 1]} : vector<8x256xf32> to vector<8x128xf32>
    %171 = vector.extract_strided_slice %169 {offsets = [0, 128], sizes = [8, 128], strides = [1, 1]} : vector<8x256xf32> to vector<8x128xf32>
    %172 = vector.extract_strided_slice %158 {offsets = [0, 256], sizes = [8, 128], strides = [1, 1]} : vector<8x512xf32> to vector<8x128xf32>
    %173 = vector.broadcast %13 : vector<1x128xf32> to vector<8x128xf32>
    %174 = arith.addf %172, %173 : vector<8x128xf32>
    %175 = vector.extract_strided_slice %158 {offsets = [0, 384], sizes = [8, 128], strides = [1, 1]} : vector<8x512xf32> to vector<8x128xf32>
    %176 = vector.broadcast %14 : vector<1x128xf32> to vector<8x128xf32>
    %177 = arith.addf %175, %176 : vector<8x128xf32>
    %178 = arith.mulf %170, %177 : vector<8x128xf32>
    %179 = arith.addf %174, %178 : vector<8x128xf32>
    %180 = math.tanh %179 : vector<8x128xf32>
    %cst_59 = arith.constant 1.000000e+00 : f32
    %181 = vector.broadcast %cst_59 : f32 to vector<8x128xf32>
    %182 = arith.subf %181, %171 : vector<8x128xf32>
    %183 = arith.mulf %182, %180 : vector<8x128xf32>
    %184 = arith.mulf %171, %129 : vector<8x128xf32>
    %185 = arith.addf %183, %184 : vector<8x128xf32>
    %c3_i32 = arith.constant 3 : i32
    %186 = arith.index_cast %c3_i32 : i32 to index
    %c0_60 = arith.constant 0 : index
    %c0_61 = arith.constant 0 : index
    %187 = vector.load %arg14[%186, %c0_60, %c0_61] : memref<8x8x384xf32, #tpu.memory_space<vmem>>, vector<1x8x384xf32>
    %188 = vector.shape_cast %187 : vector<1x8x384xf32> to vector<8x384xf32>
    %189 = vector.extract_strided_slice %188 {offsets = [0, 0], sizes = [8, 256], strides = [1, 1]} : vector<8x384xf32> to vector<8x256xf32>
    %190 = vector.extract_strided_slice %159 {offsets = [0, 0], sizes = [8, 256], strides = [1, 1]} : vector<8x384xf32> to vector<8x256xf32>
    %191 = arith.addf %189, %190 : vector<8x256xf32>
    %cst_62 = arith.constant 5.000000e-01 : f32
    %192 = vector.broadcast %cst_62 : f32 to vector<8x256xf32>
    %193 = arith.mulf %192, %191 : vector<8x256xf32>
    %194 = math.tanh %193 : vector<8x256xf32>
    %cst_63 = arith.constant 5.000000e-01 : f32
    %195 = vector.broadcast %cst_63 : f32 to vector<8x256xf32>
    %196 = arith.mulf %195, %194 : vector<8x256xf32>
    %cst_64 = arith.constant 5.000000e-01 : f32
    %197 = vector.broadcast %cst_64 : f32 to vector<8x256xf32>
    %198 = arith.addf %196, %197 : vector<8x256xf32>
    %199 = vector.extract_strided_slice %198 {offsets = [0, 0], sizes = [8, 128], strides = [1, 1]} : vector<8x256xf32> to vector<8x128xf32>
    %200 = vector.extract_strided_slice %198 {offsets = [0, 128], sizes = [8, 128], strides = [1, 1]} : vector<8x256xf32> to vector<8x128xf32>
    %201 = vector.extract_strided_slice %188 {offsets = [0, 256], sizes = [8, 128], strides = [1, 1]} : vector<8x384xf32> to vector<8x128xf32>
    %202 = vector.extract_strided_slice %159 {offsets = [0, 256], sizes = [8, 128], strides = [1, 1]} : vector<8x384xf32> to vector<8x128xf32>
    %203 = vector.broadcast %11 : vector<1x128xf32> to vector<8x128xf32>
    %204 = arith.addf %202, %203 : vector<8x128xf32>
    %205 = arith.mulf %199, %204 : vector<8x128xf32>
    %206 = arith.addf %201, %205 : vector<8x128xf32>
    %207 = math.tanh %206 : vector<8x128xf32>
    %cst_65 = arith.constant 1.000000e+00 : f32
    %208 = vector.broadcast %cst_65 : f32 to vector<8x128xf32>
    %209 = arith.subf %208, %200 : vector<8x128xf32>
    %210 = arith.mulf %209, %207 : vector<8x128xf32>
    %211 = arith.mulf %200, %156 : vector<8x128xf32>
    %212 = arith.addf %210, %211 : vector<8x128xf32>
    %213 = tpu.concatenate %212, %185 in 1 : vector<8x128xf32>, vector<8x128xf32> -> vector<8x256xf32>
    %cst_66 = arith.constant dense<0.000000e+00> : vector<8x512xf32>
    %214 = tpu.matmul %213, %10, %cst_66 {dimension_numbers = #tpu.dot_dimension_numbers<[1], [0], [0], [1], [0, 0, 1, 1], [], []>} : vector<8x256xf32>, vector<256x512xf32>, vector<8x512xf32> -> vector<8x512xf32>
    %cst_67 = arith.constant dense<0.000000e+00> : vector<8x384xf32>
    %215 = tpu.matmul %212, %9, %cst_67 {dimension_numbers = #tpu.dot_dimension_numbers<[1], [0], [0], [1], [0, 0, 1, 1], [], []>} : vector<8x128xf32>, vector<128x384xf32>, vector<8x384xf32> -> vector<8x384xf32>
    %216 = vector.extract_strided_slice %214 {offsets = [0, 0], sizes = [8, 256], strides = [1, 1]} : vector<8x512xf32> to vector<8x256xf32>
    %217 = vector.broadcast %12 : vector<1x256xf32> to vector<8x256xf32>
    %218 = arith.addf %216, %217 : vector<8x256xf32>
    %cst_68 = arith.constant 5.000000e-01 : f32
    %219 = vector.broadcast %cst_68 : f32 to vector<8x256xf32>
    %220 = arith.mulf %219, %218 : vector<8x256xf32>
    %221 = math.tanh %220 : vector<8x256xf32>
    %cst_69 = arith.constant 5.000000e-01 : f32
    %222 = vector.broadcast %cst_69 : f32 to vector<8x256xf32>
    %223 = arith.mulf %222, %221 : vector<8x256xf32>
    %cst_70 = arith.constant 5.000000e-01 : f32
    %224 = vector.broadcast %cst_70 : f32 to vector<8x256xf32>
    %225 = arith.addf %223, %224 : vector<8x256xf32>
    %226 = vector.extract_strided_slice %225 {offsets = [0, 0], sizes = [8, 128], strides = [1, 1]} : vector<8x256xf32> to vector<8x128xf32>
    %227 = vector.extract_strided_slice %225 {offsets = [0, 128], sizes = [8, 128], strides = [1, 1]} : vector<8x256xf32> to vector<8x128xf32>
    %228 = vector.extract_strided_slice %214 {offsets = [0, 256], sizes = [8, 128], strides = [1, 1]} : vector<8x512xf32> to vector<8x128xf32>
    %229 = vector.broadcast %13 : vector<1x128xf32> to vector<8x128xf32>
    %230 = arith.addf %228, %229 : vector<8x128xf32>
    %231 = vector.extract_strided_slice %214 {offsets = [0, 384], sizes = [8, 128], strides = [1, 1]} : vector<8x512xf32> to vector<8x128xf32>
    %232 = vector.broadcast %14 : vector<1x128xf32> to vector<8x128xf32>
    %233 = arith.addf %231, %232 : vector<8x128xf32>
    %234 = arith.mulf %226, %233 : vector<8x128xf32>
    %235 = arith.addf %230, %234 : vector<8x128xf32>
    %236 = math.tanh %235 : vector<8x128xf32>
    %cst_71 = arith.constant 1.000000e+00 : f32
    %237 = vector.broadcast %cst_71 : f32 to vector<8x128xf32>
    %238 = arith.subf %237, %227 : vector<8x128xf32>
    %239 = arith.mulf %238, %236 : vector<8x128xf32>
    %240 = arith.mulf %227, %185 : vector<8x128xf32>
    %241 = arith.addf %239, %240 : vector<8x128xf32>
    %c4_i32 = arith.constant 4 : i32
    %242 = arith.index_cast %c4_i32 : i32 to index
    %c0_72 = arith.constant 0 : index
    %c0_73 = arith.constant 0 : index
    %243 = vector.load %arg14[%242, %c0_72, %c0_73] : memref<8x8x384xf32, #tpu.memory_space<vmem>>, vector<1x8x384xf32>
    %244 = vector.shape_cast %243 : vector<1x8x384xf32> to vector<8x384xf32>
    %245 = vector.extract_strided_slice %244 {offsets = [0, 0], sizes = [8, 256], strides = [1, 1]} : vector<8x384xf32> to vector<8x256xf32>
    %246 = vector.extract_strided_slice %215 {offsets = [0, 0], sizes = [8, 256], strides = [1, 1]} : vector<8x384xf32> to vector<8x256xf32>
    %247 = arith.addf %245, %246 : vector<8x256xf32>
    %cst_74 = arith.constant 5.000000e-01 : f32
    %248 = vector.broadcast %cst_74 : f32 to vector<8x256xf32>
    %249 = arith.mulf %248, %247 : vector<8x256xf32>
    %250 = math.tanh %249 : vector<8x256xf32>
    %cst_75 = arith.constant 5.000000e-01 : f32
    %251 = vector.broadcast %cst_75 : f32 to vector<8x256xf32>
    %252 = arith.mulf %251, %250 : vector<8x256xf32>
    %cst_76 = arith.constant 5.000000e-01 : f32
    %253 = vector.broadcast %cst_76 : f32 to vector<8x256xf32>
    %254 = arith.addf %252, %253 : vector<8x256xf32>
    %255 = vector.extract_strided_slice %254 {offsets = [0, 0], sizes = [8, 128], strides = [1, 1]} : vector<8x256xf32> to vector<8x128xf32>
    %256 = vector.extract_strided_slice %254 {offsets = [0, 128], sizes = [8, 128], strides = [1, 1]} : vector<8x256xf32> to vector<8x128xf32>
    %257 = vector.extract_strided_slice %244 {offsets = [0, 256], sizes = [8, 128], strides = [1, 1]} : vector<8x384xf32> to vector<8x128xf32>
    %258 = vector.extract_strided_slice %215 {offsets = [0, 256], sizes = [8, 128], strides = [1, 1]} : vector<8x384xf32> to vector<8x128xf32>
    %259 = vector.broadcast %11 : vector<1x128xf32> to vector<8x128xf32>
    %260 = arith.addf %258, %259 : vector<8x128xf32>
    %261 = arith.mulf %255, %260 : vector<8x128xf32>
    %262 = arith.addf %257, %261 : vector<8x128xf32>
    %263 = math.tanh %262 : vector<8x128xf32>
    %cst_77 = arith.constant 1.000000e+00 : f32
    %264 = vector.broadcast %cst_77 : f32 to vector<8x128xf32>
    %265 = arith.subf %264, %256 : vector<8x128xf32>
    %266 = arith.mulf %265, %263 : vector<8x128xf32>
    %267 = arith.mulf %256, %212 : vector<8x128xf32>
    %268 = arith.addf %266, %267 : vector<8x128xf32>
    %269 = tpu.concatenate %268, %241 in 1 : vector<8x128xf32>, vector<8x128xf32> -> vector<8x256xf32>
    %cst_78 = arith.constant dense<0.000000e+00> : vector<8x512xf32>
    %270 = tpu.matmul %269, %10, %cst_78 {dimension_numbers = #tpu.dot_dimension_numbers<[1], [0], [0], [1], [0, 0, 1, 1], [], []>} : vector<8x256xf32>, vector<256x512xf32>, vector<8x512xf32> -> vector<8x512xf32>
    %cst_79 = arith.constant dense<0.000000e+00> : vector<8x384xf32>
    %271 = tpu.matmul %268, %9, %cst_79 {dimension_numbers = #tpu.dot_dimension_numbers<[1], [0], [0], [1], [0, 0, 1, 1], [], []>} : vector<8x128xf32>, vector<128x384xf32>, vector<8x384xf32> -> vector<8x384xf32>
    %272 = vector.extract_strided_slice %270 {offsets = [0, 0], sizes = [8, 256], strides = [1, 1]} : vector<8x512xf32> to vector<8x256xf32>
    %273 = vector.broadcast %12 : vector<1x256xf32> to vector<8x256xf32>
    %274 = arith.addf %272, %273 : vector<8x256xf32>
    %cst_80 = arith.constant 5.000000e-01 : f32
    %275 = vector.broadcast %cst_80 : f32 to vector<8x256xf32>
    %276 = arith.mulf %275, %274 : vector<8x256xf32>
    %277 = math.tanh %276 : vector<8x256xf32>
    %cst_81 = arith.constant 5.000000e-01 : f32
    %278 = vector.broadcast %cst_81 : f32 to vector<8x256xf32>
    %279 = arith.mulf %278, %277 : vector<8x256xf32>
    %cst_82 = arith.constant 5.000000e-01 : f32
    %280 = vector.broadcast %cst_82 : f32 to vector<8x256xf32>
    %281 = arith.addf %279, %280 : vector<8x256xf32>
    %282 = vector.extract_strided_slice %281 {offsets = [0, 0], sizes = [8, 128], strides = [1, 1]} : vector<8x256xf32> to vector<8x128xf32>
    %283 = vector.extract_strided_slice %281 {offsets = [0, 128], sizes = [8, 128], strides = [1, 1]} : vector<8x256xf32> to vector<8x128xf32>
    %284 = vector.extract_strided_slice %270 {offsets = [0, 256], sizes = [8, 128], strides = [1, 1]} : vector<8x512xf32> to vector<8x128xf32>
    %285 = vector.broadcast %13 : vector<1x128xf32> to vector<8x128xf32>
    %286 = arith.addf %284, %285 : vector<8x128xf32>
    %287 = vector.extract_strided_slice %270 {offsets = [0, 384], sizes = [8, 128], strides = [1, 1]} : vector<8x512xf32> to vector<8x128xf32>
    %288 = vector.broadcast %14 : vector<1x128xf32> to vector<8x128xf32>
    %289 = arith.addf %287, %288 : vector<8x128xf32>
    %290 = arith.mulf %282, %289 : vector<8x128xf32>
    %291 = arith.addf %286, %290 : vector<8x128xf32>
    %292 = math.tanh %291 : vector<8x128xf32>
    %cst_83 = arith.constant 1.000000e+00 : f32
    %293 = vector.broadcast %cst_83 : f32 to vector<8x128xf32>
    %294 = arith.subf %293, %283 : vector<8x128xf32>
    %295 = arith.mulf %294, %292 : vector<8x128xf32>
    %296 = arith.mulf %283, %241 : vector<8x128xf32>
    %297 = arith.addf %295, %296 : vector<8x128xf32>
    %c5_i32 = arith.constant 5 : i32
    %298 = arith.index_cast %c5_i32 : i32 to index
    %c0_84 = arith.constant 0 : index
    %c0_85 = arith.constant 0 : index
    %299 = vector.load %arg14[%298, %c0_84, %c0_85] : memref<8x8x384xf32, #tpu.memory_space<vmem>>, vector<1x8x384xf32>
    %300 = vector.shape_cast %299 : vector<1x8x384xf32> to vector<8x384xf32>
    %301 = vector.extract_strided_slice %300 {offsets = [0, 0], sizes = [8, 256], strides = [1, 1]} : vector<8x384xf32> to vector<8x256xf32>
    %302 = vector.extract_strided_slice %271 {offsets = [0, 0], sizes = [8, 256], strides = [1, 1]} : vector<8x384xf32> to vector<8x256xf32>
    %303 = arith.addf %301, %302 : vector<8x256xf32>
    %cst_86 = arith.constant 5.000000e-01 : f32
    %304 = vector.broadcast %cst_86 : f32 to vector<8x256xf32>
    %305 = arith.mulf %304, %303 : vector<8x256xf32>
    %306 = math.tanh %305 : vector<8x256xf32>
    %cst_87 = arith.constant 5.000000e-01 : f32
    %307 = vector.broadcast %cst_87 : f32 to vector<8x256xf32>
    %308 = arith.mulf %307, %306 : vector<8x256xf32>
    %cst_88 = arith.constant 5.000000e-01 : f32
    %309 = vector.broadcast %cst_88 : f32 to vector<8x256xf32>
    %310 = arith.addf %308, %309 : vector<8x256xf32>
    %311 = vector.extract_strided_slice %310 {offsets = [0, 0], sizes = [8, 128], strides = [1, 1]} : vector<8x256xf32> to vector<8x128xf32>
    %312 = vector.extract_strided_slice %310 {offsets = [0, 128], sizes = [8, 128], strides = [1, 1]} : vector<8x256xf32> to vector<8x128xf32>
    %313 = vector.extract_strided_slice %300 {offsets = [0, 256], sizes = [8, 128], strides = [1, 1]} : vector<8x384xf32> to vector<8x128xf32>
    %314 = vector.extract_strided_slice %271 {offsets = [0, 256], sizes = [8, 128], strides = [1, 1]} : vector<8x384xf32> to vector<8x128xf32>
    %315 = vector.broadcast %11 : vector<1x128xf32> to vector<8x128xf32>
    %316 = arith.addf %314, %315 : vector<8x128xf32>
    %317 = arith.mulf %311, %316 : vector<8x128xf32>
    %318 = arith.addf %313, %317 : vector<8x128xf32>
    %319 = math.tanh %318 : vector<8x128xf32>
    %cst_89 = arith.constant 1.000000e+00 : f32
    %320 = vector.broadcast %cst_89 : f32 to vector<8x128xf32>
    %321 = arith.subf %320, %312 : vector<8x128xf32>
    %322 = arith.mulf %321, %319 : vector<8x128xf32>
    %323 = arith.mulf %312, %268 : vector<8x128xf32>
    %324 = arith.addf %322, %323 : vector<8x128xf32>
    %325 = tpu.concatenate %324, %297 in 1 : vector<8x128xf32>, vector<8x128xf32> -> vector<8x256xf32>
    %cst_90 = arith.constant dense<0.000000e+00> : vector<8x512xf32>
    %326 = tpu.matmul %325, %10, %cst_90 {dimension_numbers = #tpu.dot_dimension_numbers<[1], [0], [0], [1], [0, 0, 1, 1], [], []>} : vector<8x256xf32>, vector<256x512xf32>, vector<8x512xf32> -> vector<8x512xf32>
    %cst_91 = arith.constant dense<0.000000e+00> : vector<8x384xf32>
    %327 = tpu.matmul %324, %9, %cst_91 {dimension_numbers = #tpu.dot_dimension_numbers<[1], [0], [0], [1], [0, 0, 1, 1], [], []>} : vector<8x128xf32>, vector<128x384xf32>, vector<8x384xf32> -> vector<8x384xf32>
    %328 = vector.extract_strided_slice %326 {offsets = [0, 0], sizes = [8, 256], strides = [1, 1]} : vector<8x512xf32> to vector<8x256xf32>
    %329 = vector.broadcast %12 : vector<1x256xf32> to vector<8x256xf32>
    %330 = arith.addf %328, %329 : vector<8x256xf32>
    %cst_92 = arith.constant 5.000000e-01 : f32
    %331 = vector.broadcast %cst_92 : f32 to vector<8x256xf32>
    %332 = arith.mulf %331, %330 : vector<8x256xf32>
    %333 = math.tanh %332 : vector<8x256xf32>
    %cst_93 = arith.constant 5.000000e-01 : f32
    %334 = vector.broadcast %cst_93 : f32 to vector<8x256xf32>
    %335 = arith.mulf %334, %333 : vector<8x256xf32>
    %cst_94 = arith.constant 5.000000e-01 : f32
    %336 = vector.broadcast %cst_94 : f32 to vector<8x256xf32>
    %337 = arith.addf %335, %336 : vector<8x256xf32>
    %338 = vector.extract_strided_slice %337 {offsets = [0, 0], sizes = [8, 128], strides = [1, 1]} : vector<8x256xf32> to vector<8x128xf32>
    %339 = vector.extract_strided_slice %337 {offsets = [0, 128], sizes = [8, 128], strides = [1, 1]} : vector<8x256xf32> to vector<8x128xf32>
    %340 = vector.extract_strided_slice %326 {offsets = [0, 256], sizes = [8, 128], strides = [1, 1]} : vector<8x512xf32> to vector<8x128xf32>
    %341 = vector.broadcast %13 : vector<1x128xf32> to vector<8x128xf32>
    %342 = arith.addf %340, %341 : vector<8x128xf32>
    %343 = vector.extract_strided_slice %326 {offsets = [0, 384], sizes = [8, 128], strides = [1, 1]} : vector<8x512xf32> to vector<8x128xf32>
    %344 = vector.broadcast %14 : vector<1x128xf32> to vector<8x128xf32>
    %345 = arith.addf %343, %344 : vector<8x128xf32>
    %346 = arith.mulf %338, %345 : vector<8x128xf32>
    %347 = arith.addf %342, %346 : vector<8x128xf32>
    %348 = math.tanh %347 : vector<8x128xf32>
    %cst_95 = arith.constant 1.000000e+00 : f32
    %349 = vector.broadcast %cst_95 : f32 to vector<8x128xf32>
    %350 = arith.subf %349, %339 : vector<8x128xf32>
    %351 = arith.mulf %350, %348 : vector<8x128xf32>
    %352 = arith.mulf %339, %297 : vector<8x128xf32>
    %353 = arith.addf %351, %352 : vector<8x128xf32>
    %c6_i32 = arith.constant 6 : i32
    %354 = arith.index_cast %c6_i32 : i32 to index
    %c0_96 = arith.constant 0 : index
    %c0_97 = arith.constant 0 : index
    %355 = vector.load %arg14[%354, %c0_96, %c0_97] : memref<8x8x384xf32, #tpu.memory_space<vmem>>, vector<1x8x384xf32>
    %356 = vector.shape_cast %355 : vector<1x8x384xf32> to vector<8x384xf32>
    %357 = vector.extract_strided_slice %356 {offsets = [0, 0], sizes = [8, 256], strides = [1, 1]} : vector<8x384xf32> to vector<8x256xf32>
    %358 = vector.extract_strided_slice %327 {offsets = [0, 0], sizes = [8, 256], strides = [1, 1]} : vector<8x384xf32> to vector<8x256xf32>
    %359 = arith.addf %357, %358 : vector<8x256xf32>
    %cst_98 = arith.constant 5.000000e-01 : f32
    %360 = vector.broadcast %cst_98 : f32 to vector<8x256xf32>
    %361 = arith.mulf %360, %359 : vector<8x256xf32>
    %362 = math.tanh %361 : vector<8x256xf32>
    %cst_99 = arith.constant 5.000000e-01 : f32
    %363 = vector.broadcast %cst_99 : f32 to vector<8x256xf32>
    %364 = arith.mulf %363, %362 : vector<8x256xf32>
    %cst_100 = arith.constant 5.000000e-01 : f32
    %365 = vector.broadcast %cst_100 : f32 to vector<8x256xf32>
    %366 = arith.addf %364, %365 : vector<8x256xf32>
    %367 = vector.extract_strided_slice %366 {offsets = [0, 0], sizes = [8, 128], strides = [1, 1]} : vector<8x256xf32> to vector<8x128xf32>
    %368 = vector.extract_strided_slice %366 {offsets = [0, 128], sizes = [8, 128], strides = [1, 1]} : vector<8x256xf32> to vector<8x128xf32>
    %369 = vector.extract_strided_slice %356 {offsets = [0, 256], sizes = [8, 128], strides = [1, 1]} : vector<8x384xf32> to vector<8x128xf32>
    %370 = vector.extract_strided_slice %327 {offsets = [0, 256], sizes = [8, 128], strides = [1, 1]} : vector<8x384xf32> to vector<8x128xf32>
    %371 = vector.broadcast %11 : vector<1x128xf32> to vector<8x128xf32>
    %372 = arith.addf %370, %371 : vector<8x128xf32>
    %373 = arith.mulf %367, %372 : vector<8x128xf32>
    %374 = arith.addf %369, %373 : vector<8x128xf32>
    %375 = math.tanh %374 : vector<8x128xf32>
    %cst_101 = arith.constant 1.000000e+00 : f32
    %376 = vector.broadcast %cst_101 : f32 to vector<8x128xf32>
    %377 = arith.subf %376, %368 : vector<8x128xf32>
    %378 = arith.mulf %377, %375 : vector<8x128xf32>
    %379 = arith.mulf %368, %324 : vector<8x128xf32>
    %380 = arith.addf %378, %379 : vector<8x128xf32>
    %381 = tpu.concatenate %380, %353 in 1 : vector<8x128xf32>, vector<8x128xf32> -> vector<8x256xf32>
    %cst_102 = arith.constant dense<0.000000e+00> : vector<8x512xf32>
    %382 = tpu.matmul %381, %10, %cst_102 {dimension_numbers = #tpu.dot_dimension_numbers<[1], [0], [0], [1], [0, 0, 1, 1], [], []>} : vector<8x256xf32>, vector<256x512xf32>, vector<8x512xf32> -> vector<8x512xf32>
    %cst_103 = arith.constant dense<0.000000e+00> : vector<8x384xf32>
    %383 = tpu.matmul %380, %9, %cst_103 {dimension_numbers = #tpu.dot_dimension_numbers<[1], [0], [0], [1], [0, 0, 1, 1], [], []>} : vector<8x128xf32>, vector<128x384xf32>, vector<8x384xf32> -> vector<8x384xf32>
    %384 = vector.extract_strided_slice %382 {offsets = [0, 0], sizes = [8, 256], strides = [1, 1]} : vector<8x512xf32> to vector<8x256xf32>
    %385 = vector.broadcast %12 : vector<1x256xf32> to vector<8x256xf32>
    %386 = arith.addf %384, %385 : vector<8x256xf32>
    %cst_104 = arith.constant 5.000000e-01 : f32
    %387 = vector.broadcast %cst_104 : f32 to vector<8x256xf32>
    %388 = arith.mulf %387, %386 : vector<8x256xf32>
    %389 = math.tanh %388 : vector<8x256xf32>
    %cst_105 = arith.constant 5.000000e-01 : f32
    %390 = vector.broadcast %cst_105 : f32 to vector<8x256xf32>
    %391 = arith.mulf %390, %389 : vector<8x256xf32>
    %cst_106 = arith.constant 5.000000e-01 : f32
    %392 = vector.broadcast %cst_106 : f32 to vector<8x256xf32>
    %393 = arith.addf %391, %392 : vector<8x256xf32>
    %394 = vector.extract_strided_slice %393 {offsets = [0, 0], sizes = [8, 128], strides = [1, 1]} : vector<8x256xf32> to vector<8x128xf32>
    %395 = vector.extract_strided_slice %393 {offsets = [0, 128], sizes = [8, 128], strides = [1, 1]} : vector<8x256xf32> to vector<8x128xf32>
    %396 = vector.extract_strided_slice %382 {offsets = [0, 256], sizes = [8, 128], strides = [1, 1]} : vector<8x512xf32> to vector<8x128xf32>
    %397 = vector.broadcast %13 : vector<1x128xf32> to vector<8x128xf32>
    %398 = arith.addf %396, %397 : vector<8x128xf32>
    %399 = vector.extract_strided_slice %382 {offsets = [0, 384], sizes = [8, 128], strides = [1, 1]} : vector<8x512xf32> to vector<8x128xf32>
    %400 = vector.broadcast %14 : vector<1x128xf32> to vector<8x128xf32>
    %401 = arith.addf %399, %400 : vector<8x128xf32>
    %402 = arith.mulf %394, %401 : vector<8x128xf32>
    %403 = arith.addf %398, %402 : vector<8x128xf32>
    %404 = math.tanh %403 : vector<8x128xf32>
    %cst_107 = arith.constant 1.000000e+00 : f32
    %405 = vector.broadcast %cst_107 : f32 to vector<8x128xf32>
    %406 = arith.subf %405, %395 : vector<8x128xf32>
    %407 = arith.mulf %406, %404 : vector<8x128xf32>
    %408 = arith.mulf %395, %353 : vector<8x128xf32>
    %409 = arith.addf %407, %408 : vector<8x128xf32>
    %c7_i32 = arith.constant 7 : i32
    %410 = arith.index_cast %c7_i32 : i32 to index
    %c0_108 = arith.constant 0 : index
    %c0_109 = arith.constant 0 : index
    %411 = vector.load %arg14[%410, %c0_108, %c0_109] : memref<8x8x384xf32, #tpu.memory_space<vmem>>, vector<1x8x384xf32>
    %412 = vector.shape_cast %411 : vector<1x8x384xf32> to vector<8x384xf32>
    %413 = vector.extract_strided_slice %412 {offsets = [0, 0], sizes = [8, 256], strides = [1, 1]} : vector<8x384xf32> to vector<8x256xf32>
    %414 = vector.extract_strided_slice %383 {offsets = [0, 0], sizes = [8, 256], strides = [1, 1]} : vector<8x384xf32> to vector<8x256xf32>
    %415 = arith.addf %413, %414 : vector<8x256xf32>
    %cst_110 = arith.constant 5.000000e-01 : f32
    %416 = vector.broadcast %cst_110 : f32 to vector<8x256xf32>
    %417 = arith.mulf %416, %415 : vector<8x256xf32>
    %418 = math.tanh %417 : vector<8x256xf32>
    %cst_111 = arith.constant 5.000000e-01 : f32
    %419 = vector.broadcast %cst_111 : f32 to vector<8x256xf32>
    %420 = arith.mulf %419, %418 : vector<8x256xf32>
    %cst_112 = arith.constant 5.000000e-01 : f32
    %421 = vector.broadcast %cst_112 : f32 to vector<8x256xf32>
    %422 = arith.addf %420, %421 : vector<8x256xf32>
    %423 = vector.extract_strided_slice %422 {offsets = [0, 0], sizes = [8, 128], strides = [1, 1]} : vector<8x256xf32> to vector<8x128xf32>
    %424 = vector.extract_strided_slice %422 {offsets = [0, 128], sizes = [8, 128], strides = [1, 1]} : vector<8x256xf32> to vector<8x128xf32>
    %425 = vector.extract_strided_slice %412 {offsets = [0, 256], sizes = [8, 128], strides = [1, 1]} : vector<8x384xf32> to vector<8x128xf32>
    %426 = vector.extract_strided_slice %383 {offsets = [0, 256], sizes = [8, 128], strides = [1, 1]} : vector<8x384xf32> to vector<8x128xf32>
    %427 = vector.broadcast %11 : vector<1x128xf32> to vector<8x128xf32>
    %428 = arith.addf %426, %427 : vector<8x128xf32>
    %429 = arith.mulf %423, %428 : vector<8x128xf32>
    %430 = arith.addf %425, %429 : vector<8x128xf32>
    %431 = math.tanh %430 : vector<8x128xf32>
    %cst_113 = arith.constant 1.000000e+00 : f32
    %432 = vector.broadcast %cst_113 : f32 to vector<8x128xf32>
    %433 = arith.subf %432, %424 : vector<8x128xf32>
    %434 = arith.mulf %433, %431 : vector<8x128xf32>
    %435 = arith.mulf %424, %380 : vector<8x128xf32>
    %436 = arith.addf %434, %435 : vector<8x128xf32>
    %437 = tpu.concatenate %436, %409 in 1 : vector<8x128xf32>, vector<8x128xf32> -> vector<8x256xf32>
    %cst_114 = arith.constant dense<0.000000e+00> : vector<8x512xf32>
    %438 = tpu.matmul %437, %10, %cst_114 {dimension_numbers = #tpu.dot_dimension_numbers<[1], [0], [0], [1], [0, 0, 1, 1], [], []>} : vector<8x256xf32>, vector<256x512xf32>, vector<8x512xf32> -> vector<8x512xf32>
    %cst_115 = arith.constant dense<0.000000e+00> : vector<8x384xf32>
    %439 = tpu.matmul %436, %9, %cst_115 {dimension_numbers = #tpu.dot_dimension_numbers<[1], [0], [0], [1], [0, 0, 1, 1], [], []>} : vector<8x128xf32>, vector<128x384xf32>, vector<8x384xf32> -> vector<8x384xf32>
    %440 = vector.extract_strided_slice %438 {offsets = [0, 0], sizes = [8, 256], strides = [1, 1]} : vector<8x512xf32> to vector<8x256xf32>
    %441 = vector.broadcast %12 : vector<1x256xf32> to vector<8x256xf32>
    %442 = arith.addf %440, %441 : vector<8x256xf32>
    %cst_116 = arith.constant 5.000000e-01 : f32
    %443 = vector.broadcast %cst_116 : f32 to vector<8x256xf32>
    %444 = arith.mulf %443, %442 : vector<8x256xf32>
    %445 = math.tanh %444 : vector<8x256xf32>
    %cst_117 = arith.constant 5.000000e-01 : f32
    %446 = vector.broadcast %cst_117 : f32 to vector<8x256xf32>
    %447 = arith.mulf %446, %445 : vector<8x256xf32>
    %cst_118 = arith.constant 5.000000e-01 : f32
    %448 = vector.broadcast %cst_118 : f32 to vector<8x256xf32>
    %449 = arith.addf %447, %448 : vector<8x256xf32>
    %450 = vector.extract_strided_slice %449 {offsets = [0, 0], sizes = [8, 128], strides = [1, 1]} : vector<8x256xf32> to vector<8x128xf32>
    %451 = vector.extract_strided_slice %449 {offsets = [0, 128], sizes = [8, 128], strides = [1, 1]} : vector<8x256xf32> to vector<8x128xf32>
    %452 = vector.extract_strided_slice %438 {offsets = [0, 256], sizes = [8, 128], strides = [1, 1]} : vector<8x512xf32> to vector<8x128xf32>
    %453 = vector.broadcast %13 : vector<1x128xf32> to vector<8x128xf32>
    %454 = arith.addf %452, %453 : vector<8x128xf32>
    %455 = vector.extract_strided_slice %438 {offsets = [0, 384], sizes = [8, 128], strides = [1, 1]} : vector<8x512xf32> to vector<8x128xf32>
    %456 = vector.broadcast %14 : vector<1x128xf32> to vector<8x128xf32>
    %457 = arith.addf %455, %456 : vector<8x128xf32>
    %458 = arith.mulf %450, %457 : vector<8x128xf32>
    %459 = arith.addf %454, %458 : vector<8x128xf32>
    %460 = math.tanh %459 : vector<8x128xf32>
    %cst_119 = arith.constant 1.000000e+00 : f32
    %461 = vector.broadcast %cst_119 : f32 to vector<8x128xf32>
    %462 = arith.subf %461, %451 : vector<8x128xf32>
    %463 = arith.mulf %462, %460 : vector<8x128xf32>
    %464 = arith.mulf %451, %409 : vector<8x128xf32>
    %465 = arith.addf %463, %464 : vector<8x128xf32>
    %c8_i32 = arith.constant 8 : i32
    %c0_120 = arith.constant 0 : index
    %c0_121 = arith.constant 0 : index
    %466 = vector.load %arg11[%c0_120, %c0_121] : memref<128x128xf32, #tpu.memory_space<vmem>>, vector<128x128xf32>
    %cst_122 = arith.constant dense<0.000000e+00> : vector<8x128xf32>
    %467 = tpu.matmul %465, %466, %cst_122 {dimension_numbers = #tpu.dot_dimension_numbers<[1], [0], [0], [1], [0, 0, 1, 1], [], []>} : vector<8x128xf32>, vector<128x128xf32>, vector<8x128xf32> -> vector<8x128xf32>
    %c0_123 = arith.constant 0 : index
    %c0_124 = arith.constant 0 : index
    %468 = vector.load %arg12[%c0_123, %c0_124] : memref<1x128xf32, #tpu.memory_space<vmem>>, vector<1x128xf32>
    %469 = vector.broadcast %468 : vector<1x128xf32> to vector<8x128xf32>
    %470 = arith.addf %467, %469 : vector<8x128xf32>
    %c0_125 = arith.constant 0 : index
    %c0_126 = arith.constant 0 : index
    %471 = vector.load %arg13[%c0_125, %c0_126] : memref<8x128xf32, #tpu.memory_space<vmem>>, vector<8x128xf32>
    tpu.vector_store %arg13[%c0_125, %c0_126], %470 {strides = array<i32>} : memref<8x128xf32, #tpu.memory_space<vmem>>, vector<8x128xf32>,
    return
  }
  func.func @transform_0(%arg0: i32, %arg1: i32) -> (i32, i32, i32) {
    %c0_i32 = arith.constant 0 : i32
    %c0_i32_0 = arith.constant 0 : i32
    return %arg1, %arg0, %c0_i32 : i32, i32, i32
  }
  func.func @transform_1(%arg0: i32, %arg1: i32) -> (i32, i32) {
    %c0_i32 = arith.constant 0 : i32
    %c0_i32_0 = arith.constant 0 : i32
    %c0_i32_1 = arith.constant 0 : i32
    return %c0_i32, %c0_i32_0 : i32, i32
  }
  func.func @transform_2(%arg0: i32, %arg1: i32) -> (i32, i32) {
    %c0_i32 = arith.constant 0 : i32
    %c0_i32_0 = arith.constant 0 : i32
    %c0_i32_1 = arith.constant 0 : i32
    return %c0_i32, %c0_i32_0 : i32, i32
  }
  func.func @transform_3(%arg0: i32, %arg1: i32) -> (i32, i32) {
    %c0_i32 = arith.constant 0 : i32
    %c0_i32_0 = arith.constant 0 : i32
    %c0_i32_1 = arith.constant 0 : i32
    return %c0_i32, %c0_i32_0 : i32, i32
  }
  func.func @transform_4(%arg0: i32, %arg1: i32) -> (i32, i32) {
    %c0_i32 = arith.constant 0 : i32
    %c0_i32_0 = arith.constant 0 : i32
    %c0_i32_1 = arith.constant 0 : i32
    return %c0_i32, %c0_i32_0 : i32, i32
  }
  func.func @transform_5(%arg0: i32, %arg1: i32) -> (i32, i32) {
    %c0_i32 = arith.constant 0 : i32
    %c0_i32_0 = arith.constant 0 : i32
    %c0_i32_1 = arith.constant 0 : i32
    return %c0_i32, %c0_i32_0 : i32, i32
  }
  func.func @transform_6(%arg0: i32, %arg1: i32) -> (i32, i32) {
    %c0_i32 = arith.constant 0 : i32
    %c0_i32_0 = arith.constant 0 : i32
    %c0_i32_1 = arith.constant 0 : i32
    return %c0_i32, %c0_i32_0 : i32, i32
  }
  func.func @transform_7(%arg0: i32, %arg1: i32) -> (i32, i32) {
    %c0_i32 = arith.constant 0 : i32
    %c0_i32_0 = arith.constant 0 : i32
    %c0_i32_1 = arith.constant 0 : i32
    return %c0_i32, %c0_i32_0 : i32, i32
  }
  func.func @transform_8(%arg0: i32, %arg1: i32) -> (i32, i32) {
    %c0_i32 = arith.constant 0 : i32
    %c0_i32_0 = arith.constant 0 : i32
    %c0_i32_1 = arith.constant 0 : i32
    return %c0_i32, %c0_i32_0 : i32, i32
  }
  func.func @transform_9(%arg0: i32, %arg1: i32) -> (i32, i32) {
    %c0_i32 = arith.constant 0 : i32
    %c0_i32_0 = arith.constant 0 : i32
    %c0_i32_1 = arith.constant 0 : i32
    return %c0_i32, %c0_i32_0 : i32, i32
  }
  func.func @transform_10(%arg0: i32, %arg1: i32) -> (i32, i32) {
    %c0_i32 = arith.constant 0 : i32
    %c0_i32_0 = arith.constant 0 : i32
    %c0_i32_1 = arith.constant 0 : i32
    return %c0_i32, %c0_i32_0 : i32, i32
  }
  func.func @transform_11(%arg0: i32, %arg1: i32) -> (i32, i32) {
    %c0_i32 = arith.constant 0 : i32
    %c0_i32_0 = arith.constant 0 : i32
    return %arg0, %c0_i32 : i32, i32
  }
}

</mosaic_0001>

<llo_original>
// kernel: tpu_custom_call.1
$region0: #{tpu_custom_call.1}
  #allocation0 [shape = 'u32[]', space=smem, size = 0x4, offset = 0x4, fixed_abs, tag = 'smem constant byte address 0x4 - core index']
  #allocation1 [shape = 'u32[144,128]{1,0:T(1,128)}', space=vmem, size = 0x12000, scoped, tag = 'internal scratch']
  #allocation2 [shape = 'f32[8,8,384]{2,1,0:T(8,128)}', space=vmem, size = 0x18000, scoped, tag = 'scratch operand']
  #allocation3 [shape = 'f32[8,128]{1,0:T(8,128)}', space=vmem, size = 0x1000, scoped, tag = 'scratch operand']
  #allocation4 [shape = 'f32[8,128]{1,0:T(8,128)}', space=vmem, size = 0x1000, scoped, tag = 'scratch operand']
  #allocation5 [shape = 'f32[8,384]{1,0:T(8,128)}', space=vmem, size = 0x3000, scoped, tag = 'scratch operand']
  %s0 = inlined_call_operand.hbm [shape: f32[8,8,16], index: 0, kind: input, shape index: {}]
  %s1 = inlined_call_operand.hbm [shape: f32[16,384], index: 1, kind: input, shape index: {}]
  %s2 = inlined_call_operand.hbm [shape: f32[128,384], index: 2, kind: input, shape index: {}]
  %s3 = inlined_call_operand.vmem [shape: f32[1,384], index: 3, kind: input, shape index: {}]
  %s4 = inlined_call_operand.vmem [shape: f32[1,128], index: 4, kind: input, shape index: {}]
  %s5 = inlined_call_operand.hbm [shape: f32[256,512], index: 5, kind: input, shape index: {}]
  %s6 = inlined_call_operand.vmem [shape: f32[1,256], index: 6, kind: input, shape index: {}]
  %s7 = inlined_call_operand.vmem [shape: f32[1,128], index: 7, kind: input, shape index: {}]
  %s8 = inlined_call_operand.vmem [shape: f32[1,128], index: 8, kind: input, shape index: {}]
  %s9 = inlined_call_operand.hbm [shape: f32[128,128], index: 9, kind: input, shape index: {}]
  %s10 = inlined_call_operand.vmem [shape: f32[1,128], index: 10, kind: input, shape index: {}]
  %s11 = inlined_call_operand.hbm [shape: f32[8,128], index: 11, kind: output, shape index: {}]
  %s12 = sld [smem:[#allocation0]]
  $region74: #{tpu_custom_call.1} parent=0
    _
  %s14 = ssub.s32 1, %s12
  %s15 = scalar_select 0, %s14, %s12
  $region1: #{tpu_custom_call.1} parent=0
    #allocation6 [shape = 'u8[32768]{0}', space=vmem, size = 0x8000, scoped, tag = 'input window, operand 0, single buffered']
    #allocation7 [shape = 's32[1]{0}', space=sflag, size = 0x4, scoped, tag = 'scoped memory for tpu_custom_call.1']
    #allocation8 [shape = 's32[1]{0}', space=sflag, size = 0x4, scoped, tag = 'scoped memory for tpu_custom_call.1']
    #allocation9 [shape = 'u8[24576]{0}', space=vmem, size = 0x6000, scoped, tag = 'input window, operand 1, single buffered']
    #allocation10 [shape = 's32[1]{0}', space=sflag, size = 0x4, scoped, tag = 'scoped memory for tpu_custom_call.1']
    #allocation11 [shape = 'u8[196608]{0}', space=vmem, size = 0x30000, scoped, tag = 'input window, operand 2, single buffered']
    #allocation12 [shape = 'u8[524288]{0}', space=vmem, size = 0x80000, scoped, tag = 'input window, operand 5, single buffered']
    #allocation13 [shape = 's32[1]{0}', space=sflag, size = 0x4, scoped, tag = 'scoped memory for tpu_custom_call.1']
    #allocation14 [shape = 'u8[65536]{0}', space=vmem, size = 0x10000, scoped, tag = 'input window, operand 9, single buffered']
    #allocation15 [shape = 'u8[4096]{0}', space=vmem, size = 0x1000, scoped, tag = 'output window, operand 0, single buffered']
    %16 = vsyncpa [#allocation7], 0
    %17 = vsyncpa [#allocation10], 0
    %18 = vsyncpa [#allocation13], 0
    %19 = vsyncpa [#allocation8], 0
    // Predicated region
    $region2: #{tpu_custom_call.1} parent=1 // pred_check
      _
    $region3: #{tpu_custom_call.1} parent=1 // pred_check_branch
      %21 = sbr.rel (0) target = $region5
    $region4: #{tpu_custom_call.1} parent=1 // pred_region
      %s23 = ssub.s32 1024, 1024
      %24 = vsyncadd [#allocation7], %s23
      %s25 = sshll.u32 [#allocation6], 4
      %s26 = int_to_ptr.vmem [resolvable:$true] %s25
      %31 = dma.hbm_to_vmem [thread:$0]  %s0, 1024, %s26, [#allocation7], 128, 128, 8
    $region5: #{tpu_custom_call.1} parent=1 // pred_fallthru
      _
    // Predicated region
    $region6: #{tpu_custom_call.1} parent=1 // pred_check
      _
    $region7: #{tpu_custom_call.1} parent=1 // pred_check_branch
      %33 = sbr.rel (0) target = $region9
    $region8: #{tpu_custom_call.1} parent=1 // pred_region
      %s35 = ssub.s32 768, 768
      %36 = vsyncadd [#allocation10], %s35
      %s37 = sshll.u32 [#allocation9], 4
      %s38 = int_to_ptr.vmem [resolvable:$true] %s37
      %43 = dma.hbm_to_vmem [thread:$0]  %s1, 768, %s38, [#allocation10], 384, 384, 24
    $region9: #{tpu_custom_call.1} parent=1 // pred_fallthru
      _
    // Predicated region
    $region10: #{tpu_custom_call.1} parent=1 // pred_check
      _
    $region11: #{tpu_custom_call.1} parent=1 // pred_check_branch
      %45 = sbr.rel (0) target = $region13
    $region12: #{tpu_custom_call.1} parent=1 // pred_region
      %s47 = ssub.s32 6144, 6144
      %48 = vsyncadd [#allocation10], %s47
      %s49 = sshll.u32 [#allocation11], 4
      %s50 = int_to_ptr.vmem [resolvable:$true] %s49
      %55 = dma.hbm_to_vmem [thread:$0]  %s2, 6144, %s50, [#allocation10], 384, 384, 24
    $region13: #{tpu_custom_call.1} parent=1 // pred_fallthru
      _
    // Predicated region
    $region14: #{tpu_custom_call.1} parent=1 // pred_check
      _
    $region15: #{tpu_custom_call.1} parent=1 // pred_check_branch
      %57 = sbr.rel (0) target = $region17
    $region16: #{tpu_custom_call.1} parent=1 // pred_region
      _
    $region17: #{tpu_custom_call.1} parent=1 // pred_fallthru
      _
    // Predicated region
    $region18: #{tpu_custom_call.1} parent=1 // pred_check
      _
    $region19: #{tpu_custom_call.1} parent=1 // pred_check_branch
      %59 = sbr.rel (0) target = $region21
    $region20: #{tpu_custom_call.1} parent=1 // pred_region
      _
    $region21: #{tpu_custom_call.1} parent=1 // pred_fallthru
      _
    // Predicated region
    $region22: #{tpu_custom_call.1} parent=1 // pred_check
      _
    $region23: #{tpu_custom_call.1} parent=1 // pred_check_branch
      %61 = sbr.rel (0) target = $region25
    $region24: #{tpu_custom_call.1} parent=1 // pred_region
      %s63 = ssub.s32 16384, 16384
      %64 = vsyncadd [#allocation13], %s63
      %s65 = sshll.u32 [#allocation12], 4
      %s66 = int_to_ptr.vmem [resolvable:$true] %s65
      %71 = dma.hbm_to_vmem [thread:$0]  %s5, 16384, %s66, [#allocation13], 512, 512, 32
    $region25: #{tpu_custom_call.1} parent=1 // pred_fallthru
      _
    // Predicated region
    $region26: #{tpu_custom_call.1} parent=1 // pred_check
      _
    $region27: #{tpu_custom_call.1} parent=1 // pred_check_branch
      %73 = sbr.rel (0) target = $region29
    $region28: #{tpu_custom_call.1} parent=1 // pred_region
      _
    $region29: #{tpu_custom_call.1} parent=1 // pred_fallthru
      _
    // Predicated region
    $region30: #{tpu_custom_call.1} parent=1 // pred_check
      _
    $region31: #{tpu_custom_call.1} parent=1 // pred_check_branch
      %75 = sbr.rel (0) target = $region33
    $region32: #{tpu_custom_call.1} parent=1 // pred_region
      _
    $region33: #{tpu_custom_call.1} parent=1 // pred_fallthru
      _
    // Predicated region
    $region34: #{tpu_custom_call.1} parent=1 // pred_check
      _
    $region35: #{tpu_custom_call.1} parent=1 // pred_check_branch
      %77 = sbr.rel (0) target = $region37
    $region36: #{tpu_custom_call.1} parent=1 // pred_region
      _
    $region37: #{tpu_custom_call.1} parent=1 // pred_fallthru
      _
    // Predicated region
    $region38: #{tpu_custom_call.1} parent=1 // pred_check
      _
    $region39: #{tpu_custom_call.1} parent=1 // pred_check_branch
      %79 = sbr.rel (0) target = $region41
    $region40: #{tpu_custom_call.1} parent=1 // pred_region
      %s81 = ssub.s32 2048, 2048
      %82 = vsyncadd [#allocation13], %s81
      %s83 = sshll.u32 [#allocation14], 4
      %s84 = int_to_ptr.vmem [resolvable:$true] %s83
      %89 = dma.hbm_to_vmem [thread:$0]  %s9, 2048, %s84, [#allocation13], 128, 128, 8
    $region41: #{tpu_custom_call.1} parent=1 // pred_fallthru
      _
    // Predicated region
    $region42: #{tpu_custom_call.1} parent=1 // pred_check
      _
    $region43: #{tpu_custom_call.1} parent=1 // pred_check_branch
      %91 = sbr.rel (0) target = $region45
    $region44: #{tpu_custom_call.1} parent=1 // pred_region
      _
    $region45: #{tpu_custom_call.1} parent=1 // pred_fallthru
      _
    // Predicated region
    $region46: #{tpu_custom_call.1} parent=1 // pred_check
      _
    $region47: #{tpu_custom_call.1} parent=1 // pred_check_branch
      %93 = sbr.rel (0) target = $region49
    $region48: #{tpu_custom_call.1} parent=1 // pred_region
      %94 = dma.done [#allocation7], 1024
    $region49: #{tpu_custom_call.1} parent=1 // pred_fallthru
      _
    // Predicated region
    $region50: #{tpu_custom_call.1} parent=1 // pred_check
      _
    $region51: #{tpu_custom_call.1} parent=1 // pred_check_branch
      %96 = sbr.rel (0) target = $region53
    $region52: #{tpu_custom_call.1} parent=1 // pred_region
      %97 = dma.done [#allocation10], 768
    $region53: #{tpu_custom_call.1} parent=1 // pred_fallthru
      _
    // Predicated region
    $region54: #{tpu_custom_call.1} parent=1 // pred_check
      _
    $region55: #{tpu_custom_call.1} parent=1 // pred_check_branch
      %99 = sbr.rel (0) target = $region57
    $region56: #{tpu_custom_call.1} parent=1 // pred_region
      %100 = dma.done [#allocation10], 6144
    $region57: #{tpu_custom_call.1} parent=1 // pred_fallthru
      _
    // Predicated region
    $region58: #{tpu_custom_call.1} parent=1 // pred_check
      _
    $region59: #{tpu_custom_call.1} parent=1 // pred_check_branch
      %102 = sbr.rel (0) target = $region61
    $region60: #{tpu_custom_call.1} parent=1 // pred_region
      %103 = dma.done [#allocation13], 16384
    $region61: #{tpu_custom_call.1} parent=1 // pred_fallthru
      _
    // Predicated region
    $region62: #{tpu_custom_call.1} parent=1 // pred_check
      _
    $region63: #{tpu_custom_call.1} parent=1 // pred_check_branch
      %105 = sbr.rel (0) target = $region65
    $region64: #{tpu_custom_call.1} parent=1 // pred_region
      %106 = dma.done [#allocation13], 2048
    $region65: #{tpu_custom_call.1} parent=1 // pred_fallthru
      _
    %v107 = vld [vmem:[#allocation6] sm:$0xff]
    %v108 = vld [vmem:[#allocation6 + $0x8] sm:$0xff]
    %v109 = vld [vmem:[#allocation6 + $0x10] sm:$0xff]
    %v110 = vld [vmem:[#allocation6 + $0x18] sm:$0xff]
    %v111 = vld [vmem:[#allocation6 + $0x20] sm:$0xff]
    %v112 = vld [vmem:[#allocation6 + $0x28] sm:$0xff]
    %v113 = vld [vmem:[#allocation6 + $0x30] sm:$0xff]
    %v114 = vld [vmem:[#allocation6 + $0x38] sm:$0xff]
    %v115 = vld [vmem:[#allocation9] sm:$0xff]
    %v116 = vld [vmem:[#allocation9 + $0x8] sm:$0xff]
    %v117 = vld [vmem:[#allocation9 + $0x10] sm:$0xff]
    %v118 = vld [vmem:[#allocation9 + $0x18] sm:$0xff]
    %v119 = vld [vmem:[#allocation9 + $0x20] sm:$0xff]
    %v120 = vld [vmem:[#allocation9 + $0x28] sm:$0xff]
    %v121 = vld [vmem:[%s3] sm:$0x7]
    %v123 = vlaneseq
    %v124 = vshrl.u32 %v123, 7
    %v125 = vsub.s32 0, %v124
    %v126 = vrot.slane %v121, %v125
    %v127 = vlaneseq
    %v128 = vshrl.u32 %v127, 7
    %v129 = vsub.s32 1, %v128
    %v130 = vrot.slane %v121, %v129
    %v131 = vlaneseq
    %v132 = vshrl.u32 %v131, 7
    %v133 = vsub.s32 2, %v132
    %v134 = vrot.slane %v121, %v133
    %vm138 = vcmask 130048
    %v140 = vsel %vm138, %v107, 0
    %v143 = vsel %vm138, %v108, 0
    %v146 = vsel %vm138, %v109, 0
    %v149 = vsel %vm138, %v110, 0
    %v152 = vsel %vm138, %v111, 0
    %v155 = vsel %vm138, %v112, 0
    %v158 = vsel %vm138, %v113, 0
    %v161 = vsel %vm138, %v114, 0
    %163 = vmatprep.subr.mxu0 0.0
    %164 = vmatpush1.msra.mxu0 0.0
    %165 = vmatprep.subr.mxu0 0.0
    %166 = vmatpush1.msra.mxu0 0.0
    %167 = vmatprep.subr.mxu0 0.0
    %168 = vmatpush1.msra.mxu0 0.0
    %169 = vmatprep.subr.mxu0 0.0
    %170 = vmatpush1.msra.mxu0 0.0
    %171 = vmatprep.subr.mxu0 0.0
    %172 = vmatpush1.msra.mxu0 0.0
    %173 = vmatprep.subr.mxu0 0.0
    %174 = vmatpush1.msra.mxu0 0.0
    %175 = vmatprep.subr.mxu0 0.0
    %176 = vmatpush1.msra.mxu0 0.0
    %177 = vmatprep.subr.mxu0 0.0
    %178 = vmatpush1.msra.mxu0 0.0
    %179 = vmatprep.subr.mxu0 0.0
    %180 = vmatpush1.msra.mxu0 0.0
    %181 = vmatprep.subr.mxu0 0.0
    %182 = vmatpush1.msra.mxu0 0.0
    %183 = vmatprep.subr.mxu0 0.0
    %184 = vmatpush1.msra.mxu0 0.0
    %185 = vmatprep.subr.mxu0 0.0
    %186 = vmatpush1.msra.mxu0 0.0
    %187 = vmatprep.subr.mxu0 0.0
    %188 = vmatpush1.msra.mxu0 0.0
    %189 = vmatprep.subr.mxu0 0.0
    %190 = vmatpush1.msra.mxu0 0.0
    %191 = vmatprep.subr.mxu0 %v119
    %192 = vmatpush1.msra.mxu0 %v118
    %193 = vmatprep.subr.mxu0 %v116
    %194 = vmatpush1.msra.mxu0 %v115
    %195 = vmatprep.subr.mxu0 0.0
    %196 = vmatpush2.msra.mxu0 0.0
    %197 = vmatprep.subr.mxu0 0.0
    %198 = vmatpush2.msra.mxu0 0.0
    %199 = vmatprep.subr.mxu0 0.0
    %200 = vmatpush2.msra.mxu0 0.0
    %201 = vmatprep.subr.mxu0 0.0
    %202 = vmatpush2.msra.mxu0 0.0
    %203 = vmatprep.subr.mxu0 0.0
    %204 = vmatpush2.msra.mxu0 0.0
    %205 = vmatprep.subr.mxu0 0.0
    %206 = vmatpush2.msra.mxu0 0.0
    %207 = vmatprep.subr.mxu0 0.0
    %208 = vmatpush2.msra.mxu0 0.0
    %209 = vmatprep.subr.mxu0 0.0
    %210 = vmatpush2.msra.mxu0 0.0
    %211 = vmatprep.subr.mxu0 0.0
    %212 = vmatpush2.msra.mxu0 0.0
    %213 = vmatprep.subr.mxu0 0.0
    %214 = vmatpush2.msra.mxu0 0.0
    %215 = vmatprep.subr.mxu0 0.0
    %216 = vmatpush2.msra.mxu0 0.0
    %217 = vmatprep.subr.mxu0 0.0
    %218 = vmatpush2.msra.mxu0 0.0
    %219 = vmatprep.subr.mxu0 0.0
    %220 = vmatpush2.msra.mxu0 0.0
    %221 = vmatprep.subr.mxu0 0.0
    %222 = vmatpush2.msra.mxu0 0.0
    %223 = vmatprep.subr.mxu0 0.0
    %224 = vmatpush2.msra.mxu0 0.0
    %225 = vmatprep.subr.mxu0 0.0
    %226 = vmatpush2.msra.mxu0 0.0
    %227 = vmatprep.mubr.f32.mxu0 0.0
    %228 = vmatmul.mubr.f32.gmra.mxu0 %v140
    %v229 = vpop.f32.mrf.mxu0
    %v230 = vadd.f32 %v126, %v229
    %v231 = vpop.f32.mrf.mxu0
    %v232 = vadd.f32 %v130, %v231
    %233 = vmatprep.mubr.f32.mxu0 0.0
    %234 = vmatmul.mubr.f32.gmra.mxu0 %v143
    %v235 = vpop.f32.mrf.mxu0
    %v236 = vadd.f32 %v126, %v235
    %v237 = vpop.f32.mrf.mxu0
    %v238 = vadd.f32 %v130, %v237
    %239 = vmatprep.mubr.f32.mxu0 0.0
    %240 = vmatmul.mubr.f32.gmra.mxu0 %v146
    %v241 = vpop.f32.mrf.mxu0
    %v242 = vadd.f32 %v126, %v241
    %v243 = vpop.f32.mrf.mxu0
    %v244 = vadd.f32 %v130, %v243
    %245 = vmatprep.mubr.f32.mxu0 0.0
    %246 = vmatmul.mubr.f32.gmra.mxu0 %v149
    %v247 = vpop.f32.mrf.mxu0
    %v248 = vadd.f32 %v126, %v247
    %v249 = vpop.f32.mrf.mxu0
    %v250 = vadd.f32 %v130, %v249
    %251 = vmatprep.mubr.f32.mxu0 0.0
    %252 = vmatmul.mubr.f32.gmra.mxu0 %v152
    %v253 = vpop.f32.mrf.mxu0
    %v254 = vadd.f32 %v126, %v253
    %v255 = vpop.f32.mrf.mxu0
    %v256 = vadd.f32 %v130, %v255
    %257 = vmatprep.mubr.f32.mxu0 0.0
    %258 = vmatmul.mubr.f32.gmra.mxu0 %v155
    %v259 = vpop.f32.mrf.mxu0
    %v260 = vadd.f32 %v126, %v259
    %v261 = vpop.f32.mrf.mxu0
    %v262 = vadd.f32 %v130, %v261
    %263 = vmatprep.mubr.f32.mxu0 0.0
    %264 = vmatmul.mubr.f32.gmra.mxu0 %v158
    %v265 = vpop.f32.mrf.mxu0
    %v266 = vadd.f32 %v126, %v265
    %v267 = vpop.f32.mrf.mxu0
    %v268 = vadd.f32 %v130, %v267
    %269 = vmatprep.mubr.f32.mxu0 0.0
    %270 = vmatmul.mubr.f32.gmra.mxu0 %v161
    %v271 = vpop.f32.mrf.mxu0
    %v272 = vadd.f32 %v126, %v271
    %v273 = vpop.f32.mrf.mxu0
    %v274 = vadd.f32 %v130, %v273
    %275 = vdwg.mxu0
    %276 = vmatprep.subr.mxu0 0.0
    %277 = vmatpush1.msra.mxu0 0.0
    %278 = vmatprep.subr.mxu0 0.0
    %279 = vmatpush1.msra.mxu0 0.0
    %280 = vmatprep.subr.mxu0 0.0
    %281 = vmatpush1.msra.mxu0 0.0
    %282 = vmatprep.subr.mxu0 0.0
    %283 = vmatpush1.msra.mxu0 0.0
    %284 = vmatprep.subr.mxu0 0.0
    %285 = vmatpush1.msra.mxu0 0.0
    %286 = vmatprep.subr.mxu0 0.0
    %287 = vmatpush1.msra.mxu0 0.0
    %288 = vmatprep.subr.mxu0 0.0
    %289 = vmatpush1.msra.mxu0 0.0
    %290 = vmatprep.subr.mxu0 0.0
    %291 = vmatpush1.msra.mxu0 0.0
    %292 = vmatprep.subr.mxu0 0.0
    %293 = vmatpush1.msra.mxu0 0.0
    %294 = vmatprep.subr.mxu0 0.0
    %295 = vmatpush1.msra.mxu0 0.0
    %296 = vmatprep.subr.mxu0 0.0
    %297 = vmatpush1.msra.mxu0 0.0
    %298 = vmatprep.subr.mxu0 0.0
    %299 = vmatpush1.msra.mxu0 0.0
    %300 = vmatprep.subr.mxu0 0.0
    %301 = vmatpush1.msra.mxu0 0.0
    %302 = vmatprep.subr.mxu0 0.0
    %303 = vmatpush1.msra.mxu0 0.0
    %304 = vmatprep.subr.mxu0 0.0
    %305 = vmatpush1.msra.mxu0 %v120
    %306 = vmatprep.subr.mxu0 0.0
    %307 = vmatpush1.msra.mxu0 %v117
    %308 = vmatprep.subr.mxu0 0.0
    %309 = vmatpush2.msra.mxu0 0.0
    %310 = vmatprep.subr.mxu0 0.0
    %311 = vmatpush2.msra.mxu0 0.0
    %312 = vmatprep.subr.mxu0 0.0
    %313 = vmatpush2.msra.mxu0 0.0
    %314 = vmatprep.subr.mxu0 0.0
    %315 = vmatpush2.msra.mxu0 0.0
    %316 = vmatprep.subr.mxu0 0.0
    %317 = vmatpush2.msra.mxu0 0.0
    %318 = vmatprep.subr.mxu0 0.0
    %319 = vmatpush2.msra.mxu0 0.0
    %320 = vmatprep.subr.mxu0 0.0
    %321 = vmatpush2.msra.mxu0 0.0
    %322 = vmatprep.subr.mxu0 0.0
    %323 = vmatpush2.msra.mxu0 0.0
    %324 = vmatprep.subr.mxu0 0.0
    %325 = vmatpush2.msra.mxu0 0.0
    %326 = vmatprep.subr.mxu0 0.0
    %327 = vmatpush2.msra.mxu0 0.0
    %328 = vmatprep.subr.mxu0 0.0
    %329 = vmatpush2.msra.mxu0 0.0
    %330 = vmatprep.subr.mxu0 0.0
    %331 = vmatpush2.msra.mxu0 0.0
    %332 = vmatprep.subr.mxu0 0.0
    %333 = vmatpush2.msra.mxu0 0.0
    %334 = vmatprep.subr.mxu0 0.0
    %335 = vmatpush2.msra.mxu0 0.0
    %336 = vmatprep.subr.mxu0 0.0
    %337 = vmatpush2.msra.mxu0 0.0
    %338 = vmatprep.subr.mxu0 0.0
    %339 = vmatpush2.msra.mxu0 0.0
    %340 = vmatprep.mubr.f32.mxu0 0.0
    %341 = vmatmul.mubr.f32.gmra.mxu0 %v140
    %v342 = vpop.f32.mrf.mxu0
    %v343 = vadd.f32 %v134, %v342
    %v344 = vpop.f32.mrf.mxu0
    %345 = vmatprep.mubr.f32.mxu0 0.0
    %346 = vmatmul.mubr.f32.gmra.mxu0 %v143
    %v347 = vpop.f32.mrf.mxu0
    %v348 = vadd.f32 %v134, %v347
    %v349 = vpop.f32.mrf.mxu0
    %350 = vmatprep.mubr.f32.mxu0 0.0
    %351 = vmatmul.mubr.f32.gmra.mxu0 %v146
    %v352 = vpop.f32.mrf.mxu0
    %v353 = vadd.f32 %v134, %v352
    %v354 = vpop.f32.mrf.mxu0
    %355 = vmatprep.mubr.f32.mxu0 0.0
    %356 = vmatmul.mubr.f32.gmra.mxu0 %v149
    %v357 = vpop.f32.mrf.mxu0
    %v358 = vadd.f32 %v134, %v357
    %v359 = vpop.f32.mrf.mxu0
    %360 = vmatprep.mubr.f32.mxu0 0.0
    %361 = vmatmul.mubr.f32.gmra.mxu0 %v152
    %v362 = vpop.f32.mrf.mxu0
    %v363 = vadd.f32 %v134, %v362
    %v364 = vpop.f32.mrf.mxu0
    %365 = vmatprep.mubr.f32.mxu0 0.0
    %366 = vmatmul.mubr.f32.gmra.mxu0 %v155
    %v367 = vpop.f32.mrf.mxu0
    %v368 = vadd.f32 %v134, %v367
    %v369 = vpop.f32.mrf.mxu0
    %370 = vmatprep.mubr.f32.mxu0 0.0
    %371 = vmatmul.mubr.f32.gmra.mxu0 %v158
    %v372 = vpop.f32.mrf.mxu0
    %v373 = vadd.f32 %v134, %v372
    %v374 = vpop.f32.mrf.mxu0
    %375 = vmatprep.mubr.f32.mxu0 0.0
    %376 = vmatmul.mubr.f32.gmra.mxu0 %v161
    %v377 = vpop.f32.mrf.mxu0
    %v378 = vadd.f32 %v134, %v377
    %v379 = vpop.f32.mrf.mxu0
    %380 = vdwg.mxu0
    %381 = vst [vmem:[#allocation2] sm:$0xff] %v230
    %382 = vst [vmem:[#allocation2 + $0x8] sm:$0xff] %v232
    %383 = vst [vmem:[#allocation2 + $0x10] sm:$0xff] %v343
    %384 = vst [vmem:[#allocation2 + $0x18] sm:$0xff] %v236
    %385 = vst [vmem:[#allocation2 + $0x20] sm:$0xff] %v238
    %386 = vst [vmem:[#allocation2 + $0x28] sm:$0xff] %v348
    %387 = vst [vmem:[#allocation2 + $0x30] sm:$0xff] %v242
    %388 = vst [vmem:[#allocation2 + $0x38] sm:$0xff] %v244
    %389 = vst [vmem:[#allocation2 + $0x40] sm:$0xff] %v353
    %390 = vst [vmem:[#allocation2 + $0x48] sm:$0xff] %v248
    %391 = vst [vmem:[#allocation2 + $0x50] sm:$0xff] %v250
    %392 = vst [vmem:[#allocation2 + $0x58] sm:$0xff] %v358
    %393 = vst [vmem:[#allocation2 + $0x60] sm:$0xff] %v254
    %394 = vst [vmem:[#allocation2 + $0x68] sm:$0xff] %v256
    %395 = vst [vmem:[#allocation2 + $0x70] sm:$0xff] %v363
    %396 = vst [vmem:[#allocation2 + $0x78] sm:$0xff] %v260
    %397 = vst [vmem:[#allocation2 + $0x80] sm:$0xff] %v262
    %398 = vst [vmem:[#allocation2 + $0x88] sm:$0xff] %v368
    %399 = vst [vmem:[#allocation2 + $0x90] sm:$0xff] %v266
    %400 = vst [vmem:[#allocation2 + $0x98] sm:$0xff] %v268
    %401 = vst [vmem:[#allocation2 + $0xa0] sm:$0xff] %v373
    %402 = vst [vmem:[#allocation2 + $0xa8] sm:$0xff] %v272
    %403 = vst [vmem:[#allocation2 + $0xb0] sm:$0xff] %v274
    %404 = vst [vmem:[#allocation2 + $0xb8] sm:$0xff] %v378
    %v405 = vld [vmem:[#allocation11] sm:$0xff]
    %v406 = vld [vmem:[#allocation11 + $0x8] sm:$0xff]
    %v407 = vld [vmem:[#allocation11 + $0x10] sm:$0xff]
    %v408 = vld [vmem:[#allocation11 + $0x18] sm:$0xff]
    %v409 = vld [vmem:[#allocation11 + $0x20] sm:$0xff]
    %v410 = vld [vmem:[#allocation11 + $0x28] sm:$0xff]
    %v411 = vld [vmem:[#allocation11 + $0x30] sm:$0xff]
    %v412 = vld [vmem:[#allocation11 + $0x38] sm:$0xff]
    %v413 = vld [vmem:[#allocation11 + $0x40] sm:$0xff]
    %v414 = vld [vmem:[#allocation11 + $0x48] sm:$0xff]
    %v415 = vld [vmem:[#allocation11 + $0x50] sm:$0xff]
    %v416 = vld [vmem:[#allocation11 + $0x58] sm:$0xff]
    %v417 = vld [vmem:[#allocation11 + $0x60] sm:$0xff]
    %v418 = vld [vmem:[#allocation11 + $0x68] sm:$0xff]
    %v419 = vld [vmem:[#allocation11 + $0x70] sm:$0xff]
    %v420 = vld [vmem:[#allocation11 + $0x78] sm:$0xff]
    %v421 = vld [vmem:[#allocation11 + $0x80] sm:$0xff]
    %v422 = vld [vmem:[#allocation11 + $0x88] sm:$0xff]
    %v423 = vld [vmem:[#allocation11 + $0x90] sm:$0xff]
    %v424 = vld [vmem:[#allocation11 + $0x98] sm:$0xff]
    %v425 = vld [vmem:[#allocation11 + $0xa0] sm:$0xff]
    %v426 = vld [vmem:[#allocation11 + $0xa8] sm:$0xff]
    %v427 = vld [vmem:[#allocation11 + $0xb0] sm:$0xff]
    %v428 = vld [vmem:[#allocation11 + $0xb8] sm:$0xff]
    %v429 = vld [vmem:[#allocation11 + $0xc0] sm:$0xff]
    %v430 = vld [vmem:[#allocation11 + $0xc8] sm:$0xff]
    %v431 = vld [vmem:[#allocation11 + $0xd0] sm:$0xff]
    %v432 = vld [vmem:[#allocation11 + $0xd8] sm:$0xff]
    %v433 = vld [vmem:[#allocation11 + $0xe0] sm:$0xff]
    %v434 = vld [vmem:[#allocation11 + $0xe8] sm:$0xff]
    %v435 = vld [vmem:[#allocation11 + $0xf0] sm:$0xff]
    %v436 = vld [vmem:[#allocation11 + $0xf8] sm:$0xff]
    %v437 = vld [vmem:[#allocation11 + $0x100] sm:$0xff]
    %v438 = vld [vmem:[#allocation11 + $0x108] sm:$0xff]
    %v439 = vld [vmem:[#allocation11 + $0x110] sm:$0xff]
    %v440 = vld [vmem:[#allocation11 + $0x118] sm:$0xff]
    %v441 = vld [vmem:[#allocation11 + $0x120] sm:$0xff]
    %v442 = vld [vmem:[#allocation11 + $0x128] sm:$0xff]
    %v443 = vld [vmem:[#allocation11 + $0x130] sm:$0xff]
    %v444 = vld [vmem:[#allocation11 + $0x138] sm:$0xff]
    %v445 = vld [vmem:[#allocation11 + $0x140] sm:$0xff]
    %v446 = vld [vmem:[#allocation11 + $0x148] sm:$0xff]
    %v447 = vld [vmem:[#allocation11 + $0x150] sm:$0xff]
    %v448 = vld [vmem:[#allocation11 + $0x158] sm:$0xff]
    %v449 = vld [vmem:[#allocation11 + $0x160] sm:$0xff]
    %v450 = vld [vmem:[#allocation11 + $0x168] sm:$0xff]
    %v451 = vld [vmem:[#allocation11 + $0x170] sm:$0xff]
    %v452 = vld [vmem:[#allocation11 + $0x178] sm:$0xff]
    %v453 = vld [vmem:[#allocation12] sm:$0xff]
    %v454 = vld [vmem:[#allocation12 + $0x8] sm:$0xff]
    %v455 = vld [vmem:[#allocation12 + $0x10] sm:$0xff]
    %v456 = vld [vmem:[#allocation12 + $0x18] sm:$0xff]
    %v457 = vld [vmem:[#allocation12 + $0x20] sm:$0xff]
    %v458 = vld [vmem:[#allocation12 + $0x28] sm:$0xff]
    %v459 = vld [vmem:[#allocation12 + $0x30] sm:$0xff]
    %v460 = vld [vmem:[#allocation12 + $0x38] sm:$0xff]
    %v461 = vld [vmem:[#allocation12 + $0x40] sm:$0xff]
    %v462 = vld [vmem:[#allocation12 + $0x48] sm:$0xff]
    %v463 = vld [vmem:[#allocation12 + $0x50] sm:$0xff]
    %v464 = vld [vmem:[#allocation12 + $0x58] sm:$0xff]
    %v465 = vld [vmem:[#allocation12 + $0x60] sm:$0xff]
    %v466 = vld [vmem:[#allocation12 + $0x68] sm:$0xff]
    %v467 = vld [vmem:[#allocation12 + $0x70] sm:$0xff]
    %v468 = vld [vmem:[#allocation12 + $0x78] sm:$0xff]
    %v469 = vld [vmem:[#allocation12 + $0x80] sm:$0xff]
    %v470 = vld [vmem:[#allocation12 + $0x88] sm:$0xff]
    %v471 = vld [vmem:[#allocation12 + $0x90] sm:$0xff]
    %v472 = vld [vmem:[#allocation12 + $0x98] sm:$0xff]
    %v473 = vld [vmem:[#allocation12 + $0xa0] sm:$0xff]
    %v474 = vld [vmem:[#allocation12 + $0xa8] sm:$0xff]
    %v475 = vld [vmem:[#allocation12 + $0xb0] sm:$0xff]
    %v476 = vld [vmem:[#allocation12 + $0xb8] sm:$0xff]
    %v477 = vld [vmem:[#allocation12 + $0xc0] sm:$0xff]
    %v478 = vld [vmem:[#allocation12 + $0xc8] sm:$0xff]
    %v479 = vld [vmem:[#allocation12 + $0xd0] sm:$0xff]
    %v480 = vld [vmem:[#allocation12 + $0xd8] sm:$0xff]
    %v481 = vld [vmem:[#allocation12 + $0xe0] sm:$0xff]
    %v482 = vld [vmem:[#allocation12 + $0xe8] sm:$0xff]
    %v483 = vld [vmem:[#allocation12 + $0xf0] sm:$0xff]
    %v484 = vld [vmem:[#allocation12 + $0xf8] sm:$0xff]
    %v485 = vld [vmem:[#allocation12 + $0x100] sm:$0xff]
    %v486 = vld [vmem:[#allocation12 + $0x108] sm:$0xff]
    %v487 = vld [vmem:[#allocation12 + $0x110] sm:$0xff]
    %v488 = vld [vmem:[#allocation12 + $0x118] sm:$0xff]
    %v489 = vld [vmem:[#allocation12 + $0x120] sm:$0xff]
    %v490 = vld [vmem:[#allocation12 + $0x128] sm:$0xff]
    %v491 = vld [vmem:[#allocation12 + $0x130] sm:$0xff]
    %v492 = vld [vmem:[#allocation12 + $0x138] sm:$0xff]
    %v493 = vld [vmem:[#allocation12 + $0x140] sm:$0xff]
    %v494 = vld [vmem:[#allocation12 + $0x148] sm:$0xff]
    %v495 = vld [vmem:[#allocation12 + $0x150] sm:$0xff]
    %v496 = vld [vmem:[#allocation12 + $0x158] sm:$0xff]
    %v497 = vld [vmem:[#allocation12 + $0x160] sm:$0xff]
    %v498 = vld [vmem:[#allocation12 + $0x168] sm:$0xff]
    %v499 = vld [vmem:[#allocation12 + $0x170] sm:$0xff]
    %v500 = vld [vmem:[#allocation12 + $0x178] sm:$0xff]
    %v501 = vld [vmem:[#allocation12 + $0x180] sm:$0xff]
    %v502 = vld [vmem:[#allocation12 + $0x188] sm:$0xff]
    %v503 = vld [vmem:[#allocation12 + $0x190] sm:$0xff]
    %v504 = vld [vmem:[#allocation12 + $0x198] sm:$0xff]
    %v505 = vld [vmem:[#allocation12 + $0x1a0] sm:$0xff]
    %v506 = vld [vmem:[#allocation12 + $0x1a8] sm:$0xff]
    %v507 = vld [vmem:[#allocation12 + $0x1b0] sm:$0xff]
    %v508 = vld [vmem:[#allocation12 + $0x1b8] sm:$0xff]
    %v509 = vld [vmem:[#allocation12 + $0x1c0] sm:$0xff]
    %v510 = vld [vmem:[#allocation12 + $0x1c8] sm:$0xff]
    %v511 = vld [vmem:[#allocation12 + $0x1d0] sm:$0xff]
    %v512 = vld [vmem:[#allocation12 + $0x1d8] sm:$0xff]
    %v513 = vld [vmem:[#allocation12 + $0x1e0] sm:$0xff]
    %v514 = vld [vmem:[#allocation12 + $0x1e8] sm:$0xff]
    %v515 = vld [vmem:[#allocation12 + $0x1f0] sm:$0xff]
    %v516 = vld [vmem:[#allocation12 + $0x1f8] sm:$0xff]
    %v517 = vld [vmem:[#allocation12 + $0x200] sm:$0xff]
    %v518 = vld [vmem:[#allocation12 + $0x208] sm:$0xff]
    %v519 = vld [vmem:[#allocation12 + $0x210] sm:$0xff]
    %v520 = vld [vmem:[#allocation12 + $0x218] sm:$0xff]
    %v521 = vld [vmem:[#allocation12 + $0x220] sm:$0xff]
    %v522 = vld [vmem:[#allocation12 + $0x228] sm:$0xff]
    %v523 = vld [vmem:[#allocation12 + $0x230] sm:$0xff]
    %v524 = vld [vmem:[#allocation12 + $0x238] sm:$0xff]
    %v525 = vld [vmem:[#allocation12 + $0x240] sm:$0xff]
    %v526 = vld [vmem:[#allocation12 + $0x248] sm:$0xff]
    %v527 = vld [vmem:[#allocation12 + $0x250] sm:$0xff]
    %v528 = vld [vmem:[#allocation12 + $0x258] sm:$0xff]
    %v529 = vld [vmem:[#allocation12 + $0x260] sm:$0xff]
    %v530 = vld [vmem:[#allocation12 + $0x268] sm:$0xff]
    %v531 = vld [vmem:[#allocation12 + $0x270] sm:$0xff]
    %v532 = vld [vmem:[#allocation12 + $0x278] sm:$0xff]
    %v533 = vld [vmem:[#allocation12 + $0x280] sm:$0xff]
    %v534 = vld [vmem:[#allocation12 + $0x288] sm:$0xff]
    %v535 = vld [vmem:[#allocation12 + $0x290] sm:$0xff]
    %v536 = vld [vmem:[#allocation12 + $0x298] sm:$0xff]
    %v537 = vld [vmem:[#allocation12 + $0x2a0] sm:$0xff]
    %v538 = vld [vmem:[#allocation12 + $0x2a8] sm:$0xff]
    %v539 = vld [vmem:[#allocation12 + $0x2b0] sm:$0xff]
    %v540 = vld [vmem:[#allocation12 + $0x2b8] sm:$0xff]
    %v541 = vld [vmem:[#allocation12 + $0x2c0] sm:$0xff]
    %v542 = vld [vmem:[#allocation12 + $0x2c8] sm:$0xff]
    %v543 = vld [vmem:[#allocation12 + $0x2d0] sm:$0xff]
    %v544 = vld [vmem:[#allocation12 + $0x2d8] sm:$0xff]
    %v545 = vld [vmem:[#allocation12 + $0x2e0] sm:$0xff]
    %v546 = vld [vmem:[#allocation12 + $0x2e8] sm:$0xff]
    %v547 = vld [vmem:[#allocation12 + $0x2f0] sm:$0xff]
    %v548 = vld [vmem:[#allocation12 + $0x2f8] sm:$0xff]
    %v549 = vld [vmem:[#allocation12 + $0x300] sm:$0xff]
    %v550 = vld [vmem:[#allocation12 + $0x308] sm:$0xff]
    %v551 = vld [vmem:[#allocation12 + $0x310] sm:$0xff]
    %v552 = vld [vmem:[#allocation12 + $0x318] sm:$0xff]
    %v553 = vld [vmem:[#allocation12 + $0x320] sm:$0xff]
    %v554 = vld [vmem:[#allocation12 + $0x328] sm:$0xff]
    %v555 = vld [vmem:[#allocation12 + $0x330] sm:$0xff]
    %v556 = vld [vmem:[#allocation12 + $0x338] sm:$0xff]
    %v557 = vld [vmem:[#allocation12 + $0x340] sm:$0xff]
    %v558 = vld [vmem:[#allocation12 + $0x348] sm:$0xff]
    %v559 = vld [vmem:[#allocation12 + $0x350] sm:$0xff]
    %v560 = vld [vmem:[#allocation12 + $0x358] sm:$0xff]
    %v561 = vld [vmem:[#allocation12 + $0x360] sm:$0xff]
    %v562 = vld [vmem:[#allocation12 + $0x368] sm:$0xff]
    %v563 = vld [vmem:[#allocation12 + $0x370] sm:$0xff]
    %v564 = vld [vmem:[#allocation12 + $0x378] sm:$0xff]
    %v565 = vld [vmem:[#allocation12 + $0x380] sm:$0xff]
    %v566 = vld [vmem:[#allocation12 + $0x388] sm:$0xff]
    %v567 = vld [vmem:[#allocation12 + $0x390] sm:$0xff]
    %v568 = vld [vmem:[#allocation12 + $0x398] sm:$0xff]
    %v569 = vld [vmem:[#allocation12 + $0x3a0] sm:$0xff]
    %v570 = vld [vmem:[#allocation12 + $0x3a8] sm:$0xff]
    %v571 = vld [vmem:[#allocation12 + $0x3b0] sm:$0xff]
    %v572 = vld [vmem:[#allocation12 + $0x3b8] sm:$0xff]
    %v573 = vld [vmem:[#allocation12 + $0x3c0] sm:$0xff]
    %v574 = vld [vmem:[#allocation12 + $0x3c8] sm:$0xff]
    %v575 = vld [vmem:[#allocation12 + $0x3d0] sm:$0xff]
    %v576 = vld [vmem:[#allocation12 + $0x3d8] sm:$0xff]
    %v577 = vld [vmem:[#allocation12 + $0x3e0] sm:$0xff]
    %v578 = vld [vmem:[#allocation12 + $0x3e8] sm:$0xff]
    %v579 = vld [vmem:[#allocation12 + $0x3f0] sm:$0xff]
    %v580 = vld [vmem:[#allocation12 + $0x3f8] sm:$0xff]
    %v581 = vld [vmem:[%s4] sm:$0x1]
    %v582 = vld [vmem:[%s6] sm:$0x3]
    %v583 = vld [vmem:[%s7] sm:$0x1]
    %v584 = vld [vmem:[%s8] sm:$0x1]
    %v585 = vld [vmem:[#allocation2] sm:$0xff]
    %v586 = vld [vmem:[#allocation2 + $0x8] sm:$0xff]
    %v587 = vld [vmem:[#allocation2 + $0x10] sm:$0xff]
    %v588 = vadd.f32 %v585, 0.0
    %v589 = vadd.f32 %v586, 0.0
    %v590 = vmul.f32 %v588, 0.5
    %v591 = vmul.f32 %v589, 0.5
    %v592 = vtanh.pop %v590
    %v593 = vtanh.pop %v591
    %v594 = vmul.f32 %v592, 0.5
    %v595 = vmul.f32 %v593, 0.5
    %v596 = vadd.f32 %v594, 0.5
    %v597 = vadd.f32 %v595, 0.5
    %v599 = vlaneseq
    %v600 = vshrl.u32 %v599, 7
    %v601 = vsub.s32 0, %v600
    %v602 = vrot.slane %v581, %v601
    %v604 = vadd.f32 %v602, 0.0
    %v605 = vmul.f32 %v596, %v604
    %v606 = vadd.f32 %v587, %v605
    %v607 = vtanh.pop %v606
    %v608 = vsub.f32 1.0, %v597
    %v609 = vmul.f32 %v608, %v607
    %v610 = vmul.f32 %v597, 0.0
    %v611 = vadd.f32 %v609, %v610
    %612 = vmatprep.subr.mxu0 %v514
    %613 = vmatpush1.msra.mxu0 %v513
    %614 = vmatprep.subr.mxu0 %v510
    %615 = vmatpush1.msra.mxu0 %v509
    %616 = vmatprep.subr.mxu0 %v506
    %617 = vmatpush1.msra.mxu0 %v505
    %618 = vmatprep.subr.mxu0 %v502
    %619 = vmatpush1.msra.mxu0 %v501
    %620 = vmatprep.subr.mxu0 %v498
    %621 = vmatpush1.msra.mxu0 %v497
    %622 = vmatprep.subr.mxu0 %v494
    %623 = vmatpush1.msra.mxu0 %v493
    %624 = vmatprep.subr.mxu0 %v490
    %625 = vmatpush1.msra.mxu0 %v489
    %626 = vmatprep.subr.mxu0 %v486
    %627 = vmatpush1.msra.mxu0 %v485
    %628 = vmatprep.subr.mxu0 %v482
    %629 = vmatpush1.msra.mxu0 %v481
    %630 = vmatprep.subr.mxu0 %v478
    %631 = vmatpush1.msra.mxu0 %v477
    %632 = vmatprep.subr.mxu0 %v474
    %633 = vmatpush1.msra.mxu0 %v473
    %634 = vmatprep.subr.mxu0 %v470
    %635 = vmatpush1.msra.mxu0 %v469
    %636 = vmatprep.subr.mxu0 %v466
    %637 = vmatpush1.msra.mxu0 %v465
    %638 = vmatprep.subr.mxu0 %v462
    %639 = vmatpush1.msra.mxu0 %v461
    %640 = vmatprep.subr.mxu0 %v458
    %641 = vmatpush1.msra.mxu0 %v457
    %642 = vmatprep.subr.mxu0 %v454
    %643 = vmatpush1.msra.mxu0 %v453
    %644 = vmatprep.subr.mxu0 %v578
    %645 = vmatpush2.msra.mxu0 %v577
    %646 = vmatprep.subr.mxu0 %v574
    %647 = vmatpush2.msra.mxu0 %v573
    %648 = vmatprep.subr.mxu0 %v570
    %649 = vmatpush2.msra.mxu0 %v569
    %650 = vmatprep.subr.mxu0 %v566
    %651 = vmatpush2.msra.mxu0 %v565
    %652 = vmatprep.subr.mxu0 %v562
    %653 = vmatpush2.msra.mxu0 %v561
    %654 = vmatprep.subr.mxu0 %v558
    %655 = vmatpush2.msra.mxu0 %v557
    %656 = vmatprep.subr.mxu0 %v554
    %657 = vmatpush2.msra.mxu0 %v553
    %658 = vmatprep.subr.mxu0 %v550
    %659 = vmatpush2.msra.mxu0 %v549
    %660 = vmatprep.subr.mxu0 %v546
    %661 = vmatpush2.msra.mxu0 %v545
    %662 = vmatprep.subr.mxu0 %v542
    %663 = vmatpush2.msra.mxu0 %v541
    %664 = vmatprep.subr.mxu0 %v538
    %665 = vmatpush2.msra.mxu0 %v537
    %666 = vmatprep.subr.mxu0 %v534
    %667 = vmatpush2.msra.mxu0 %v533
    %668 = vmatprep.subr.mxu0 %v530
    %669 = vmatpush2.msra.mxu0 %v529
    %670 = vmatprep.subr.mxu0 %v526
    %671 = vmatpush2.msra.mxu0 %v525
    %672 = vmatprep.subr.mxu0 %v522
    %673 = vmatpush2.msra.mxu0 %v521
    %674 = vmatprep.subr.mxu0 %v518
    %675 = vmatpush2.msra.mxu0 %v517
    %676 = vmatprep.mubr.f32.mxu0 0.0
    %677 = vmatmul.mubr.f32.gmra.mxu0 %v611
    %v678 = vpop.f32.mrf.mxu0
    %v679 = vadd.f32 0.0, %v678
    %v680 = vpop.f32.mrf.mxu0
    %v681 = vadd.f32 0.0, %v680
    %682 = vdwg.mxu0
    %683 = vmatprep.subr.mxu0 %v516
    %684 = vmatpush1.msra.mxu0 %v515
    %685 = vmatprep.subr.mxu0 %v512
    %686 = vmatpush1.msra.mxu0 %v511
    %687 = vmatprep.subr.mxu0 %v508
    %688 = vmatpush1.msra.mxu0 %v507
    %689 = vmatprep.subr.mxu0 %v504
    %690 = vmatpush1.msra.mxu0 %v503
    %691 = vmatprep.subr.mxu0 %v500
    %692 = vmatpush1.msra.mxu0 %v499
    %693 = vmatprep.subr.mxu0 %v496
    %694 = vmatpush1.msra.mxu0 %v495
    %695 = vmatprep.subr.mxu0 %v492
    %696 = vmatpush1.msra.mxu0 %v491
    %697 = vmatprep.subr.mxu0 %v488
    %698 = vmatpush1.msra.mxu0 %v487
    %699 = vmatprep.subr.mxu0 %v484
    %700 = vmatpush1.msra.mxu0 %v483
    %701 = vmatprep.subr.mxu0 %v480
    %702 = vmatpush1.msra.mxu0 %v479
    %703 = vmatprep.subr.mxu0 %v476
    %704 = vmatpush1.msra.mxu0 %v475
    %705 = vmatprep.subr.mxu0 %v472
    %706 = vmatpush1.msra.mxu0 %v471
    %707 = vmatprep.subr.mxu0 %v468
    %708 = vmatpush1.msra.mxu0 %v467
    %709 = vmatprep.subr.mxu0 %v464
    %710 = vmatpush1.msra.mxu0 %v463
    %711 = vmatprep.subr.mxu0 %v460
    %712 = vmatpush1.msra.mxu0 %v459
    %713 = vmatprep.subr.mxu0 %v456
    %714 = vmatpush1.msra.mxu0 %v455
    %715 = vmatprep.subr.mxu0 %v580
    %716 = vmatpush2.msra.mxu0 %v579
    %717 = vmatprep.subr.mxu0 %v576
    %718 = vmatpush2.msra.mxu0 %v575
    %719 = vmatprep.subr.mxu0 %v572
    %720 = vmatpush2.msra.mxu0 %v571
    %721 = vmatprep.subr.mxu0 %v568
    %722 = vmatpush2.msra.mxu0 %v567
    %723 = vmatprep.subr.mxu0 %v564
    %724 = vmatpush2.msra.mxu0 %v563
    %725 = vmatprep.subr.mxu0 %v560
    %726 = vmatpush2.msra.mxu0 %v559
    %727 = vmatprep.subr.mxu0 %v556
    %728 = vmatpush2.msra.mxu0 %v555
    %729 = vmatprep.subr.mxu0 %v552
    %730 = vmatpush2.msra.mxu0 %v551
    %731 = vmatprep.subr.mxu0 %v548
    %732 = vmatpush2.msra.mxu0 %v547
    %733 = vmatprep.subr.mxu0 %v544
    %734 = vmatpush2.msra.mxu0 %v543
    %735 = vmatprep.subr.mxu0 %v540
    %736 = vmatpush2.msra.mxu0 %v539
    %737 = vmatprep.subr.mxu0 %v536
    %738 = vmatpush2.msra.mxu0 %v535
    %739 = vmatprep.subr.mxu0 %v532
    %740 = vmatpush2.msra.mxu0 %v531
    %741 = vmatprep.subr.mxu0 %v528
    %742 = vmatpush2.msra.mxu0 %v527
    %743 = vmatprep.subr.mxu0 %v524
    %744 = vmatpush2.msra.mxu0 %v523
    %745 = vmatprep.subr.mxu0 %v520
    %746 = vmatpush2.msra.mxu0 %v519
    %747 = vmatprep.mubr.f32.mxu0 0.0
    %748 = vmatmul.mubr.f32.gmra.mxu0 %v611
    %v749 = vpop.f32.mrf.mxu0
    %v750 = vadd.f32 0.0, %v749
    %v751 = vpop.f32.mrf.mxu0
    %v752 = vadd.f32 0.0, %v751
    %753 = vdwg.mxu0
    %754 = vmatprep.subr.mxu0 %v451
    %755 = vmatpush1.msra.mxu0 %v450
    %756 = vmatprep.subr.mxu0 %v448
    %757 = vmatpush1.msra.mxu0 %v447
    %758 = vmatprep.subr.mxu0 %v445
    %759 = vmatpush1.msra.mxu0 %v444
    %760 = vmatprep.subr.mxu0 %v442
    %761 = vmatpush1.msra.mxu0 %v441
    %762 = vmatprep.subr.mxu0 %v439
    %763 = vmatpush1.msra.mxu0 %v438
    %764 = vmatprep.subr.mxu0 %v436
    %765 = vmatpush1.msra.mxu0 %v435
    %766 = vmatprep.subr.mxu0 %v433
    %767 = vmatpush1.msra.mxu0 %v432
    %768 = vmatprep.subr.mxu0 %v430
    %769 = vmatpush1.msra.mxu0 %v429
    %770 = vmatprep.subr.mxu0 %v427
    %771 = vmatpush1.msra.mxu0 %v426
    %772 = vmatprep.subr.mxu0 %v424
    %773 = vmatpush1.msra.mxu0 %v423
    %774 = vmatprep.subr.mxu0 %v421
    %775 = vmatpush1.msra.mxu0 %v420
    %776 = vmatprep.subr.mxu0 %v418
    %777 = vmatpush1.msra.mxu0 %v417
    %778 = vmatprep.subr.mxu0 %v415
    %779 = vmatpush1.msra.mxu0 %v414
    %780 = vmatprep.subr.mxu0 %v412
    %781 = vmatpush1.msra.mxu0 %v411
    %782 = vmatprep.subr.mxu0 %v409
    %783 = vmatpush1.msra.mxu0 %v408
    %784 = vmatprep.subr.mxu0 %v406
    %785 = vmatpush1.msra.mxu0 %v405
    %786 = vmatprep.subr.mxu0 0.0
    %787 = vmatpush2.msra.mxu0 0.0
    %788 = vmatprep.subr.mxu0 0.0
    %789 = vmatpush2.msra.mxu0 0.0
    %790 = vmatprep.subr.mxu0 0.0
    %791 = vmatpush2.msra.mxu0 0.0
    %792 = vmatprep.subr.mxu0 0.0
    %793 = vmatpush2.msra.mxu0 0.0
    %794 = vmatprep.subr.mxu0 0.0
    %795 = vmatpush2.msra.mxu0 0.0
    %796 = vmatprep.subr.mxu0 0.0
    %797 = vmatpush2.msra.mxu0 0.0
    %798 = vmatprep.subr.mxu0 0.0
    %799 = vmatpush2.msra.mxu0 0.0
    %800 = vmatprep.subr.mxu0 0.0
    %801 = vmatpush2.msra.mxu0 0.0
    %802 = vmatprep.subr.mxu0 0.0
    %803 = vmatpush2.msra.mxu0 0.0
    %804 = vmatprep.subr.mxu0 0.0
    %805 = vmatpush2.msra.mxu0 0.0
    %806 = vmatprep.subr.mxu0 0.0
    %807 = vmatpush2.msra.mxu0 0.0
    %808 = vmatprep.subr.mxu0 0.0
    %809 = vmatpush2.msra.mxu0 0.0
    %810 = vmatprep.subr.mxu0 0.0
    %811 = vmatpush2.msra.mxu0 0.0
    %812 = vmatprep.subr.mxu0 0.0
    %813 = vmatpush2.msra.mxu0 0.0
    %814 = vmatprep.subr.mxu0 0.0
    %815 = vmatpush2.msra.mxu0 0.0
    %816 = vmatprep.subr.mxu0 0.0
    %817 = vmatpush2.msra.mxu0 0.0
    %818 = vmatprep.mubr.f32.mxu0 0.0
    %819 = vmatmul.mubr.f32.gmra.mxu0 %v611
    %v820 = vpop.f32.mrf.mxu0
    %v821 = vadd.f32 0.0, %v820
    %v822 = vpop.f32.mrf.mxu0
    %v823 = vadd.f32 0.0, %v822
    %824 = vdwg.mxu0
    %825 = vmatprep.subr.mxu0 0.0
    %826 = vmatpush1.msra.mxu0 %v452
    %827 = vmatprep.subr.mxu0 0.0
    %828 = vmatpush1.msra.mxu0 %v449
    %829 = vmatprep.subr.mxu0 0.0
    %830 = vmatpush1.msra.mxu0 %v446
    %831 = vmatprep.subr.mxu0 0.0
    %832 = vmatpush1.msra.mxu0 %v443
    %833 = vmatprep.subr.mxu0 0.0
    %834 = vmatpush1.msra.mxu0 %v440
    %835 = vmatprep.subr.mxu0 0.0
    %836 = vmatpush1.msra.mxu0 %v437
    %837 = vmatprep.subr.mxu0 0.0
    %838 = vmatpush1.msra.mxu0 %v434
    %839 = vmatprep.subr.mxu0 0.0
    %840 = vmatpush1.msra.mxu0 %v431
    %841 = vmatprep.subr.mxu0 0.0
    %842 = vmatpush1.msra.mxu0 %v428
    %843 = vmatprep.subr.mxu0 0.0
    %844 = vmatpush1.msra.mxu0 %v425
    %845 = vmatprep.subr.mxu0 0.0
    %846 = vmatpush1.msra.mxu0 %v422
    %847 = vmatprep.subr.mxu0 0.0
    %848 = vmatpush1.msra.mxu0 %v419
    %849 = vmatprep.subr.mxu0 0.0
    %850 = vmatpush1.msra.mxu0 %v416
    %851 = vmatprep.subr.mxu0 0.0
    %852 = vmatpush1.msra.mxu0 %v413
    %853 = vmatprep.subr.mxu0 0.0
    %854 = vmatpush1.msra.mxu0 %v410
    %855 = vmatprep.subr.mxu0 0.0
    %856 = vmatpush1.msra.mxu0 %v407
    %857 = vmatprep.subr.mxu0 0.0
    %858 = vmatpush2.msra.mxu0 0.0
    %859 = vmatprep.subr.mxu0 0.0
    %860 = vmatpush2.msra.mxu0 0.0
    %861 = vmatprep.subr.mxu0 0.0
    %862 = vmatpush2.msra.mxu0 0.0
    %863 = vmatprep.subr.mxu0 0.0
    %864 = vmatpush2.msra.mxu0 0.0
    %865 = vmatprep.subr.mxu0 0.0
    %866 = vmatpush2.msra.mxu0 0.0
    %867 = vmatprep.subr.mxu0 0.0
    %868 = vmatpush2.msra.mxu0 0.0
    %869 = vmatprep.subr.mxu0 0.0
    %870 = vmatpush2.msra.mxu0 0.0
    %871 = vmatprep.subr.mxu0 0.0
    %872 = vmatpush2.msra.mxu0 0.0
    %873 = vmatprep.subr.mxu0 0.0
    %874 = vmatpush2.msra.mxu0 0.0
    %875 = vmatprep.subr.mxu0 0.0
    %876 = vmatpush2.msra.mxu0 0.0
    %877 = vmatprep.subr.mxu0 0.0
    %878 = vmatpush2.msra.mxu0 0.0
    %879 = vmatprep.subr.mxu0 0.0
    %880 = vmatpush2.msra.mxu0 0.0
    %881 = vmatprep.subr.mxu0 0.0
    %882 = vmatpush2.msra.mxu0 0.0
    %883 = vmatprep.subr.mxu0 0.0
    %884 = vmatpush2.msra.mxu0 0.0
    %885 = vmatprep.subr.mxu0 0.0
    %886 = vmatpush2.msra.mxu0 0.0
    %887 = vmatprep.subr.mxu0 0.0
    %888 = vmatpush2.msra.mxu0 0.0
    %889 = vmatprep.mubr.f32.mxu0 0.0
    %890 = vmatmul.mubr.f32.gmra.mxu0 %v611
    %v891 = vpop.f32.mrf.mxu0
    %v892 = vadd.f32 0.0, %v891
    %v893 = vpop.f32.mrf.mxu0
    %894 = vdwg.mxu0
    %v896 = vlaneseq
    %v897 = vshrl.u32 %v896, 7
    %v898 = vsub.s32 0, %v897
    %v899 = vrot.slane %v582, %v898
    %v900 = vlaneseq
    %v901 = vshrl.u32 %v900, 7
    %v902 = vsub.s32 1, %v901
    %v903 = vrot.slane %v582, %v902
    %v906 = vadd.f32 %v679, %v899
    %v907 = vadd.f32 %v681, %v903
    %v908 = vmul.f32 %v906, 0.5
    %v909 = vmul.f32 %v907, 0.5
    %v910 = vtanh.pop %v908
    %v911 = vtanh.pop %v909
    %v912 = vmul.f32 %v910, 0.5
    %v913 = vmul.f32 %v911, 0.5
    %v914 = vadd.f32 %v912, 0.5
    %v915 = vadd.f32 %v913, 0.5
    %v917 = vlaneseq
    %v918 = vshrl.u32 %v917, 7
    %v919 = vsub.s32 0, %v918
    %v920 = vrot.slane %v583, %v919
    %v922 = vadd.f32 %v750, %v920
    %v924 = vlaneseq
    %v925 = vshrl.u32 %v924, 7
    %v926 = vsub.s32 0, %v925
    %v927 = vrot.slane %v584, %v926
    %v929 = vadd.f32 %v752, %v927
    %v930 = vmul.f32 %v914, %v929
    %v931 = vadd.f32 %v922, %v930
    %v932 = vtanh.pop %v931
    %v933 = vsub.f32 1.0, %v915
    %v934 = vmul.f32 %v933, %v932
    %v935 = vmul.f32 %v915, 0.0
    %v936 = vadd.f32 %v934, %v935
    %s937 = scalar_lea.vmem [#allocation2], 24
    %v938 = vld [vmem:[%s937] sm:$0xff]
    %v939 = vld [vmem:[%s937 + $0x8] sm:$0xff]
    %v940 = vld [vmem:[%s937 + $0x10] sm:$0xff]
    %v941 = vadd.f32 %v938, %v821
    %v942 = vadd.f32 %v939, %v823
    %v943 = vmul.f32 %v941, 0.5
    %v944 = vmul.f32 %v942, 0.5
    %v945 = vtanh.pop %v943
    %v946 = vtanh.pop %v944
    %v947 = vmul.f32 %v945, 0.5
    %v948 = vmul.f32 %v946, 0.5
    %v949 = vadd.f32 %v947, 0.5
    %v950 = vadd.f32 %v948, 0.5
    %v951 = vadd.f32 %v892, %v602
    %v952 = vmul.f32 %v949, %v951
    %v953 = vadd.f32 %v940, %v952
    %v954 = vtanh.pop %v953
    %v955 = vsub.f32 1.0, %v950
    %v956 = vmul.f32 %v955, %v954
    %v957 = vmul.f32 %v950, %v611
    %v958 = vadd.f32 %v956, %v957
    %959 = vmatprep.subr.mxu0 %v514
    %960 = vmatpush1.msra.mxu0 %v513
    %961 = vmatprep.subr.mxu0 %v510
    %962 = vmatpush1.msra.mxu0 %v509
    %963 = vmatprep.subr.mxu0 %v506
    %964 = vmatpush1.msra.mxu0 %v505
    %965 = vmatprep.subr.mxu0 %v502
    %966 = vmatpush1.msra.mxu0 %v501
    %967 = vmatprep.subr.mxu0 %v498
    %968 = vmatpush1.msra.mxu0 %v497
    %969 = vmatprep.subr.mxu0 %v494
    %970 = vmatpush1.msra.mxu0 %v493
    %971 = vmatprep.subr.mxu0 %v490
    %972 = vmatpush1.msra.mxu0 %v489
    %973 = vmatprep.subr.mxu0 %v486
    %974 = vmatpush1.msra.mxu0 %v485
    %975 = vmatprep.subr.mxu0 %v482
    %976 = vmatpush1.msra.mxu0 %v481
    %977 = vmatprep.subr.mxu0 %v478
    %978 = vmatpush1.msra.mxu0 %v477
    %979 = vmatprep.subr.mxu0 %v474
    %980 = vmatpush1.msra.mxu0 %v473
    %981 = vmatprep.subr.mxu0 %v470
    %982 = vmatpush1.msra.mxu0 %v469
    %983 = vmatprep.subr.mxu0 %v466
    %984 = vmatpush1.msra.mxu0 %v465
    %985 = vmatprep.subr.mxu0 %v462
    %986 = vmatpush1.msra.mxu0 %v461
    %987 = vmatprep.subr.mxu0 %v458
    %988 = vmatpush1.msra.mxu0 %v457
    %989 = vmatprep.subr.mxu0 %v454
    %990 = vmatpush1.msra.mxu0 %v453
    %991 = vmatprep.subr.mxu0 %v578
    %992 = vmatpush2.msra.mxu0 %v577
    %993 = vmatprep.subr.mxu0 %v574
    %994 = vmatpush2.msra.mxu0 %v573
    %995 = vmatprep.subr.mxu0 %v570
    %996 = vmatpush2.msra.mxu0 %v569
    %997 = vmatprep.subr.mxu0 %v566
    %998 = vmatpush2.msra.mxu0 %v565
    %999 = vmatprep.subr.mxu0 %v562
    %1000 = vmatpush2.msra.mxu0 %v561
    %1001 = vmatprep.subr.mxu0 %v558
    %1002 = vmatpush2.msra.mxu0 %v557
    %1003 = vmatprep.subr.mxu0 %v554
    %1004 = vmatpush2.msra.mxu0 %v553
    %1005 = vmatprep.subr.mxu0 %v550
    %1006 = vmatpush2.msra.mxu0 %v549
    %1007 = vmatprep.subr.mxu0 %v546
    %1008 = vmatpush2.msra.mxu0 %v545
    %1009 = vmatprep.subr.mxu0 %v542
    %1010 = vmatpush2.msra.mxu0 %v541
    %1011 = vmatprep.subr.mxu0 %v538
    %1012 = vmatpush2.msra.mxu0 %v537
    %1013 = vmatprep.subr.mxu0 %v534
    %1014 = vmatpush2.msra.mxu0 %v533
    %1015 = vmatprep.subr.mxu0 %v530
    %1016 = vmatpush2.msra.mxu0 %v529
    %1017 = vmatprep.subr.mxu0 %v526
    %1018 = vmatpush2.msra.mxu0 %v525
    %1019 = vmatprep.subr.mxu0 %v522
    %1020 = vmatpush2.msra.mxu0 %v521
    %1021 = vmatprep.subr.mxu0 %v518
    %1022 = vmatpush2.msra.mxu0 %v517
    %1023 = vmatprep.mubr.f32.mxu0 %v936
    %1024 = vmatmul.mubr.f32.gmra.mxu0 %v958
    %v1025 = vpop.f32.mrf.mxu0
    %v1026 = vadd.f32 0.0, %v1025
    %v1027 = vpop.f32.mrf.mxu0
    %v1028 = vadd.f32 0.0, %v1027
    %1029 = vdwg.mxu0
    %1030 = vmatprep.subr.mxu0 %v516
    %1031 = vmatpush1.msra.mxu0 %v515
    %1032 = vmatprep.subr.mxu0 %v512
    %1033 = vmatpush1.msra.mxu0 %v511
    %1034 = vmatprep.subr.mxu0 %v508
    %1035 = vmatpush1.msra.mxu0 %v507
    %1036 = vmatprep.subr.mxu0 %v504
    %1037 = vmatpush1.msra.mxu0 %v503
    %1038 = vmatprep.subr.mxu0 %v500
    %1039 = vmatpush1.msra.mxu0 %v499
    %1040 = vmatprep.subr.mxu0 %v496
    %1041 = vmatpush1.msra.mxu0 %v495
    %1042 = vmatprep.subr.mxu0 %v492
    %1043 = vmatpush1.msra.mxu0 %v491
    %1044 = vmatprep.subr.mxu0 %v488
    %1045 = vmatpush1.msra.mxu0 %v487
    %1046 = vmatprep.subr.mxu0 %v484
    %1047 = vmatpush1.msra.mxu0 %v483
    %1048 = vmatprep.subr.mxu0 %v480
    %1049 = vmatpush1.msra.mxu0 %v479
    %1050 = vmatprep.subr.mxu0 %v476
    %1051 = vmatpush1.msra.mxu0 %v475
    %1052 = vmatprep.subr.mxu0 %v472
    %1053 = vmatpush1.msra.mxu0 %v471
    %1054 = vmatprep.subr.mxu0 %v468
    %1055 = vmatpush1.msra.mxu0 %v467
    %1056 = vmatprep.subr.mxu0 %v464
    %1057 = vmatpush1.msra.mxu0 %v463
    %1058 = vmatprep.subr.mxu0 %v460
    %1059 = vmatpush1.msra.mxu0 %v459
    %1060 = vmatprep.subr.mxu0 %v456
    %1061 = vmatpush1.msra.mxu0 %v455
    %1062 = vmatprep.subr.mxu0 %v580
    %1063 = vmatpush2.msra.mxu0 %v579
    %1064 = vmatprep.subr.mxu0 %v576
    %1065 = vmatpush2.msra.mxu0 %v575
    %1066 = vmatprep.subr.mxu0 %v572
    %1067 = vmatpush2.msra.mxu0 %v571
    %1068 = vmatprep.subr.mxu0 %v568
    %1069 = vmatpush2.msra.mxu0 %v567
    %1070 = vmatprep.subr.mxu0 %v564
    %1071 = vmatpush2.msra.mxu0 %v563
    %1072 = vmatprep.subr.mxu0 %v560
    %1073 = vmatpush2.msra.mxu0 %v559
    %1074 = vmatprep.subr.mxu0 %v556
    %1075 = vmatpush2.msra.mxu0 %v555
    %1076 = vmatprep.subr.mxu0 %v552
    %1077 = vmatpush2.msra.mxu0 %v551
    %1078 = vmatprep.subr.mxu0 %v548
    %1079 = vmatpush2.msra.mxu0 %v547
    %1080 = vmatprep.subr.mxu0 %v544
    %1081 = vmatpush2.msra.mxu0 %v543
    %1082 = vmatprep.subr.mxu0 %v540
    %1083 = vmatpush2.msra.mxu0 %v539
    %1084 = vmatprep.subr.mxu0 %v536
    %1085 = vmatpush2.msra.mxu0 %v535
    %1086 = vmatprep.subr.mxu0 %v532
    %1087 = vmatpush2.msra.mxu0 %v531
    %1088 = vmatprep.subr.mxu0 %v528
    %1089 = vmatpush2.msra.mxu0 %v527
    %1090 = vmatprep.subr.mxu0 %v524
    %1091 = vmatpush2.msra.mxu0 %v523
    %1092 = vmatprep.subr.mxu0 %v520
    %1093 = vmatpush2.msra.mxu0 %v519
    %1094 = vmatprep.mubr.f32.mxu0 %v936
    %1095 = vmatmul.mubr.f32.gmra.mxu0 %v958
    %v1096 = vpop.f32.mrf.mxu0
    %v1097 = vadd.f32 0.0, %v1096
    %v1098 = vpop.f32.mrf.mxu0
    %v1099 = vadd.f32 0.0, %v1098
    %1100 = vdwg.mxu0
    %1101 = vmatprep.subr.mxu0 %v451
    %1102 = vmatpush1.msra.mxu0 %v450
    %1103 = vmatprep.subr.mxu0 %v448
    %1104 = vmatpush1.msra.mxu0 %v447
    %1105 = vmatprep.subr.mxu0 %v445
    %1106 = vmatpush1.msra.mxu0 %v444
    %1107 = vmatprep.subr.mxu0 %v442
    %1108 = vmatpush1.msra.mxu0 %v441
    %1109 = vmatprep.subr.mxu0 %v439
    %1110 = vmatpush1.msra.mxu0 %v438
    %1111 = vmatprep.subr.mxu0 %v436
    %1112 = vmatpush1.msra.mxu0 %v435
    %1113 = vmatprep.subr.mxu0 %v433
    %1114 = vmatpush1.msra.mxu0 %v432
    %1115 = vmatprep.subr.mxu0 %v430
    %1116 = vmatpush1.msra.mxu0 %v429
    %1117 = vmatprep.subr.mxu0 %v427
    %1118 = vmatpush1.msra.mxu0 %v426
    %1119 = vmatprep.subr.mxu0 %v424
    %1120 = vmatpush1.msra.mxu0 %v423
    %1121 = vmatprep.subr.mxu0 %v421
    %1122 = vmatpush1.msra.mxu0 %v420
    %1123 = vmatprep.subr.mxu0 %v418
    %1124 = vmatpush1.msra.mxu0 %v417
    %1125 = vmatprep.subr.mxu0 %v415
    %1126 = vmatpush1.msra.mxu0 %v414
    %1127 = vmatprep.subr.mxu0 %v412
    %1128 = vmatpush1.msra.mxu0 %v411
    %1129 = vmatprep.subr.mxu0 %v409
    %1130 = vmatpush1.msra.mxu0 %v408
    %1131 = vmatprep.subr.mxu0 %v406
    %1132 = vmatpush1.msra.mxu0 %v405
    %1133 = vmatprep.subr.mxu0 0.0
    %1134 = vmatpush2.msra.mxu0 0.0
    %1135 = vmatprep.subr.mxu0 0.0
    %1136 = vmatpush2.msra.mxu0 0.0
    %1137 = vmatprep.subr.mxu0 0.0
    %1138 = vmatpush2.msra.mxu0 0.0
    %1139 = vmatprep.subr.mxu0 0.0
    %1140 = vmatpush2.msra.mxu0 0.0
    %1141 = vmatprep.subr.mxu0 0.0
    %1142 = vmatpush2.msra.mxu0 0.0
    %1143 = vmatprep.subr.mxu0 0.0
    %1144 = vmatpush2.msra.mxu0 0.0
    %1145 = vmatprep.subr.mxu0 0.0
    %1146 = vmatpush2.msra.mxu0 0.0
    %1147 = vmatprep.subr.mxu0 0.0
    %1148 = vmatpush2.msra.mxu0 0.0
    %1149 = vmatprep.subr.mxu0 0.0
    %1150 = vmatpush2.msra.mxu0 0.0
    %1151 = vmatprep.subr.mxu0 0.0
    %1152 = vmatpush2.msra.mxu0 0.0
    %1153 = vmatprep.subr.mxu0 0.0
    %1154 = vmatpush2.msra.mxu0 0.0
    %1155 = vmatprep.subr.mxu0 0.0
    %1156 = vmatpush2.msra.mxu0 0.0
    %1157 = vmatprep.subr.mxu0 0.0
    %1158 = vmatpush2.msra.mxu0 0.0
    %1159 = vmatprep.subr.mxu0 0.0
    %1160 = vmatpush2.msra.mxu0 0.0
    %1161 = vmatprep.subr.mxu0 0.0
    %1162 = vmatpush2.msra.mxu0 0.0
    %1163 = vmatprep.subr.mxu0 0.0
    %1164 = vmatpush2.msra.mxu0 0.0
    %1165 = vmatprep.mubr.f32.mxu0 0.0
    %1166 = vmatmul.mubr.f32.gmra.mxu0 %v958
    %v1167 = vpop.f32.mrf.mxu0
    %v1168 = vadd.f32 0.0, %v1167
    %v1169 = vpop.f32.mrf.mxu0
    %v1170 = vadd.f32 0.0, %v1169
    %1171 = vdwg.mxu0
    %1172 = vmatprep.subr.mxu0 0.0
    %1173 = vmatpush1.msra.mxu0 %v452
    %1174 = vmatprep.subr.mxu0 0.0
    %1175 = vmatpush1.msra.mxu0 %v449
    %1176 = vmatprep.subr.mxu0 0.0
    %1177 = vmatpush1.msra.mxu0 %v446
    %1178 = vmatprep.subr.mxu0 0.0
    %1179 = vmatpush1.msra.mxu0 %v443
    %1180 = vmatprep.subr.mxu0 0.0
    %1181 = vmatpush1.msra.mxu0 %v440
    %1182 = vmatprep.subr.mxu0 0.0
    %1183 = vmatpush1.msra.mxu0 %v437
    %1184 = vmatprep.subr.mxu0 0.0
    %1185 = vmatpush1.msra.mxu0 %v434
    %1186 = vmatprep.subr.mxu0 0.0
    %1187 = vmatpush1.msra.mxu0 %v431
    %1188 = vmatprep.subr.mxu0 0.0
    %1189 = vmatpush1.msra.mxu0 %v428
    %1190 = vmatprep.subr.mxu0 0.0
    %1191 = vmatpush1.msra.mxu0 %v425
    %1192 = vmatprep.subr.mxu0 0.0
    %1193 = vmatpush1.msra.mxu0 %v422
    %1194 = vmatprep.subr.mxu0 0.0
    %1195 = vmatpush1.msra.mxu0 %v419
    %1196 = vmatprep.subr.mxu0 0.0
    %1197 = vmatpush1.msra.mxu0 %v416
    %1198 = vmatprep.subr.mxu0 0.0
    %1199 = vmatpush1.msra.mxu0 %v413
    %1200 = vmatprep.subr.mxu0 0.0
    %1201 = vmatpush1.msra.mxu0 %v410
    %1202 = vmatprep.subr.mxu0 0.0
    %1203 = vmatpush1.msra.mxu0 %v407
    %1204 = vmatprep.subr.mxu0 0.0
    %1205 = vmatpush2.msra.mxu0 0.0
    %1206 = vmatprep.subr.mxu0 0.0
    %1207 = vmatpush2.msra.mxu0 0.0
    %1208 = vmatprep.subr.mxu0 0.0
    %1209 = vmatpush2.msra.mxu0 0.0
    %1210 = vmatprep.subr.mxu0 0.0
    %1211 = vmatpush2.msra.mxu0 0.0
    %1212 = vmatprep.subr.mxu0 0.0
    %1213 = vmatpush2.msra.mxu0 0.0
    %1214 = vmatprep.subr.mxu0 0.0
    %1215 = vmatpush2.msra.mxu0 0.0
    %1216 = vmatprep.subr.mxu0 0.0
    %1217 = vmatpush2.msra.mxu0 0.0
    %1218 = vmatprep.subr.mxu0 0.0
    %1219 = vmatpush2.msra.mxu0 0.0
    %1220 = vmatprep.subr.mxu0 0.0
    %1221 = vmatpush2.msra.mxu0 0.0
    %1222 = vmatprep.subr.mxu0 0.0
    %1223 = vmatpush2.msra.mxu0 0.0
    %1224 = vmatprep.subr.mxu0 0.0
    %1225 = vmatpush2.msra.mxu0 0.0
    %1226 = vmatprep.subr.mxu0 0.0
    %1227 = vmatpush2.msra.mxu0 0.0
    %1228 = vmatprep.subr.mxu0 0.0
    %1229 = vmatpush2.msra.mxu0 0.0
    %1230 = vmatprep.subr.mxu0 0.0
    %1231 = vmatpush2.msra.mxu0 0.0
    %1232 = vmatprep.subr.mxu0 0.0
    %1233 = vmatpush2.msra.mxu0 0.0
    %1234 = vmatprep.subr.mxu0 0.0
    %1235 = vmatpush2.msra.mxu0 0.0
    %1236 = vmatprep.mubr.f32.mxu0 0.0
    %1237 = vmatmul.mubr.f32.gmra.mxu0 %v958
    %v1238 = vpop.f32.mrf.mxu0
    %v1239 = vadd.f32 0.0, %v1238
    %v1240 = vpop.f32.mrf.mxu0
    %1241 = vdwg.mxu0
    %v1242 = vadd.f32 %v1026, %v899
    %v1243 = vadd.f32 %v1028, %v903
    %v1244 = vmul.f32 %v1242, 0.5
    %v1245 = vmul.f32 %v1243, 0.5
    %v1246 = vtanh.pop %v1244
    %v1247 = vtanh.pop %v1245
    %v1248 = vmul.f32 %v1246, 0.5
    %v1249 = vmul.f32 %v1247, 0.5
    %v1250 = vadd.f32 %v1248, 0.5
    %v1251 = vadd.f32 %v1249, 0.5
    %v1252 = vadd.f32 %v1097, %v920
    %v1253 = vadd.f32 %v1099, %v927
    %v1254 = vmul.f32 %v1250, %v1253
    %v1255 = vadd.f32 %v1252, %v1254
    %v1256 = vtanh.pop %v1255
    %v1257 = vsub.f32 1.0, %v1251
    %v1258 = vmul.f32 %v1257, %v1256
    %v1259 = vmul.f32 %v1251, %v936
    %v1260 = vadd.f32 %v1258, %v1259
    %s1261 = scalar_lea.vmem [#allocation2], 48
    %v1262 = vld [vmem:[%s1261] sm:$0xff]
    %v1263 = vld [vmem:[%s1261 + $0x8] sm:$0xff]
    %v1264 = vld [vmem:[%s1261 + $0x10] sm:$0xff]
    %v1265 = vadd.f32 %v1262, %v1168
    %v1266 = vadd.f32 %v1263, %v1170
    %v1267 = vmul.f32 %v1265, 0.5
    %v1268 = vmul.f32 %v1266, 0.5
    %v1269 = vtanh.pop %v1267
    %v1270 = vtanh.pop %v1268
    %v1271 = vmul.f32 %v1269, 0.5
    %v1272 = vmul.f32 %v1270, 0.5
    %v1273 = vadd.f32 %v1271, 0.5
    %v1274 = vadd.f32 %v1272, 0.5
    %v1275 = vadd.f32 %v1239, %v602
    %v1276 = vmul.f32 %v1273, %v1275
    %v1277 = vadd.f32 %v1264, %v1276
    %v1278 = vtanh.pop %v1277
    %v1279 = vsub.f32 1.0, %v1274
    %v1280 = vmul.f32 %v1279, %v1278
    %v1281 = vmul.f32 %v1274, %v958
    %v1282 = vadd.f32 %v1280, %v1281
    %1283 = vmatprep.subr.mxu0 %v514
    %1284 = vmatpush1.msra.mxu0 %v513
    %1285 = vmatprep.subr.mxu0 %v510
    %1286 = vmatpush1.msra.mxu0 %v509
    %1287 = vmatprep.subr.mxu0 %v506
    %1288 = vmatpush1.msra.mxu0 %v505
    %1289 = vmatprep.subr.mxu0 %v502
    %1290 = vmatpush1.msra.mxu0 %v501
    %1291 = vmatprep.subr.mxu0 %v498
    %1292 = vmatpush1.msra.mxu0 %v497
    %1293 = vmatprep.subr.mxu0 %v494
    %1294 = vmatpush1.msra.mxu0 %v493
    %1295 = vmatprep.subr.mxu0 %v490
    %1296 = vmatpush1.msra.mxu0 %v489
    %1297 = vmatprep.subr.mxu0 %v486
    %1298 = vmatpush1.msra.mxu0 %v485
    %1299 = vmatprep.subr.mxu0 %v482
    %1300 = vmatpush1.msra.mxu0 %v481
    %1301 = vmatprep.subr.mxu0 %v478
    %1302 = vmatpush1.msra.mxu0 %v477
    %1303 = vmatprep.subr.mxu0 %v474
    %1304 = vmatpush1.msra.mxu0 %v473
    %1305 = vmatprep.subr.mxu0 %v470
    %1306 = vmatpush1.msra.mxu0 %v469
    %1307 = vmatprep.subr.mxu0 %v466
    %1308 = vmatpush1.msra.mxu0 %v465
    %1309 = vmatprep.subr.mxu0 %v462
    %1310 = vmatpush1.msra.mxu0 %v461
    %1311 = vmatprep.subr.mxu0 %v458
    %1312 = vmatpush1.msra.mxu0 %v457
    %1313 = vmatprep.subr.mxu0 %v454
    %1314 = vmatpush1.msra.mxu0 %v453
    %1315 = vmatprep.subr.mxu0 %v578
    %1316 = vmatpush2.msra.mxu0 %v577
    %1317 = vmatprep.subr.mxu0 %v574
    %1318 = vmatpush2.msra.mxu0 %v573
    %1319 = vmatprep.subr.mxu0 %v570
    %1320 = vmatpush2.msra.mxu0 %v569
    %1321 = vmatprep.subr.mxu0 %v566
    %1322 = vmatpush2.msra.mxu0 %v565
    %1323 = vmatprep.subr.mxu0 %v562
    %1324 = vmatpush2.msra.mxu0 %v561
    %1325 = vmatprep.subr.mxu0 %v558
    %1326 = vmatpush2.msra.mxu0 %v557
    %1327 = vmatprep.subr.mxu0 %v554
    %1328 = vmatpush2.msra.mxu0 %v553
    %1329 = vmatprep.subr.mxu0 %v550
    %1330 = vmatpush2.msra.mxu0 %v549
    %1331 = vmatprep.subr.mxu0 %v546
    %1332 = vmatpush2.msra.mxu0 %v545
    %1333 = vmatprep.subr.mxu0 %v542
    %1334 = vmatpush2.msra.mxu0 %v541
    %1335 = vmatprep.subr.mxu0 %v538
    %1336 = vmatpush2.msra.mxu0 %v537
    %1337 = vmatprep.subr.mxu0 %v534
    %1338 = vmatpush2.msra.mxu0 %v533
    %1339 = vmatprep.subr.mxu0 %v530
    %1340 = vmatpush2.msra.mxu0 %v529
    %1341 = vmatprep.subr.mxu0 %v526
    %1342 = vmatpush2.msra.mxu0 %v525
    %1343 = vmatprep.subr.mxu0 %v522
    %1344 = vmatpush2.msra.mxu0 %v521
    %1345 = vmatprep.subr.mxu0 %v518
    %1346 = vmatpush2.msra.mxu0 %v517
    %1347 = vmatprep.mubr.f32.mxu0 %v1260
    %1348 = vmatmul.mubr.f32.gmra.mxu0 %v1282
    %v1349 = vpop.f32.mrf.mxu0
    %v1350 = vadd.f32 0.0, %v1349
    %v1351 = vpop.f32.mrf.mxu0
    %v1352 = vadd.f32 0.0, %v1351
    %1353 = vdwg.mxu0
    %1354 = vmatprep.subr.mxu0 %v516
    %1355 = vmatpush1.msra.mxu0 %v515
    %1356 = vmatprep.subr.mxu0 %v512
    %1357 = vmatpush1.msra.mxu0 %v511
    %1358 = vmatprep.subr.mxu0 %v508
    %1359 = vmatpush1.msra.mxu0 %v507
    %1360 = vmatprep.subr.mxu0 %v504
    %1361 = vmatpush1.msra.mxu0 %v503
    %1362 = vmatprep.subr.mxu0 %v500
    %1363 = vmatpush1.msra.mxu0 %v499
    %1364 = vmatprep.subr.mxu0 %v496
    %1365 = vmatpush1.msra.mxu0 %v495
    %1366 = vmatprep.subr.mxu0 %v492
    %1367 = vmatpush1.msra.mxu0 %v491
    %1368 = vmatprep.subr.mxu0 %v488
    %1369 = vmatpush1.msra.mxu0 %v487
    %1370 = vmatprep.subr.mxu0 %v484
    %1371 = vmatpush1.msra.mxu0 %v483
    %1372 = vmatprep.subr.mxu0 %v480
    %1373 = vmatpush1.msra.mxu0 %v479
    %1374 = vmatprep.subr.mxu0 %v476
    %1375 = vmatpush1.msra.mxu0 %v475
    %1376 = vmatprep.subr.mxu0 %v472
    %1377 = vmatpush1.msra.mxu0 %v471
    %1378 = vmatprep.subr.mxu0 %v468
    %1379 = vmatpush1.msra.mxu0 %v467
    %1380 = vmatprep.subr.mxu0 %v464
    %1381 = vmatpush1.msra.mxu0 %v463
    %1382 = vmatprep.subr.mxu0 %v460
    %1383 = vmatpush1.msra.mxu0 %v459
    %1384 = vmatprep.subr.mxu0 %v456
    %1385 = vmatpush1.msra.mxu0 %v455
    %1386 = vmatprep.subr.mxu0 %v580
    %1387 = vmatpush2.msra.mxu0 %v579
    %1388 = vmatprep.subr.mxu0 %v576
    %1389 = vmatpush2.msra.mxu0 %v575
    %1390 = vmatprep.subr.mxu0 %v572
    %1391 = vmatpush2.msra.mxu0 %v571
    %1392 = vmatprep.subr.mxu0 %v568
    %1393 = vmatpush2.msra.mxu0 %v567
    %1394 = vmatprep.subr.mxu0 %v564
    %1395 = vmatpush2.msra.mxu0 %v563
    %1396 = vmatprep.subr.mxu0 %v560
    %1397 = vmatpush2.msra.mxu0 %v559
    %1398 = vmatprep.subr.mxu0 %v556
    %1399 = vmatpush2.msra.mxu0 %v555
    %1400 = vmatprep.subr.mxu0 %v552
    %1401 = vmatpush2.msra.mxu0 %v551
    %1402 = vmatprep.subr.mxu0 %v548
    %1403 = vmatpush2.msra.mxu0 %v547
    %1404 = vmatprep.subr.mxu0 %v544
    %1405 = vmatpush2.msra.mxu0 %v543
    %1406 = vmatprep.subr.mxu0 %v540
    %1407 = vmatpush2.msra.mxu0 %v539
    %1408 = vmatprep.subr.mxu0 %v536
    %1409 = vmatpush2.msra.mxu0 %v535
    %1410 = vmatprep.subr.mxu0 %v532
    %1411 = vmatpush2.msra.mxu0 %v531
    %1412 = vmatprep.subr.mxu0 %v528
    %1413 = vmatpush2.msra.mxu0 %v527
    %1414 = vmatprep.subr.mxu0 %v524
    %1415 = vmatpush2.msra.mxu0 %v523
    %1416 = vmatprep.subr.mxu0 %v520
    %1417 = vmatpush2.msra.mxu0 %v519
    %1418 = vmatprep.mubr.f32.mxu0 %v1260
    %1419 = vmatmul.mubr.f32.gmra.mxu0 %v1282
    %v1420 = vpop.f32.mrf.mxu0
    %v1421 = vadd.f32 0.0, %v1420
    %v1422 = vpop.f32.mrf.mxu0
    %v1423 = vadd.f32 0.0, %v1422
    %1424 = vdwg.mxu0
    %1425 = vmatprep.subr.mxu0 %v451
    %1426 = vmatpush1.msra.mxu0 %v450
    %1427 = vmatprep.subr.mxu0 %v448
    %1428 = vmatpush1.msra.mxu0 %v447
    %1429 = vmatprep.subr.mxu0 %v445
    %1430 = vmatpush1.msra.mxu0 %v444
    %1431 = vmatprep.subr.mxu0 %v442
    %1432 = vmatpush1.msra.mxu0 %v441
    %1433 = vmatprep.subr.mxu0 %v439
    %1434 = vmatpush1.msra.mxu0 %v438
    %1435 = vmatprep.subr.mxu0 %v436
    %1436 = vmatpush1.msra.mxu0 %v435
    %1437 = vmatprep.subr.mxu0 %v433
    %1438 = vmatpush1.msra.mxu0 %v432
    %1439 = vmatprep.subr.mxu0 %v430
    %1440 = vmatpush1.msra.mxu0 %v429
    %1441 = vmatprep.subr.mxu0 %v427
    %1442 = vmatpush1.msra.mxu0 %v426
    %1443 = vmatprep.subr.mxu0 %v424
    %1444 = vmatpush1.msra.mxu0 %v423
    %1445 = vmatprep.subr.mxu0 %v421
    %1446 = vmatpush1.msra.mxu0 %v420
    %1447 = vmatprep.subr.mxu0 %v418
    %1448 = vmatpush1.msra.mxu0 %v417
    %1449 = vmatprep.subr.mxu0 %v415
    %1450 = vmatpush1.msra.mxu0 %v414
    %1451 = vmatprep.subr.mxu0 %v412
    %1452 = vmatpush1.msra.mxu0 %v411
    %1453 = vmatprep.subr.mxu0 %v409
    %1454 = vmatpush1.msra.mxu0 %v408
    %1455 = vmatprep.subr.mxu0 %v406
    %1456 = vmatpush1.msra.mxu0 %v405
    %1457 = vmatprep.subr.mxu0 0.0
    %1458 = vmatpush2.msra.mxu0 0.0
    %1459 = vmatprep.subr.mxu0 0.0
    %1460 = vmatpush2.msra.mxu0 0.0
    %1461 = vmatprep.subr.mxu0 0.0
    %1462 = vmatpush2.msra.mxu0 0.0
    %1463 = vmatprep.subr.mxu0 0.0
    %1464 = vmatpush2.msra.mxu0 0.0
    %1465 = vmatprep.subr.mxu0 0.0
    %1466 = vmatpush2.msra.mxu0 0.0
    %1467 = vmatprep.subr.mxu0 0.0
    %1468 = vmatpush2.msra.mxu0 0.0
    %1469 = vmatprep.subr.mxu0 0.0
    %1470 = vmatpush2.msra.mxu0 0.0
    %1471 = vmatprep.subr.mxu0 0.0
    %1472 = vmatpush2.msra.mxu0 0.0
    %1473 = vmatprep.subr.mxu0 0.0
    %1474 = vmatpush2.msra.mxu0 0.0
    %1475 = vmatprep.subr.mxu0 0.0
    %1476 = vmatpush2.msra.mxu0 0.0
    %1477 = vmatprep.subr.mxu0 0.0
    %1478 = vmatpush2.msra.mxu0 0.0
    %1479 = vmatprep.subr.mxu0 0.0
    %1480 = vmatpush2.msra.mxu0 0.0
    %1481 = vmatprep.subr.mxu0 0.0
    %1482 = vmatpush2.msra.mxu0 0.0
    %1483 = vmatprep.subr.mxu0 0.0
    %1484 = vmatpush2.msra.mxu0 0.0
    %1485 = vmatprep.subr.mxu0 0.0
    %1486 = vmatpush2.msra.mxu0 0.0
    %1487 = vmatprep.subr.mxu0 0.0
    %1488 = vmatpush2.msra.mxu0 0.0
    %1489 = vmatprep.mubr.f32.mxu0 0.0
    %1490 = vmatmul.mubr.f32.gmra.mxu0 %v1282
    %v1491 = vpop.f32.mrf.mxu0
    %v1492 = vadd.f32 0.0, %v1491
    %v1493 = vpop.f32.mrf.mxu0
    %v1494 = vadd.f32 0.0, %v1493
    %1495 = vdwg.mxu0
    %1496 = vmatprep.subr.mxu0 0.0
    %1497 = vmatpush1.msra.mxu0 %v452
    %1498 = vmatprep.subr.mxu0 0.0
    %1499 = vmatpush1.msra.mxu0 %v449
    %1500 = vmatprep.subr.mxu0 0.0
    %1501 = vmatpush1.msra.mxu0 %v446
    %1502 = vmatprep.subr.mxu0 0.0
    %1503 = vmatpush1.msra.mxu0 %v443
    %1504 = vmatprep.subr.mxu0 0.0
    %1505 = vmatpush1.msra.mxu0 %v440
    %1506 = vmatprep.subr.mxu0 0.0
    %1507 = vmatpush1.msra.mxu0 %v437
    %1508 = vmatprep.subr.mxu0 0.0
    %1509 = vmatpush1.msra.mxu0 %v434
    %1510 = vmatprep.subr.mxu0 0.0
    %1511 = vmatpush1.msra.mxu0 %v431
    %1512 = vmatprep.subr.mxu0 0.0
    %1513 = vmatpush1.msra.mxu0 %v428
    %1514 = vmatprep.subr.mxu0 0.0
    %1515 = vmatpush1.msra.mxu0 %v425
    %1516 = vmatprep.subr.mxu0 0.0
    %1517 = vmatpush1.msra.mxu0 %v422
    %1518 = vmatprep.subr.mxu0 0.0
    %1519 = vmatpush1.msra.mxu0 %v419
    %1520 = vmatprep.subr.mxu0 0.0
    %1521 = vmatpush1.msra.mxu0 %v416
    %1522 = vmatprep.subr.mxu0 0.0
    %1523 = vmatpush1.msra.mxu0 %v413
    %1524 = vmatprep.subr.mxu0 0.0
    %1525 = vmatpush1.msra.mxu0 %v410
    %1526 = vmatprep.subr.mxu0 0.0
    %1527 = vmatpush1.msra.mxu0 %v407
    %1528 = vmatprep.subr.mxu0 0.0
    %1529 = vmatpush2.msra.mxu0 0.0
    %1530 = vmatprep.subr.mxu0 0.0
    %1531 = vmatpush2.msra.mxu0 0.0
    %1532 = vmatprep.subr.mxu0 0.0
    %1533 = vmatpush2.msra.mxu0 0.0
    %1534 = vmatprep.subr.mxu0 0.0
    %1535 = vmatpush2.msra.mxu0 0.0
    %1536 = vmatprep.subr.mxu0 0.0
    %1537 = vmatpush2.msra.mxu0 0.0
    %1538 = vmatprep.subr.mxu0 0.0
    %1539 = vmatpush2.msra.mxu0 0.0
    %1540 = vmatprep.subr.mxu0 0.0
    %1541 = vmatpush2.msra.mxu0 0.0
    %1542 = vmatprep.subr.mxu0 0.0
    %1543 = vmatpush2.msra.mxu0 0.0
    %1544 = vmatprep.subr.mxu0 0.0
    %1545 = vmatpush2.msra.mxu0 0.0
    %1546 = vmatprep.subr.mxu0 0.0
    %1547 = vmatpush2.msra.mxu0 0.0
    %1548 = vmatprep.subr.mxu0 0.0
    %1549 = vmatpush2.msra.mxu0 0.0
    %1550 = vmatprep.subr.mxu0 0.0
    %1551 = vmatpush2.msra.mxu0 0.0
    %1552 = vmatprep.subr.mxu0 0.0
    %1553 = vmatpush2.msra.mxu0 0.0
    %1554 = vmatprep.subr.mxu0 0.0
    %1555 = vmatpush2.msra.mxu0 0.0
    %1556 = vmatprep.subr.mxu0 0.0
    %1557 = vmatpush2.msra.mxu0 0.0
    %1558 = vmatprep.subr.mxu0 0.0
    %1559 = vmatpush2.msra.mxu0 0.0
    %1560 = vmatprep.mubr.f32.mxu0 0.0
    %1561 = vmatmul.mubr.f32.gmra.mxu0 %v1282
    %v1562 = vpop.f32.mrf.mxu0
    %v1563 = vadd.f32 0.0, %v1562
    %v1564 = vpop.f32.mrf.mxu0
    %1565 = vdwg.mxu0
    %v1566 = vadd.f32 %v1350, %v899
    %v1567 = vadd.f32 %v1352, %v903
    %v1568 = vmul.f32 %v1566, 0.5
    %v1569 = vmul.f32 %v1567, 0.5
    %v1570 = vtanh.pop %v1568
    %v1571 = vtanh.pop %v1569
    %v1572 = vmul.f32 %v1570, 0.5
    %v1573 = vmul.f32 %v1571, 0.5
    %v1574 = vadd.f32 %v1572, 0.5
    %v1575 = vadd.f32 %v1573, 0.5
    %v1576 = vadd.f32 %v1421, %v920
    %v1577 = vadd.f32 %v1423, %v927
    %v1578 = vmul.f32 %v1574, %v1577
    %v1579 = vadd.f32 %v1576, %v1578
    %v1580 = vtanh.pop %v1579
    %v1581 = vsub.f32 1.0, %v1575
    %v1582 = vmul.f32 %v1581, %v1580
    %v1583 = vmul.f32 %v1575, %v1260
    %v1584 = vadd.f32 %v1582, %v1583
    %s1585 = scalar_lea.vmem [#allocation2], 72
    %v1586 = vld [vmem:[%s1585] sm:$0xff]
    %v1587 = vld [vmem:[%s1585 + $0x8] sm:$0xff]
    %v1588 = vld [vmem:[%s1585 + $0x10] sm:$0xff]
    %v1589 = vadd.f32 %v1586, %v1492
    %v1590 = vadd.f32 %v1587, %v1494
    %v1591 = vmul.f32 %v1589, 0.5
    %v1592 = vmul.f32 %v1590, 0.5
    %v1593 = vtanh.pop %v1591
    %v1594 = vtanh.pop %v1592
    %v1595 = vmul.f32 %v1593, 0.5
    %v1596 = vmul.f32 %v1594, 0.5
    %v1597 = vadd.f32 %v1595, 0.5
    %v1598 = vadd.f32 %v1596, 0.5
    %v1599 = vadd.f32 %v1563, %v602
    %v1600 = vmul.f32 %v1597, %v1599
    %v1601 = vadd.f32 %v1588, %v1600
    %v1602 = vtanh.pop %v1601
    %v1603 = vsub.f32 1.0, %v1598
    %v1604 = vmul.f32 %v1603, %v1602
    %v1605 = vmul.f32 %v1598, %v1282
    %v1606 = vadd.f32 %v1604, %v1605
    %1607 = vmatprep.subr.mxu0 %v514
    %1608 = vmatpush1.msra.mxu0 %v513
    %1609 = vmatprep.subr.mxu0 %v510
    %1610 = vmatpush1.msra.mxu0 %v509
    %1611 = vmatprep.subr.mxu0 %v506
    %1612 = vmatpush1.msra.mxu0 %v505
    %1613 = vmatprep.subr.mxu0 %v502
    %1614 = vmatpush1.msra.mxu0 %v501
    %1615 = vmatprep.subr.mxu0 %v498
    %1616 = vmatpush1.msra.mxu0 %v497
    %1617 = vmatprep.subr.mxu0 %v494
    %1618 = vmatpush1.msra.mxu0 %v493
    %1619 = vmatprep.subr.mxu0 %v490
    %1620 = vmatpush1.msra.mxu0 %v489
    %1621 = vmatprep.subr.mxu0 %v486
    %1622 = vmatpush1.msra.mxu0 %v485
    %1623 = vmatprep.subr.mxu0 %v482
    %1624 = vmatpush1.msra.mxu0 %v481
    %1625 = vmatprep.subr.mxu0 %v478
    %1626 = vmatpush1.msra.mxu0 %v477
    %1627 = vmatprep.subr.mxu0 %v474
    %1628 = vmatpush1.msra.mxu0 %v473
    %1629 = vmatprep.subr.mxu0 %v470
    %1630 = vmatpush1.msra.mxu0 %v469
    %1631 = vmatprep.subr.mxu0 %v466
    %1632 = vmatpush1.msra.mxu0 %v465
    %1633 = vmatprep.subr.mxu0 %v462
    %1634 = vmatpush1.msra.mxu0 %v461
    %1635 = vmatprep.subr.mxu0 %v458
    %1636 = vmatpush1.msra.mxu0 %v457
    %1637 = vmatprep.subr.mxu0 %v454
    %1638 = vmatpush1.msra.mxu0 %v453
    %1639 = vmatprep.subr.mxu0 %v578
    %1640 = vmatpush2.msra.mxu0 %v577
    %1641 = vmatprep.subr.mxu0 %v574
    %1642 = vmatpush2.msra.mxu0 %v573
    %1643 = vmatprep.subr.mxu0 %v570
    %1644 = vmatpush2.msra.mxu0 %v569
    %1645 = vmatprep.subr.mxu0 %v566
    %1646 = vmatpush2.msra.mxu0 %v565
    %1647 = vmatprep.subr.mxu0 %v562
    %1648 = vmatpush2.msra.mxu0 %v561
    %1649 = vmatprep.subr.mxu0 %v558
    %1650 = vmatpush2.msra.mxu0 %v557
    %1651 = vmatprep.subr.mxu0 %v554
    %1652 = vmatpush2.msra.mxu0 %v553
    %1653 = vmatprep.subr.mxu0 %v550
    %1654 = vmatpush2.msra.mxu0 %v549
    %1655 = vmatprep.subr.mxu0 %v546
    %1656 = vmatpush2.msra.mxu0 %v545
    %1657 = vmatprep.subr.mxu0 %v542
    %1658 = vmatpush2.msra.mxu0 %v541
    %1659 = vmatprep.subr.mxu0 %v538
    %1660 = vmatpush2.msra.mxu0 %v537
    %1661 = vmatprep.subr.mxu0 %v534
    %1662 = vmatpush2.msra.mxu0 %v533
    %1663 = vmatprep.subr.mxu0 %v530
    %1664 = vmatpush2.msra.mxu0 %v529
    %1665 = vmatprep.subr.mxu0 %v526
    %1666 = vmatpush2.msra.mxu0 %v525
    %1667 = vmatprep.subr.mxu0 %v522
    %1668 = vmatpush2.msra.mxu0 %v521
    %1669 = vmatprep.subr.mxu0 %v518
    %1670 = vmatpush2.msra.mxu0 %v517
    %1671 = vmatprep.mubr.f32.mxu0 %v1584
    %1672 = vmatmul.mubr.f32.gmra.mxu0 %v1606
    %v1673 = vpop.f32.mrf.mxu0
    %v1674 = vadd.f32 0.0, %v1673
    %v1675 = vpop.f32.mrf.mxu0
    %v1676 = vadd.f32 0.0, %v1675
    %1677 = vdwg.mxu0
    %1678 = vmatprep.subr.mxu0 %v516
    %1679 = vmatpush1.msra.mxu0 %v515
    %1680 = vmatprep.subr.mxu0 %v512
    %1681 = vmatpush1.msra.mxu0 %v511
    %1682 = vmatprep.subr.mxu0 %v508
    %1683 = vmatpush1.msra.mxu0 %v507
    %1684 = vmatprep.subr.mxu0 %v504
    %1685 = vmatpush1.msra.mxu0 %v503
    %1686 = vmatprep.subr.mxu0 %v500
    %1687 = vmatpush1.msra.mxu0 %v499
    %1688 = vmatprep.subr.mxu0 %v496
    %1689 = vmatpush1.msra.mxu0 %v495
    %1690 = vmatprep.subr.mxu0 %v492
    %1691 = vmatpush1.msra.mxu0 %v491
    %1692 = vmatprep.subr.mxu0 %v488
    %1693 = vmatpush1.msra.mxu0 %v487
    %1694 = vmatprep.subr.mxu0 %v484
    %1695 = vmatpush1.msra.mxu0 %v483
    %1696 = vmatprep.subr.mxu0 %v480
    %1697 = vmatpush1.msra.mxu0 %v479
    %1698 = vmatprep.subr.mxu0 %v476
    %1699 = vmatpush1.msra.mxu0 %v475
    %1700 = vmatprep.subr.mxu0 %v472
    %1701 = vmatpush1.msra.mxu0 %v471
    %1702 = vmatprep.subr.mxu0 %v468
    %1703 = vmatpush1.msra.mxu0 %v467
    %1704 = vmatprep.subr.mxu0 %v464
    %1705 = vmatpush1.msra.mxu0 %v463
    %1706 = vmatprep.subr.mxu0 %v460
    %1707 = vmatpush1.msra.mxu0 %v459
    %1708 = vmatprep.subr.mxu0 %v456
    %1709 = vmatpush1.msra.mxu0 %v455
    %1710 = vmatprep.subr.mxu0 %v580
    %1711 = vmatpush2.msra.mxu0 %v579
    %1712 = vmatprep.subr.mxu0 %v576
    %1713 = vmatpush2.msra.mxu0 %v575
    %1714 = vmatprep.subr.mxu0 %v572
    %1715 = vmatpush2.msra.mxu0 %v571
    %1716 = vmatprep.subr.mxu0 %v568
    %1717 = vmatpush2.msra.mxu0 %v567
    %1718 = vmatprep.subr.mxu0 %v564
    %1719 = vmatpush2.msra.mxu0 %v563
    %1720 = vmatprep.subr.mxu0 %v560
    %1721 = vmatpush2.msra.mxu0 %v559
    %1722 = vmatprep.subr.mxu0 %v556
    %1723 = vmatpush2.msra.mxu0 %v555
    %1724 = vmatprep.subr.mxu0 %v552
    %1725 = vmatpush2.msra.mxu0 %v551
    %1726 = vmatprep.subr.mxu0 %v548
    %1727 = vmatpush2.msra.mxu0 %v547
    %1728 = vmatprep.subr.mxu0 %v544
    %1729 = vmatpush2.msra.mxu0 %v543
    %1730 = vmatprep.subr.mxu0 %v540
    %1731 = vmatpush2.msra.mxu0 %v539
    %1732 = vmatprep.subr.mxu0 %v536
    %1733 = vmatpush2.msra.mxu0 %v535
    %1734 = vmatprep.subr.mxu0 %v532
    %1735 = vmatpush2.msra.mxu0 %v531
    %1736 = vmatprep.subr.mxu0 %v528
    %1737 = vmatpush2.msra.mxu0 %v527
    %1738 = vmatprep.subr.mxu0 %v524
    %1739 = vmatpush2.msra.mxu0 %v523
    %1740 = vmatprep.subr.mxu0 %v520
    %1741 = vmatpush2.msra.mxu0 %v519
    %1742 = vmatprep.mubr.f32.mxu0 %v1584
    %1743 = vmatmul.mubr.f32.gmra.mxu0 %v1606
    %v1744 = vpop.f32.mrf.mxu0
    %v1745 = vadd.f32 0.0, %v1744
    %v1746 = vpop.f32.mrf.mxu0
    %v1747 = vadd.f32 0.0, %v1746
    %1748 = vdwg.mxu0
    %1749 = vmatprep.subr.mxu0 %v451
    %1750 = vmatpush1.msra.mxu0 %v450
    %1751 = vmatprep.subr.mxu0 %v448
    %1752 = vmatpush1.msra.mxu0 %v447
    %1753 = vmatprep.subr.mxu0 %v445
    %1754 = vmatpush1.msra.mxu0 %v444
    %1755 = vmatprep.subr.mxu0 %v442
    %1756 = vmatpush1.msra.mxu0 %v441
    %1757 = vmatprep.subr.mxu0 %v439
    %1758 = vmatpush1.msra.mxu0 %v438
    %1759 = vmatprep.subr.mxu0 %v436
    %1760 = vmatpush1.msra.mxu0 %v435
    %1761 = vmatprep.subr.mxu0 %v433
    %1762 = vmatpush1.msra.mxu0 %v432
    %1763 = vmatprep.subr.mxu0 %v430
    %1764 = vmatpush1.msra.mxu0 %v429
    %1765 = vmatprep.subr.mxu0 %v427
    %1766 = vmatpush1.msra.mxu0 %v426
    %1767 = vmatprep.subr.mxu0 %v424
    %1768 = vmatpush1.msra.mxu0 %v423
    %1769 = vmatprep.subr.mxu0 %v421
    %1770 = vmatpush1.msra.mxu0 %v420
    %1771 = vmatprep.subr.mxu0 %v418
    %1772 = vmatpush1.msra.mxu0 %v417
    %1773 = vmatprep.subr.mxu0 %v415
    %1774 = vmatpush1.msra.mxu0 %v414
    %1775 = vmatprep.subr.mxu0 %v412
    %1776 = vmatpush1.msra.mxu0 %v411
    %1777 = vmatprep.subr.mxu0 %v409
    %1778 = vmatpush1.msra.mxu0 %v408
    %1779 = vmatprep.subr.mxu0 %v406
    %1780 = vmatpush1.msra.mxu0 %v405
    %1781 = vmatprep.subr.mxu0 0.0
    %1782 = vmatpush2.msra.mxu0 0.0
    %1783 = vmatprep.subr.mxu0 0.0
    %1784 = vmatpush2.msra.mxu0 0.0
    %1785 = vmatprep.subr.mxu0 0.0
    %1786 = vmatpush2.msra.mxu0 0.0
    %1787 = vmatprep.subr.mxu0 0.0
    %1788 = vmatpush2.msra.mxu0 0.0
    %1789 = vmatprep.subr.mxu0 0.0
    %1790 = vmatpush2.msra.mxu0 0.0
    %1791 = vmatprep.subr.mxu0 0.0
    %1792 = vmatpush2.msra.mxu0 0.0
    %1793 = vmatprep.subr.mxu0 0.0
    %1794 = vmatpush2.msra.mxu0 0.0
    %1795 = vmatprep.subr.mxu0 0.0
    %1796 = vmatpush2.msra.mxu0 0.0
    %1797 = vmatprep.subr.mxu0 0.0
    %1798 = vmatpush2.msra.mxu0 0.0
    %1799 = vmatprep.subr.mxu0 0.0
    %1800 = vmatpush2.msra.mxu0 0.0
    %1801 = vmatprep.subr.mxu0 0.0
    %1802 = vmatpush2.msra.mxu0 0.0
    %1803 = vmatprep.subr.mxu0 0.0
    %1804 = vmatpush2.msra.mxu0 0.0
    %1805 = vmatprep.subr.mxu0 0.0
    %1806 = vmatpush2.msra.mxu0 0.0
    %1807 = vmatprep.subr.mxu0 0.0
    %1808 = vmatpush2.msra.mxu0 0.0
    %1809 = vmatprep.subr.mxu0 0.0
    %1810 = vmatpush2.msra.mxu0 0.0
    %1811 = vmatprep.subr.mxu0 0.0
    %1812 = vmatpush2.msra.mxu0 0.0
    %1813 = vmatprep.mubr.f32.mxu0 0.0
    %1814 = vmatmul.mubr.f32.gmra.mxu0 %v1606
    %v1815 = vpop.f32.mrf.mxu0
    %v1816 = vadd.f32 0.0, %v1815
    %v1817 = vpop.f32.mrf.mxu0
    %v1818 = vadd.f32 0.0, %v1817
    %1819 = vdwg.mxu0
    %1820 = vmatprep.subr.mxu0 0.0
    %1821 = vmatpush1.msra.mxu0 %v452
    %1822 = vmatprep.subr.mxu0 0.0
    %1823 = vmatpush1.msra.mxu0 %v449
    %1824 = vmatprep.subr.mxu0 0.0
    %1825 = vmatpush1.msra.mxu0 %v446
    %1826 = vmatprep.subr.mxu0 0.0
    %1827 = vmatpush1.msra.mxu0 %v443
    %1828 = vmatprep.subr.mxu0 0.0
    %1829 = vmatpush1.msra.mxu0 %v440
    %1830 = vmatprep.subr.mxu0 0.0
    %1831 = vmatpush1.msra.mxu0 %v437
    %1832 = vmatprep.subr.mxu0 0.0
    %1833 = vmatpush1.msra.mxu0 %v434
    %1834 = vmatprep.subr.mxu0 0.0
    %1835 = vmatpush1.msra.mxu0 %v431
    %1836 = vmatprep.subr.mxu0 0.0
    %1837 = vmatpush1.msra.mxu0 %v428
    %1838 = vmatprep.subr.mxu0 0.0
    %1839 = vmatpush1.msra.mxu0 %v425
    %1840 = vmatprep.subr.mxu0 0.0
    %1841 = vmatpush1.msra.mxu0 %v422
    %1842 = vmatprep.subr.mxu0 0.0
    %1843 = vmatpush1.msra.mxu0 %v419
    %1844 = vmatprep.subr.mxu0 0.0
    %1845 = vmatpush1.msra.mxu0 %v416
    %1846 = vmatprep.subr.mxu0 0.0
    %1847 = vmatpush1.msra.mxu0 %v413
    %1848 = vmatprep.subr.mxu0 0.0
    %1849 = vmatpush1.msra.mxu0 %v410
    %1850 = vmatprep.subr.mxu0 0.0
    %1851 = vmatpush1.msra.mxu0 %v407
    %1852 = vmatprep.subr.mxu0 0.0
    %1853 = vmatpush2.msra.mxu0 0.0
    %1854 = vmatprep.subr.mxu0 0.0
    %1855 = vmatpush2.msra.mxu0 0.0
    %1856 = vmatprep.subr.mxu0 0.0
    %1857 = vmatpush2.msra.mxu0 0.0
    %1858 = vmatprep.subr.mxu0 0.0
    %1859 = vmatpush2.msra.mxu0 0.0
    %1860 = vmatprep.subr.mxu0 0.0
    %1861 = vmatpush2.msra.mxu0 0.0
    %1862 = vmatprep.subr.mxu0 0.0
    %1863 = vmatpush2.msra.mxu0 0.0
    %1864 = vmatprep.subr.mxu0 0.0
    %1865 = vmatpush2.msra.mxu0 0.0
    %1866 = vmatprep.subr.mxu0 0.0
    %1867 = vmatpush2.msra.mxu0 0.0
    %1868 = vmatprep.subr.mxu0 0.0
    %1869 = vmatpush2.msra.mxu0 0.0
    %1870 = vmatprep.subr.mxu0 0.0
    %1871 = vmatpush2.msra.mxu0 0.0
    %1872 = vmatprep.subr.mxu0 0.0
    %1873 = vmatpush2.msra.mxu0 0.0
    %1874 = vmatprep.subr.mxu0 0.0
    %1875 = vmatpush2.msra.mxu0 0.0
    %1876 = vmatprep.subr.mxu0 0.0
    %1877 = vmatpush2.msra.mxu0 0.0
    %1878 = vmatprep.subr.mxu0 0.0
    %1879 = vmatpush2.msra.mxu0 0.0
    %1880 = vmatprep.subr.mxu0 0.0
    %1881 = vmatpush2.msra.mxu0 0.0
    %1882 = vmatprep.subr.mxu0 0.0
    %1883 = vmatpush2.msra.mxu0 0.0
    %1884 = vmatprep.mubr.f32.mxu0 0.0
    %1885 = vmatmul.mubr.f32.gmra.mxu0 %v1606
    %v1886 = vpop.f32.mrf.mxu0
    %v1887 = vadd.f32 0.0, %v1886
    %v1888 = vpop.f32.mrf.mxu0
    %1889 = vdwg.mxu0
    %v1890 = vadd.f32 %v1674, %v899
    %v1891 = vadd.f32 %v1676, %v903
    %v1892 = vmul.f32 %v1890, 0.5
    %v1893 = vmul.f32 %v1891, 0.5
    %v1894 = vtanh.pop %v1892
    %v1895 = vtanh.pop %v1893
    %v1896 = vmul.f32 %v1894, 0.5
    %v1897 = vmul.f32 %v1895, 0.5
    %v1898 = vadd.f32 %v1896, 0.5
    %v1899 = vadd.f32 %v1897, 0.5
    %v1900 = vadd.f32 %v1745, %v920
    %v1901 = vadd.f32 %v1747, %v927
    %v1902 = vmul.f32 %v1898, %v1901
    %v1903 = vadd.f32 %v1900, %v1902
    %v1904 = vtanh.pop %v1903
    %v1905 = vsub.f32 1.0, %v1899
    %v1906 = vmul.f32 %v1905, %v1904
    %v1907 = vmul.f32 %v1899, %v1584
    %v1908 = vadd.f32 %v1906, %v1907
    %s1909 = scalar_lea.vmem [#allocation2], 96
    %v1910 = vld [vmem:[%s1909] sm:$0xff]
    %v1911 = vld [vmem:[%s1909 + $0x8] sm:$0xff]
    %v1912 = vld [vmem:[%s1909 + $0x10] sm:$0xff]
    %v1913 = vadd.f32 %v1910, %v1816
    %v1914 = vadd.f32 %v1911, %v1818
    %v1915 = vmul.f32 %v1913, 0.5
    %v1916 = vmul.f32 %v1914, 0.5
    %v1917 = vtanh.pop %v1915
    %v1918 = vtanh.pop %v1916
    %v1919 = vmul.f32 %v1917, 0.5
    %v1920 = vmul.f32 %v1918, 0.5
    %v1921 = vadd.f32 %v1919, 0.5
    %v1922 = vadd.f32 %v1920, 0.5
    %v1923 = vadd.f32 %v1887, %v602
    %v1924 = vmul.f32 %v1921, %v1923
    %v1925 = vadd.f32 %v1912, %v1924
    %v1926 = vtanh.pop %v1925
    %v1927 = vsub.f32 1.0, %v1922
    %v1928 = vmul.f32 %v1927, %v1926
    %v1929 = vmul.f32 %v1922, %v1606
    %v1930 = vadd.f32 %v1928, %v1929
    %1931 = vmatprep.subr.mxu0 %v514
    %1932 = vmatpush1.msra.mxu0 %v513
    %1933 = vmatprep.subr.mxu0 %v510
    %1934 = vmatpush1.msra.mxu0 %v509
    %1935 = vmatprep.subr.mxu0 %v506
    %1936 = vmatpush1.msra.mxu0 %v505
    %1937 = vmatprep.subr.mxu0 %v502
    %1938 = vmatpush1.msra.mxu0 %v501
    %1939 = vmatprep.subr.mxu0 %v498
    %1940 = vmatpush1.msra.mxu0 %v497
    %1941 = vmatprep.subr.mxu0 %v494
    %1942 = vmatpush1.msra.mxu0 %v493
    %1943 = vmatprep.subr.mxu0 %v490
    %1944 = vmatpush1.msra.mxu0 %v489
    %1945 = vmatprep.subr.mxu0 %v486
    %1946 = vmatpush1.msra.mxu0 %v485
    %1947 = vmatprep.subr.mxu0 %v482
    %1948 = vmatpush1.msra.mxu0 %v481
    %1949 = vmatprep.subr.mxu0 %v478
    %1950 = vmatpush1.msra.mxu0 %v477
    %1951 = vmatprep.subr.mxu0 %v474
    %1952 = vmatpush1.msra.mxu0 %v473
    %1953 = vmatprep.subr.mxu0 %v470
    %1954 = vmatpush1.msra.mxu0 %v469
    %1955 = vmatprep.subr.mxu0 %v466
    %1956 = vmatpush1.msra.mxu0 %v465
    %1957 = vmatprep.subr.mxu0 %v462
    %1958 = vmatpush1.msra.mxu0 %v461
    %1959 = vmatprep.subr.mxu0 %v458
    %1960 = vmatpush1.msra.mxu0 %v457
    %1961 = vmatprep.subr.mxu0 %v454
    %1962 = vmatpush1.msra.mxu0 %v453
    %1963 = vmatprep.subr.mxu0 %v578
    %1964 = vmatpush2.msra.mxu0 %v577
    %1965 = vmatprep.subr.mxu0 %v574
    %1966 = vmatpush2.msra.mxu0 %v573
    %1967 = vmatprep.subr.mxu0 %v570
    %1968 = vmatpush2.msra.mxu0 %v569
    %1969 = vmatprep.subr.mxu0 %v566
    %1970 = vmatpush2.msra.mxu0 %v565
    %1971 = vmatprep.subr.mxu0 %v562
    %1972 = vmatpush2.msra.mxu0 %v561
    %1973 = vmatprep.subr.mxu0 %v558
    %1974 = vmatpush2.msra.mxu0 %v557
    %1975 = vmatprep.subr.mxu0 %v554
    %1976 = vmatpush2.msra.mxu0 %v553
    %1977 = vmatprep.subr.mxu0 %v550
    %1978 = vmatpush2.msra.mxu0 %v549
    %1979 = vmatprep.subr.mxu0 %v546
    %1980 = vmatpush2.msra.mxu0 %v545
    %1981 = vmatprep.subr.mxu0 %v542
    %1982 = vmatpush2.msra.mxu0 %v541
    %1983 = vmatprep.subr.mxu0 %v538
    %1984 = vmatpush2.msra.mxu0 %v537
    %1985 = vmatprep.subr.mxu0 %v534
    %1986 = vmatpush2.msra.mxu0 %v533
    %1987 = vmatprep.subr.mxu0 %v530
    %1988 = vmatpush2.msra.mxu0 %v529
    %1989 = vmatprep.subr.mxu0 %v526
    %1990 = vmatpush2.msra.mxu0 %v525
    %1991 = vmatprep.subr.mxu0 %v522
    %1992 = vmatpush2.msra.mxu0 %v521
    %1993 = vmatprep.subr.mxu0 %v518
    %1994 = vmatpush2.msra.mxu0 %v517
    %1995 = vmatprep.mubr.f32.mxu0 %v1908
    %1996 = vmatmul.mubr.f32.gmra.mxu0 %v1930
    %v1997 = vpop.f32.mrf.mxu0
    %v1998 = vadd.f32 0.0, %v1997
    %v1999 = vpop.f32.mrf.mxu0
    %v2000 = vadd.f32 0.0, %v1999
    %2001 = vdwg.mxu0
    %2002 = vmatprep.subr.mxu0 %v516
    %2003 = vmatpush1.msra.mxu0 %v515
    %2004 = vmatprep.subr.mxu0 %v512
    %2005 = vmatpush1.msra.mxu0 %v511
    %2006 = vmatprep.subr.mxu0 %v508
    %2007 = vmatpush1.msra.mxu0 %v507
    %2008 = vmatprep.subr.mxu0 %v504
    %2009 = vmatpush1.msra.mxu0 %v503
    %2010 = vmatprep.subr.mxu0 %v500
    %2011 = vmatpush1.msra.mxu0 %v499
    %2012 = vmatprep.subr.mxu0 %v496
    %2013 = vmatpush1.msra.mxu0 %v495
    %2014 = vmatprep.subr.mxu0 %v492
    %2015 = vmatpush1.msra.mxu0 %v491
    %2016 = vmatprep.subr.mxu0 %v488
    %2017 = vmatpush1.msra.mxu0 %v487
    %2018 = vmatprep.subr.mxu0 %v484
    %2019 = vmatpush1.msra.mxu0 %v483
    %2020 = vmatprep.subr.mxu0 %v480
    %2021 = vmatpush1.msra.mxu0 %v479
    %2022 = vmatprep.subr.mxu0 %v476
    %2023 = vmatpush1.msra.mxu0 %v475
    %2024 = vmatprep.subr.mxu0 %v472
    %2025 = vmatpush1.msra.mxu0 %v471
    %2026 = vmatprep.subr.mxu0 %v468
    %2027 = vmatpush1.msra.mxu0 %v467
    %2028 = vmatprep.subr.mxu0 %v464
    %2029 = vmatpush1.msra.mxu0 %v463
    %2030 = vmatprep.subr.mxu0 %v460
    %2031 = vmatpush1.msra.mxu0 %v459
    %2032 = vmatprep.subr.mxu0 %v456
    %2033 = vmatpush1.msra.mxu0 %v455
    %2034 = vmatprep.subr.mxu0 %v580
    %2035 = vmatpush2.msra.mxu0 %v579
    %2036 = vmatprep.subr.mxu0 %v576
    %2037 = vmatpush2.msra.mxu0 %v575
    %2038 = vmatprep.subr.mxu0 %v572
    %2039 = vmatpush2.msra.mxu0 %v571
    %2040 = vmatprep.subr.mxu0 %v568
    %2041 = vmatpush2.msra.mxu0 %v567
    %2042 = vmatprep.subr.mxu0 %v564
    %2043 = vmatpush2.msra.mxu0 %v563
    %2044 = vmatprep.subr.mxu0 %v560
    %2045 = vmatpush2.msra.mxu0 %v559
    %2046 = vmatprep.subr.mxu0 %v556
    %2047 = vmatpush2.msra.mxu0 %v555
    %2048 = vmatprep.subr.mxu0 %v552
    %2049 = vmatpush2.msra.mxu0 %v551
    %2050 = vmatprep.subr.mxu0 %v548
    %2051 = vmatpush2.msra.mxu0 %v547
    %2052 = vmatprep.subr.mxu0 %v544
    %2053 = vmatpush2.msra.mxu0 %v543
    %2054 = vmatprep.subr.mxu0 %v540
    %2055 = vmatpush2.msra.mxu0 %v539
    %2056 = vmatprep.subr.mxu0 %v536
    %2057 = vmatpush2.msra.mxu0 %v535
    %2058 = vmatprep.subr.mxu0 %v532
    %2059 = vmatpush2.msra.mxu0 %v531
    %2060 = vmatprep.subr.mxu0 %v528
    %2061 = vmatpush2.msra.mxu0 %v527
    %2062 = vmatprep.subr.mxu0 %v524
    %2063 = vmatpush2.msra.mxu0 %v523
    %2064 = vmatprep.subr.mxu0 %v520
    %2065 = vmatpush2.msra.mxu0 %v519
    %2066 = vmatprep.mubr.f32.mxu0 %v1908
    %2067 = vmatmul.mubr.f32.gmra.mxu0 %v1930
    %v2068 = vpop.f32.mrf.mxu0
    %v2069 = vadd.f32 0.0, %v2068
    %v2070 = vpop.f32.mrf.mxu0
    %v2071 = vadd.f32 0.0, %v2070
    %2072 = vdwg.mxu0
    %2073 = vmatprep.subr.mxu0 %v451
    %2074 = vmatpush1.msra.mxu0 %v450
    %2075 = vmatprep.subr.mxu0 %v448
    %2076 = vmatpush1.msra.mxu0 %v447
    %2077 = vmatprep.subr.mxu0 %v445
    %2078 = vmatpush1.msra.mxu0 %v444
    %2079 = vmatprep.subr.mxu0 %v442
    %2080 = vmatpush1.msra.mxu0 %v441
    %2081 = vmatprep.subr.mxu0 %v439
    %2082 = vmatpush1.msra.mxu0 %v438
    %2083 = vmatprep.subr.mxu0 %v436
    %2084 = vmatpush1.msra.mxu0 %v435
    %2085 = vmatprep.subr.mxu0 %v433
    %2086 = vmatpush1.msra.mxu0 %v432
    %2087 = vmatprep.subr.mxu0 %v430
    %2088 = vmatpush1.msra.mxu0 %v429
    %2089 = vmatprep.subr.mxu0 %v427
    %2090 = vmatpush1.msra.mxu0 %v426
    %2091 = vmatprep.subr.mxu0 %v424
    %2092 = vmatpush1.msra.mxu0 %v423
    %2093 = vmatprep.subr.mxu0 %v421
    %2094 = vmatpush1.msra.mxu0 %v420
    %2095 = vmatprep.subr.mxu0 %v418
    %2096 = vmatpush1.msra.mxu0 %v417
    %2097 = vmatprep.subr.mxu0 %v415
    %2098 = vmatpush1.msra.mxu0 %v414
    %2099 = vmatprep.subr.mxu0 %v412
    %2100 = vmatpush1.msra.mxu0 %v411
    %2101 = vmatprep.subr.mxu0 %v409
    %2102 = vmatpush1.msra.mxu0 %v408
    %2103 = vmatprep.subr.mxu0 %v406
    %2104 = vmatpush1.msra.mxu0 %v405
    %2105 = vmatprep.subr.mxu0 0.0
    %2106 = vmatpush2.msra.mxu0 0.0
    %2107 = vmatprep.subr.mxu0 0.0
    %2108 = vmatpush2.msra.mxu0 0.0
    %2109 = vmatprep.subr.mxu0 0.0
    %2110 = vmatpush2.msra.mxu0 0.0
    %2111 = vmatprep.subr.mxu0 0.0
    %2112 = vmatpush2.msra.mxu0 0.0
    %2113 = vmatprep.subr.mxu0 0.0
    %2114 = vmatpush2.msra.mxu0 0.0
    %2115 = vmatprep.subr.mxu0 0.0
    %2116 = vmatpush2.msra.mxu0 0.0
    %2117 = vmatprep.subr.mxu0 0.0
    %2118 = vmatpush2.msra.mxu0 0.0
    %2119 = vmatprep.subr.mxu0 0.0
    %2120 = vmatpush2.msra.mxu0 0.0
    %2121 = vmatprep.subr.mxu0 0.0
    %2122 = vmatpush2.msra.mxu0 0.0
    %2123 = vmatprep.subr.mxu0 0.0
    %2124 = vmatpush2.msra.mxu0 0.0
    %2125 = vmatprep.subr.mxu0 0.0
    %2126 = vmatpush2.msra.mxu0 0.0
    %2127 = vmatprep.subr.mxu0 0.0
    %2128 = vmatpush2.msra.mxu0 0.0
    %2129 = vmatprep.subr.mxu0 0.0
    %2130 = vmatpush2.msra.mxu0 0.0
    %2131 = vmatprep.subr.mxu0 0.0
    %2132 = vmatpush2.msra.mxu0 0.0
    %2133 = vmatprep.subr.mxu0 0.0
    %2134 = vmatpush2.msra.mxu0 0.0
    %2135 = vmatprep.subr.mxu0 0.0
    %2136 = vmatpush2.msra.mxu0 0.0
    %2137 = vmatprep.mubr.f32.mxu0 0.0
    %2138 = vmatmul.mubr.f32.gmra.mxu0 %v1930
    %v2139 = vpop.f32.mrf.mxu0
    %v2140 = vadd.f32 0.0, %v2139
    %v2141 = vpop.f32.mrf.mxu0
    %v2142 = vadd.f32 0.0, %v2141
    %2143 = vdwg.mxu0
    %2144 = vmatprep.subr.mxu0 0.0
    %2145 = vmatpush1.msra.mxu0 %v452
    %2146 = vmatprep.subr.mxu0 0.0
    %2147 = vmatpush1.msra.mxu0 %v449
    %2148 = vmatprep.subr.mxu0 0.0
    %2149 = vmatpush1.msra.mxu0 %v446
    %2150 = vmatprep.subr.mxu0 0.0
    %2151 = vmatpush1.msra.mxu0 %v443
    %2152 = vmatprep.subr.mxu0 0.0
    %2153 = vmatpush1.msra.mxu0 %v440
    %2154 = vmatprep.subr.mxu0 0.0
    %2155 = vmatpush1.msra.mxu0 %v437
    %2156 = vmatprep.subr.mxu0 0.0
    %2157 = vmatpush1.msra.mxu0 %v434
    %2158 = vmatprep.subr.mxu0 0.0
    %2159 = vmatpush1.msra.mxu0 %v431
    %2160 = vmatprep.subr.mxu0 0.0
    %2161 = vmatpush1.msra.mxu0 %v428
    %2162 = vmatprep.subr.mxu0 0.0
    %2163 = vmatpush1.msra.mxu0 %v425
    %2164 = vmatprep.subr.mxu0 0.0
    %2165 = vmatpush1.msra.mxu0 %v422
    %2166 = vmatprep.subr.mxu0 0.0
    %2167 = vmatpush1.msra.mxu0 %v419
    %2168 = vmatprep.subr.mxu0 0.0
    %2169 = vmatpush1.msra.mxu0 %v416
    %2170 = vmatprep.subr.mxu0 0.0
    %2171 = vmatpush1.msra.mxu0 %v413
    %2172 = vmatprep.subr.mxu0 0.0
    %2173 = vmatpush1.msra.mxu0 %v410
    %2174 = vmatprep.subr.mxu0 0.0
    %2175 = vmatpush1.msra.mxu0 %v407
    %2176 = vmatprep.subr.mxu0 0.0
    %2177 = vmatpush2.msra.mxu0 0.0
    %2178 = vmatprep.subr.mxu0 0.0
    %2179 = vmatpush2.msra.mxu0 0.0
    %2180 = vmatprep.subr.mxu0 0.0
    %2181 = vmatpush2.msra.mxu0 0.0
    %2182 = vmatprep.subr.mxu0 0.0
    %2183 = vmatpush2.msra.mxu0 0.0
    %2184 = vmatprep.subr.mxu0 0.0
    %2185 = vmatpush2.msra.mxu0 0.0
    %2186 = vmatprep.subr.mxu0 0.0
    %2187 = vmatpush2.msra.mxu0 0.0
    %2188 = vmatprep.subr.mxu0 0.0
    %2189 = vmatpush2.msra.mxu0 0.0
    %2190 = vmatprep.subr.mxu0 0.0
    %2191 = vmatpush2.msra.mxu0 0.0
    %2192 = vmatprep.subr.mxu0 0.0
    %2193 = vmatpush2.msra.mxu0 0.0
    %2194 = vmatprep.subr.mxu0 0.0
    %2195 = vmatpush2.msra.mxu0 0.0
    %2196 = vmatprep.subr.mxu0 0.0
    %2197 = vmatpush2.msra.mxu0 0.0
    %2198 = vmatprep.subr.mxu0 0.0
    %2199 = vmatpush2.msra.mxu0 0.0
    %2200 = vmatprep.subr.mxu0 0.0
    %2201 = vmatpush2.msra.mxu0 0.0
    %2202 = vmatprep.subr.mxu0 0.0
    %2203 = vmatpush2.msra.mxu0 0.0
    %2204 = vmatprep.subr.mxu0 0.0
    %2205 = vmatpush2.msra.mxu0 0.0
    %2206 = vmatprep.subr.mxu0 0.0
    %2207 = vmatpush2.msra.mxu0 0.0
    %2208 = vmatprep.mubr.f32.mxu0 0.0
    %2209 = vmatmul.mubr.f32.gmra.mxu0 %v1930
    %v2210 = vpop.f32.mrf.mxu0
    %v2211 = vadd.f32 0.0, %v2210
    %v2212 = vpop.f32.mrf.mxu0
    %2213 = vdwg.mxu0
    %v2214 = vadd.f32 %v1998, %v899
    %v2215 = vadd.f32 %v2000, %v903
    %v2216 = vmul.f32 %v2214, 0.5
    %v2217 = vmul.f32 %v2215, 0.5
    %v2218 = vtanh.pop %v2216
    %v2219 = vtanh.pop %v2217
    %v2220 = vmul.f32 %v2218, 0.5
    %v2221 = vmul.f32 %v2219, 0.5
    %v2222 = vadd.f32 %v2220, 0.5
    %v2223 = vadd.f32 %v2221, 0.5
    %v2224 = vadd.f32 %v2069, %v920
    %v2225 = vadd.f32 %v2071, %v927
    %v2226 = vmul.f32 %v2222, %v2225
    %v2227 = vadd.f32 %v2224, %v2226
    %v2228 = vtanh.pop %v2227
    %v2229 = vsub.f32 1.0, %v2223
    %v2230 = vmul.f32 %v2229, %v2228
    %v2231 = vmul.f32 %v2223, %v1908
    %v2232 = vadd.f32 %v2230, %v2231
    %s2233 = scalar_lea.vmem [#allocation2], 120
    %v2234 = vld [vmem:[%s2233] sm:$0xff]
    %v2235 = vld [vmem:[%s2233 + $0x8] sm:$0xff]
    %v2236 = vld [vmem:[%s2233 + $0x10] sm:$0xff]
    %v2237 = vadd.f32 %v2234, %v2140
    %v2238 = vadd.f32 %v2235, %v2142
    %v2239 = vmul.f32 %v2237, 0.5
    %v2240 = vmul.f32 %v2238, 0.5
    %v2241 = vtanh.pop %v2239
    %v2242 = vtanh.pop %v2240
    %v2243 = vmul.f32 %v2241, 0.5
    %v2244 = vmul.f32 %v2242, 0.5
    %v2245 = vadd.f32 %v2243, 0.5
    %v2246 = vadd.f32 %v2244, 0.5
    %v2247 = vadd.f32 %v2211, %v602
    %v2248 = vmul.f32 %v2245, %v2247
    %v2249 = vadd.f32 %v2236, %v2248
    %v2250 = vtanh.pop %v2249
    %v2251 = vsub.f32 1.0, %v2246
    %v2252 = vmul.f32 %v2251, %v2250
    %v2253 = vmul.f32 %v2246, %v1930
    %v2254 = vadd.f32 %v2252, %v2253
    %2255 = vmatprep.subr.mxu0 %v514
    %2256 = vmatpush1.msra.mxu0 %v513
    %2257 = vmatprep.subr.mxu0 %v510
    %2258 = vmatpush1.msra.mxu0 %v509
    %2259 = vmatprep.subr.mxu0 %v506
    %2260 = vmatpush1.msra.mxu0 %v505
    %2261 = vmatprep.subr.mxu0 %v502
    %2262 = vmatpush1.msra.mxu0 %v501
    %2263 = vmatprep.subr.mxu0 %v498
    %2264 = vmatpush1.msra.mxu0 %v497
    %2265 = vmatprep.subr.mxu0 %v494
    %2266 = vmatpush1.msra.mxu0 %v493
    %2267 = vmatprep.subr.mxu0 %v490
    %2268 = vmatpush1.msra.mxu0 %v489
    %2269 = vmatprep.subr.mxu0 %v486
    %2270 = vmatpush1.msra.mxu0 %v485
    %2271 = vmatprep.subr.mxu0 %v482
    %2272 = vmatpush1.msra.mxu0 %v481
    %2273 = vmatprep.subr.mxu0 %v478
    %2274 = vmatpush1.msra.mxu0 %v477
    %2275 = vmatprep.subr.mxu0 %v474
    %2276 = vmatpush1.msra.mxu0 %v473
    %2277 = vmatprep.subr.mxu0 %v470
    %2278 = vmatpush1.msra.mxu0 %v469
    %2279 = vmatprep.subr.mxu0 %v466
    %2280 = vmatpush1.msra.mxu0 %v465
    %2281 = vmatprep.subr.mxu0 %v462
    %2282 = vmatpush1.msra.mxu0 %v461
    %2283 = vmatprep.subr.mxu0 %v458
    %2284 = vmatpush1.msra.mxu0 %v457
    %2285 = vmatprep.subr.mxu0 %v454
    %2286 = vmatpush1.msra.mxu0 %v453
    %2287 = vmatprep.subr.mxu0 %v578
    %2288 = vmatpush2.msra.mxu0 %v577
    %2289 = vmatprep.subr.mxu0 %v574
    %2290 = vmatpush2.msra.mxu0 %v573
    %2291 = vmatprep.subr.mxu0 %v570
    %2292 = vmatpush2.msra.mxu0 %v569
    %2293 = vmatprep.subr.mxu0 %v566
    %2294 = vmatpush2.msra.mxu0 %v565
    %2295 = vmatprep.subr.mxu0 %v562
    %2296 = vmatpush2.msra.mxu0 %v561
    %2297 = vmatprep.subr.mxu0 %v558
    %2298 = vmatpush2.msra.mxu0 %v557
    %2299 = vmatprep.subr.mxu0 %v554
    %2300 = vmatpush2.msra.mxu0 %v553
    %2301 = vmatprep.subr.mxu0 %v550
    %2302 = vmatpush2.msra.mxu0 %v549
    %2303 = vmatprep.subr.mxu0 %v546
    %2304 = vmatpush2.msra.mxu0 %v545
    %2305 = vmatprep.subr.mxu0 %v542
    %2306 = vmatpush2.msra.mxu0 %v541
    %2307 = vmatprep.subr.mxu0 %v538
    %2308 = vmatpush2.msra.mxu0 %v537
    %2309 = vmatprep.subr.mxu0 %v534
    %2310 = vmatpush2.msra.mxu0 %v533
    %2311 = vmatprep.subr.mxu0 %v530
    %2312 = vmatpush2.msra.mxu0 %v529
    %2313 = vmatprep.subr.mxu0 %v526
    %2314 = vmatpush2.msra.mxu0 %v525
    %2315 = vmatprep.subr.mxu0 %v522
    %2316 = vmatpush2.msra.mxu0 %v521
    %2317 = vmatprep.subr.mxu0 %v518
    %2318 = vmatpush2.msra.mxu0 %v517
    %2319 = vmatprep.mubr.f32.mxu0 %v2232
    %2320 = vmatmul.mubr.f32.gmra.mxu0 %v2254
    %v2321 = vpop.f32.mrf.mxu0
    %v2322 = vadd.f32 0.0, %v2321
    %v2323 = vpop.f32.mrf.mxu0
    %v2324 = vadd.f32 0.0, %v2323
    %2325 = vdwg.mxu0
    %2326 = vmatprep.subr.mxu0 %v516
    %2327 = vmatpush1.msra.mxu0 %v515
    %2328 = vmatprep.subr.mxu0 %v512
    %2329 = vmatpush1.msra.mxu0 %v511
    %2330 = vmatprep.subr.mxu0 %v508
    %2331 = vmatpush1.msra.mxu0 %v507
    %2332 = vmatprep.subr.mxu0 %v504
    %2333 = vmatpush1.msra.mxu0 %v503
    %2334 = vmatprep.subr.mxu0 %v500
    %2335 = vmatpush1.msra.mxu0 %v499
    %2336 = vmatprep.subr.mxu0 %v496
    %2337 = vmatpush1.msra.mxu0 %v495
    %2338 = vmatprep.subr.mxu0 %v492
    %2339 = vmatpush1.msra.mxu0 %v491
    %2340 = vmatprep.subr.mxu0 %v488
    %2341 = vmatpush1.msra.mxu0 %v487
    %2342 = vmatprep.subr.mxu0 %v484
    %2343 = vmatpush1.msra.mxu0 %v483
    %2344 = vmatprep.subr.mxu0 %v480
    %2345 = vmatpush1.msra.mxu0 %v479
    %2346 = vmatprep.subr.mxu0 %v476
    %2347 = vmatpush1.msra.mxu0 %v475
    %2348 = vmatprep.subr.mxu0 %v472
    %2349 = vmatpush1.msra.mxu0 %v471
    %2350 = vmatprep.subr.mxu0 %v468
    %2351 = vmatpush1.msra.mxu0 %v467
    %2352 = vmatprep.subr.mxu0 %v464
    %2353 = vmatpush1.msra.mxu0 %v463
    %2354 = vmatprep.subr.mxu0 %v460
    %2355 = vmatpush1.msra.mxu0 %v459
    %2356 = vmatprep.subr.mxu0 %v456
    %2357 = vmatpush1.msra.mxu0 %v455
    %2358 = vmatprep.subr.mxu0 %v580
    %2359 = vmatpush2.msra.mxu0 %v579
    %2360 = vmatprep.subr.mxu0 %v576
    %2361 = vmatpush2.msra.mxu0 %v575
    %2362 = vmatprep.subr.mxu0 %v572
    %2363 = vmatpush2.msra.mxu0 %v571
    %2364 = vmatprep.subr.mxu0 %v568
    %2365 = vmatpush2.msra.mxu0 %v567
    %2366 = vmatprep.subr.mxu0 %v564
    %2367 = vmatpush2.msra.mxu0 %v563
    %2368 = vmatprep.subr.mxu0 %v560
    %2369 = vmatpush2.msra.mxu0 %v559
    %2370 = vmatprep.subr.mxu0 %v556
    %2371 = vmatpush2.msra.mxu0 %v555
    %2372 = vmatprep.subr.mxu0 %v552
    %2373 = vmatpush2.msra.mxu0 %v551
    %2374 = vmatprep.subr.mxu0 %v548
    %2375 = vmatpush2.msra.mxu0 %v547
    %2376 = vmatprep.subr.mxu0 %v544
    %2377 = vmatpush2.msra.mxu0 %v543
    %2378 = vmatprep.subr.mxu0 %v540
    %2379 = vmatpush2.msra.mxu0 %v539
    %2380 = vmatprep.subr.mxu0 %v536
    %2381 = vmatpush2.msra.mxu0 %v535
    %2382 = vmatprep.subr.mxu0 %v532
    %2383 = vmatpush2.msra.mxu0 %v531
    %2384 = vmatprep.subr.mxu0 %v528
    %2385 = vmatpush2.msra.mxu0 %v527
    %2386 = vmatprep.subr.mxu0 %v524
    %2387 = vmatpush2.msra.mxu0 %v523
    %2388 = vmatprep.subr.mxu0 %v520
    %2389 = vmatpush2.msra.mxu0 %v519
    %2390 = vmatprep.mubr.f32.mxu0 %v2232
    %2391 = vmatmul.mubr.f32.gmra.mxu0 %v2254
    %v2392 = vpop.f32.mrf.mxu0
    %v2393 = vadd.f32 0.0, %v2392
    %v2394 = vpop.f32.mrf.mxu0
    %v2395 = vadd.f32 0.0, %v2394
    %2396 = vdwg.mxu0
    %2397 = vmatprep.subr.mxu0 %v451
    %2398 = vmatpush1.msra.mxu0 %v450
    %2399 = vmatprep.subr.mxu0 %v448
    %2400 = vmatpush1.msra.mxu0 %v447
    %2401 = vmatprep.subr.mxu0 %v445
    %2402 = vmatpush1.msra.mxu0 %v444
    %2403 = vmatprep.subr.mxu0 %v442
    %2404 = vmatpush1.msra.mxu0 %v441
    %2405 = vmatprep.subr.mxu0 %v439
    %2406 = vmatpush1.msra.mxu0 %v438
    %2407 = vmatprep.subr.mxu0 %v436
    %2408 = vmatpush1.msra.mxu0 %v435
    %2409 = vmatprep.subr.mxu0 %v433
    %2410 = vmatpush1.msra.mxu0 %v432
    %2411 = vmatprep.subr.mxu0 %v430
    %2412 = vmatpush1.msra.mxu0 %v429
    %2413 = vmatprep.subr.mxu0 %v427
    %2414 = vmatpush1.msra.mxu0 %v426
    %2415 = vmatprep.subr.mxu0 %v424
    %2416 = vmatpush1.msra.mxu0 %v423
    %2417 = vmatprep.subr.mxu0 %v421
    %2418 = vmatpush1.msra.mxu0 %v420
    %2419 = vmatprep.subr.mxu0 %v418
    %2420 = vmatpush1.msra.mxu0 %v417
    %2421 = vmatprep.subr.mxu0 %v415
    %2422 = vmatpush1.msra.mxu0 %v414
    %2423 = vmatprep.subr.mxu0 %v412
    %2424 = vmatpush1.msra.mxu0 %v411
    %2425 = vmatprep.subr.mxu0 %v409
    %2426 = vmatpush1.msra.mxu0 %v408
    %2427 = vmatprep.subr.mxu0 %v406
    %2428 = vmatpush1.msra.mxu0 %v405
    %2429 = vmatprep.subr.mxu0 0.0
    %2430 = vmatpush2.msra.mxu0 0.0
    %2431 = vmatprep.subr.mxu0 0.0
    %2432 = vmatpush2.msra.mxu0 0.0
    %2433 = vmatprep.subr.mxu0 0.0
    %2434 = vmatpush2.msra.mxu0 0.0
    %2435 = vmatprep.subr.mxu0 0.0
    %2436 = vmatpush2.msra.mxu0 0.0
    %2437 = vmatprep.subr.mxu0 0.0
    %2438 = vmatpush2.msra.mxu0 0.0
    %2439 = vmatprep.subr.mxu0 0.0
    %2440 = vmatpush2.msra.mxu0 0.0
    %2441 = vmatprep.subr.mxu0 0.0
    %2442 = vmatpush2.msra.mxu0 0.0
    %2443 = vmatprep.subr.mxu0 0.0
    %2444 = vmatpush2.msra.mxu0 0.0
    %2445 = vmatprep.subr.mxu0 0.0
    %2446 = vmatpush2.msra.mxu0 0.0
    %2447 = vmatprep.subr.mxu0 0.0
    %2448 = vmatpush2.msra.mxu0 0.0
    %2449 = vmatprep.subr.mxu0 0.0
    %2450 = vmatpush2.msra.mxu0 0.0
    %2451 = vmatprep.subr.mxu0 0.0
    %2452 = vmatpush2.msra.mxu0 0.0
    %2453 = vmatprep.subr.mxu0 0.0
    %2454 = vmatpush2.msra.mxu0 0.0
    %2455 = vmatprep.subr.mxu0 0.0
    %2456 = vmatpush2.msra.mxu0 0.0
    %2457 = vmatprep.subr.mxu0 0.0
    %2458 = vmatpush2.msra.mxu0 0.0
    %2459 = vmatprep.subr.mxu0 0.0
    %2460 = vmatpush2.msra.mxu0 0.0
    %2461 = vmatprep.mubr.f32.mxu0 0.0
    %2462 = vmatmul.mubr.f32.gmra.mxu0 %v2254
    %v2463 = vpop.f32.mrf.mxu0
    %v2464 = vadd.f32 0.0, %v2463
    %v2465 = vpop.f32.mrf.mxu0
    %v2466 = vadd.f32 0.0, %v2465
    %2467 = vdwg.mxu0
    %2468 = vmatprep.subr.mxu0 0.0
    %2469 = vmatpush1.msra.mxu0 %v452
    %2470 = vmatprep.subr.mxu0 0.0
    %2471 = vmatpush1.msra.mxu0 %v449
    %2472 = vmatprep.subr.mxu0 0.0
    %2473 = vmatpush1.msra.mxu0 %v446
    %2474 = vmatprep.subr.mxu0 0.0
    %2475 = vmatpush1.msra.mxu0 %v443
    %2476 = vmatprep.subr.mxu0 0.0
    %2477 = vmatpush1.msra.mxu0 %v440
    %2478 = vmatprep.subr.mxu0 0.0
    %2479 = vmatpush1.msra.mxu0 %v437
    %2480 = vmatprep.subr.mxu0 0.0
    %2481 = vmatpush1.msra.mxu0 %v434
    %2482 = vmatprep.subr.mxu0 0.0
    %2483 = vmatpush1.msra.mxu0 %v431
    %2484 = vmatprep.subr.mxu0 0.0
    %2485 = vmatpush1.msra.mxu0 %v428
    %2486 = vmatprep.subr.mxu0 0.0
    %2487 = vmatpush1.msra.mxu0 %v425
    %2488 = vmatprep.subr.mxu0 0.0
    %2489 = vmatpush1.msra.mxu0 %v422
    %2490 = vmatprep.subr.mxu0 0.0
    %2491 = vmatpush1.msra.mxu0 %v419
    %2492 = vmatprep.subr.mxu0 0.0
    %2493 = vmatpush1.msra.mxu0 %v416
    %2494 = vmatprep.subr.mxu0 0.0
    %2495 = vmatpush1.msra.mxu0 %v413
    %2496 = vmatprep.subr.mxu0 0.0
    %2497 = vmatpush1.msra.mxu0 %v410
    %2498 = vmatprep.subr.mxu0 0.0
    %2499 = vmatpush1.msra.mxu0 %v407
    %2500 = vmatprep.subr.mxu0 0.0
    %2501 = vmatpush2.msra.mxu0 0.0
    %2502 = vmatprep.subr.mxu0 0.0
    %2503 = vmatpush2.msra.mxu0 0.0
    %2504 = vmatprep.subr.mxu0 0.0
    %2505 = vmatpush2.msra.mxu0 0.0
    %2506 = vmatprep.subr.mxu0 0.0
    %2507 = vmatpush2.msra.mxu0 0.0
    %2508 = vmatprep.subr.mxu0 0.0
    %2509 = vmatpush2.msra.mxu0 0.0
    %2510 = vmatprep.subr.mxu0 0.0
    %2511 = vmatpush2.msra.mxu0 0.0
    %2512 = vmatprep.subr.mxu0 0.0
    %2513 = vmatpush2.msra.mxu0 0.0
    %2514 = vmatprep.subr.mxu0 0.0
    %2515 = vmatpush2.msra.mxu0 0.0
    %2516 = vmatprep.subr.mxu0 0.0
    %2517 = vmatpush2.msra.mxu0 0.0
    %2518 = vmatprep.subr.mxu0 0.0
    %2519 = vmatpush2.msra.mxu0 0.0
    %2520 = vmatprep.subr.mxu0 0.0
    %2521 = vmatpush2.msra.mxu0 0.0
    %2522 = vmatprep.subr.mxu0 0.0
    %2523 = vmatpush2.msra.mxu0 0.0
    %2524 = vmatprep.subr.mxu0 0.0
    %2525 = vmatpush2.msra.mxu0 0.0
    %2526 = vmatprep.subr.mxu0 0.0
    %2527 = vmatpush2.msra.mxu0 0.0
    %2528 = vmatprep.subr.mxu0 0.0
    %2529 = vmatpush2.msra.mxu0 0.0
    %2530 = vmatprep.subr.mxu0 0.0
    %2531 = vmatpush2.msra.mxu0 0.0
    %2532 = vmatprep.mubr.f32.mxu0 0.0
    %2533 = vmatmul.mubr.f32.gmra.mxu0 %v2254
    %v2534 = vpop.f32.mrf.mxu0
    %v2535 = vadd.f32 0.0, %v2534
    %v2536 = vpop.f32.mrf.mxu0
    %2537 = vdwg.mxu0
    %v2538 = vadd.f32 %v2322, %v899
    %v2539 = vadd.f32 %v2324, %v903
    %v2540 = vmul.f32 %v2538, 0.5
    %v2541 = vmul.f32 %v2539, 0.5
    %v2542 = vtanh.pop %v2540
    %v2543 = vtanh.pop %v2541
    %v2544 = vmul.f32 %v2542, 0.5
    %v2545 = vmul.f32 %v2543, 0.5
    %v2546 = vadd.f32 %v2544, 0.5
    %v2547 = vadd.f32 %v2545, 0.5
    %v2548 = vadd.f32 %v2393, %v920
    %v2549 = vadd.f32 %v2395, %v927
    %v2550 = vmul.f32 %v2546, %v2549
    %v2551 = vadd.f32 %v2548, %v2550
    %v2552 = vtanh.pop %v2551
    %v2553 = vsub.f32 1.0, %v2547
    %v2554 = vmul.f32 %v2553, %v2552
    %v2555 = vmul.f32 %v2547, %v2232
    %v2556 = vadd.f32 %v2554, %v2555
    %s2557 = scalar_lea.vmem [#allocation2], 144
    %v2558 = vld [vmem:[%s2557] sm:$0xff]
    %v2559 = vld [vmem:[%s2557 + $0x8] sm:$0xff]
    %v2560 = vld [vmem:[%s2557 + $0x10] sm:$0xff]
    %v2561 = vadd.f32 %v2558, %v2464
    %v2562 = vadd.f32 %v2559, %v2466
    %v2563 = vmul.f32 %v2561, 0.5
    %v2564 = vmul.f32 %v2562, 0.5
    %v2565 = vtanh.pop %v2563
    %v2566 = vtanh.pop %v2564
    %v2567 = vmul.f32 %v2565, 0.5
    %v2568 = vmul.f32 %v2566, 0.5
    %v2569 = vadd.f32 %v2567, 0.5
    %v2570 = vadd.f32 %v2568, 0.5
    %v2571 = vadd.f32 %v2535, %v602
    %v2572 = vmul.f32 %v2569, %v2571
    %v2573 = vadd.f32 %v2560, %v2572
    %v2574 = vtanh.pop %v2573
    %v2575 = vsub.f32 1.0, %v2570
    %v2576 = vmul.f32 %v2575, %v2574
    %v2577 = vmul.f32 %v2570, %v2254
    %v2578 = vadd.f32 %v2576, %v2577
    %2579 = vmatprep.subr.mxu0 %v514
    %2580 = vmatpush1.msra.mxu0 %v513
    %2581 = vmatprep.subr.mxu0 %v510
    %2582 = vmatpush1.msra.mxu0 %v509
    %2583 = vmatprep.subr.mxu0 %v506
    %2584 = vmatpush1.msra.mxu0 %v505
    %2585 = vmatprep.subr.mxu0 %v502
    %2586 = vmatpush1.msra.mxu0 %v501
    %2587 = vmatprep.subr.mxu0 %v498
    %2588 = vmatpush1.msra.mxu0 %v497
    %2589 = vmatprep.subr.mxu0 %v494
    %2590 = vmatpush1.msra.mxu0 %v493
    %2591 = vmatprep.subr.mxu0 %v490
    %2592 = vmatpush1.msra.mxu0 %v489
    %2593 = vmatprep.subr.mxu0 %v486
    %2594 = vmatpush1.msra.mxu0 %v485
    %2595 = vmatprep.subr.mxu0 %v482
    %2596 = vmatpush1.msra.mxu0 %v481
    %2597 = vmatprep.subr.mxu0 %v478
    %2598 = vmatpush1.msra.mxu0 %v477
    %2599 = vmatprep.subr.mxu0 %v474
    %2600 = vmatpush1.msra.mxu0 %v473
    %2601 = vmatprep.subr.mxu0 %v470
    %2602 = vmatpush1.msra.mxu0 %v469
    %2603 = vmatprep.subr.mxu0 %v466
    %2604 = vmatpush1.msra.mxu0 %v465
    %2605 = vmatprep.subr.mxu0 %v462
    %2606 = vmatpush1.msra.mxu0 %v461
    %2607 = vmatprep.subr.mxu0 %v458
    %2608 = vmatpush1.msra.mxu0 %v457
    %2609 = vmatprep.subr.mxu0 %v454
    %2610 = vmatpush1.msra.mxu0 %v453
    %2611 = vmatprep.subr.mxu0 %v578
    %2612 = vmatpush2.msra.mxu0 %v577
    %2613 = vmatprep.subr.mxu0 %v574
    %2614 = vmatpush2.msra.mxu0 %v573
    %2615 = vmatprep.subr.mxu0 %v570
    %2616 = vmatpush2.msra.mxu0 %v569
    %2617 = vmatprep.subr.mxu0 %v566
    %2618 = vmatpush2.msra.mxu0 %v565
    %2619 = vmatprep.subr.mxu0 %v562
    %2620 = vmatpush2.msra.mxu0 %v561
    %2621 = vmatprep.subr.mxu0 %v558
    %2622 = vmatpush2.msra.mxu0 %v557
    %2623 = vmatprep.subr.mxu0 %v554
    %2624 = vmatpush2.msra.mxu0 %v553
    %2625 = vmatprep.subr.mxu0 %v550
    %2626 = vmatpush2.msra.mxu0 %v549
    %2627 = vmatprep.subr.mxu0 %v546
    %2628 = vmatpush2.msra.mxu0 %v545
    %2629 = vmatprep.subr.mxu0 %v542
    %2630 = vmatpush2.msra.mxu0 %v541
    %2631 = vmatprep.subr.mxu0 %v538
    %2632 = vmatpush2.msra.mxu0 %v537
    %2633 = vmatprep.subr.mxu0 %v534
    %2634 = vmatpush2.msra.mxu0 %v533
    %2635 = vmatprep.subr.mxu0 %v530
    %2636 = vmatpush2.msra.mxu0 %v529
    %2637 = vmatprep.subr.mxu0 %v526
    %2638 = vmatpush2.msra.mxu0 %v525
    %2639 = vmatprep.subr.mxu0 %v522
    %2640 = vmatpush2.msra.mxu0 %v521
    %2641 = vmatprep.subr.mxu0 %v518
    %2642 = vmatpush2.msra.mxu0 %v517
    %2643 = vmatprep.mubr.f32.mxu0 %v2556
    %2644 = vmatmul.mubr.f32.gmra.mxu0 %v2578
    %v2645 = vpop.f32.mrf.mxu0
    %v2646 = vadd.f32 0.0, %v2645
    %v2647 = vpop.f32.mrf.mxu0
    %v2648 = vadd.f32 0.0, %v2647
    %2649 = vdwg.mxu0
    %2650 = vmatprep.subr.mxu0 %v516
    %2651 = vmatpush1.msra.mxu0 %v515
    %2652 = vmatprep.subr.mxu0 %v512
    %2653 = vmatpush1.msra.mxu0 %v511
    %2654 = vmatprep.subr.mxu0 %v508
    %2655 = vmatpush1.msra.mxu0 %v507
    %2656 = vmatprep.subr.mxu0 %v504
    %2657 = vmatpush1.msra.mxu0 %v503
    %2658 = vmatprep.subr.mxu0 %v500
    %2659 = vmatpush1.msra.mxu0 %v499
    %2660 = vmatprep.subr.mxu0 %v496
    %2661 = vmatpush1.msra.mxu0 %v495
    %2662 = vmatprep.subr.mxu0 %v492
    %2663 = vmatpush1.msra.mxu0 %v491
    %2664 = vmatprep.subr.mxu0 %v488
    %2665 = vmatpush1.msra.mxu0 %v487
    %2666 = vmatprep.subr.mxu0 %v484
    %2667 = vmatpush1.msra.mxu0 %v483
    %2668 = vmatprep.subr.mxu0 %v480
    %2669 = vmatpush1.msra.mxu0 %v479
    %2670 = vmatprep.subr.mxu0 %v476
    %2671 = vmatpush1.msra.mxu0 %v475
    %2672 = vmatprep.subr.mxu0 %v472
    %2673 = vmatpush1.msra.mxu0 %v471
    %2674 = vmatprep.subr.mxu0 %v468
    %2675 = vmatpush1.msra.mxu0 %v467
    %2676 = vmatprep.subr.mxu0 %v464
    %2677 = vmatpush1.msra.mxu0 %v463
    %2678 = vmatprep.subr.mxu0 %v460
    %2679 = vmatpush1.msra.mxu0 %v459
    %2680 = vmatprep.subr.mxu0 %v456
    %2681 = vmatpush1.msra.mxu0 %v455
    %2682 = vmatprep.subr.mxu0 %v580
    %2683 = vmatpush2.msra.mxu0 %v579
    %2684 = vmatprep.subr.mxu0 %v576
    %2685 = vmatpush2.msra.mxu0 %v575
    %2686 = vmatprep.subr.mxu0 %v572
    %2687 = vmatpush2.msra.mxu0 %v571
    %2688 = vmatprep.subr.mxu0 %v568
    %2689 = vmatpush2.msra.mxu0 %v567
    %2690 = vmatprep.subr.mxu0 %v564
    %2691 = vmatpush2.msra.mxu0 %v563
    %2692 = vmatprep.subr.mxu0 %v560
    %2693 = vmatpush2.msra.mxu0 %v559
    %2694 = vmatprep.subr.mxu0 %v556
    %2695 = vmatpush2.msra.mxu0 %v555
    %2696 = vmatprep.subr.mxu0 %v552
    %2697 = vmatpush2.msra.mxu0 %v551
    %2698 = vmatprep.subr.mxu0 %v548
    %2699 = vmatpush2.msra.mxu0 %v547
    %2700 = vmatprep.subr.mxu0 %v544
    %2701 = vmatpush2.msra.mxu0 %v543
    %2702 = vmatprep.subr.mxu0 %v540
    %2703 = vmatpush2.msra.mxu0 %v539
    %2704 = vmatprep.subr.mxu0 %v536
    %2705 = vmatpush2.msra.mxu0 %v535
    %2706 = vmatprep.subr.mxu0 %v532
    %2707 = vmatpush2.msra.mxu0 %v531
    %2708 = vmatprep.subr.mxu0 %v528
    %2709 = vmatpush2.msra.mxu0 %v527
    %2710 = vmatprep.subr.mxu0 %v524
    %2711 = vmatpush2.msra.mxu0 %v523
    %2712 = vmatprep.subr.mxu0 %v520
    %2713 = vmatpush2.msra.mxu0 %v519
    %2714 = vmatprep.mubr.f32.mxu0 %v2556
    %2715 = vmatmul.mubr.f32.gmra.mxu0 %v2578
    %v2716 = vpop.f32.mrf.mxu0
    %v2717 = vadd.f32 0.0, %v2716
    %v2718 = vpop.f32.mrf.mxu0
    %v2719 = vadd.f32 0.0, %v2718
    %2720 = vdwg.mxu0
    %2721 = vmatprep.subr.mxu0 %v451
    %2722 = vmatpush1.msra.mxu0 %v450
    %2723 = vmatprep.subr.mxu0 %v448
    %2724 = vmatpush1.msra.mxu0 %v447
    %2725 = vmatprep.subr.mxu0 %v445
    %2726 = vmatpush1.msra.mxu0 %v444
    %2727 = vmatprep.subr.mxu0 %v442
    %2728 = vmatpush1.msra.mxu0 %v441
    %2729 = vmatprep.subr.mxu0 %v439
    %2730 = vmatpush1.msra.mxu0 %v438
    %2731 = vmatprep.subr.mxu0 %v436
    %2732 = vmatpush1.msra.mxu0 %v435
    %2733 = vmatprep.subr.mxu0 %v433
    %2734 = vmatpush1.msra.mxu0 %v432
    %2735 = vmatprep.subr.mxu0 %v430
    %2736 = vmatpush1.msra.mxu0 %v429
    %2737 = vmatprep.subr.mxu0 %v427
    %2738 = vmatpush1.msra.mxu0 %v426
    %2739 = vmatprep.subr.mxu0 %v424
    %2740 = vmatpush1.msra.mxu0 %v423
    %2741 = vmatprep.subr.mxu0 %v421
    %2742 = vmatpush1.msra.mxu0 %v420
    %2743 = vmatprep.subr.mxu0 %v418
    %2744 = vmatpush1.msra.mxu0 %v417
    %2745 = vmatprep.subr.mxu0 %v415
    %2746 = vmatpush1.msra.mxu0 %v414
    %2747 = vmatprep.subr.mxu0 %v412
    %2748 = vmatpush1.msra.mxu0 %v411
    %2749 = vmatprep.subr.mxu0 %v409
    %2750 = vmatpush1.msra.mxu0 %v408
    %2751 = vmatprep.subr.mxu0 %v406
    %2752 = vmatpush1.msra.mxu0 %v405
    %2753 = vmatprep.subr.mxu0 0.0
    %2754 = vmatpush2.msra.mxu0 0.0
    %2755 = vmatprep.subr.mxu0 0.0
    %2756 = vmatpush2.msra.mxu0 0.0
    %2757 = vmatprep.subr.mxu0 0.0
    %2758 = vmatpush2.msra.mxu0 0.0
    %2759 = vmatprep.subr.mxu0 0.0
    %2760 = vmatpush2.msra.mxu0 0.0
    %2761 = vmatprep.subr.mxu0 0.0
    %2762 = vmatpush2.msra.mxu0 0.0
    %2763 = vmatprep.subr.mxu0 0.0
    %2764 = vmatpush2.msra.mxu0 0.0
    %2765 = vmatprep.subr.mxu0 0.0
    %2766 = vmatpush2.msra.mxu0 0.0
    %2767 = vmatprep.subr.mxu0 0.0
    %2768 = vmatpush2.msra.mxu0 0.0
    %2769 = vmatprep.subr.mxu0 0.0
    %2770 = vmatpush2.msra.mxu0 0.0
    %2771 = vmatprep.subr.mxu0 0.0
    %2772 = vmatpush2.msra.mxu0 0.0
    %2773 = vmatprep.subr.mxu0 0.0
    %2774 = vmatpush2.msra.mxu0 0.0
    %2775 = vmatprep.subr.mxu0 0.0
    %2776 = vmatpush2.msra.mxu0 0.0
    %2777 = vmatprep.subr.mxu0 0.0
    %2778 = vmatpush2.msra.mxu0 0.0
    %2779 = vmatprep.subr.mxu0 0.0
    %2780 = vmatpush2.msra.mxu0 0.0
    %2781 = vmatprep.subr.mxu0 0.0
    %2782 = vmatpush2.msra.mxu0 0.0
    %2783 = vmatprep.subr.mxu0 0.0
    %2784 = vmatpush2.msra.mxu0 0.0
    %2785 = vmatprep.mubr.f32.mxu0 0.0
    %2786 = vmatmul.mubr.f32.gmra.mxu0 %v2578
    %v2787 = vpop.f32.mrf.mxu0
    %v2788 = vadd.f32 0.0, %v2787
    %v2789 = vpop.f32.mrf.mxu0
    %v2790 = vadd.f32 0.0, %v2789
    %2791 = vdwg.mxu0
    %2792 = vmatprep.subr.mxu0 0.0
    %2793 = vmatpush1.msra.mxu0 %v452
    %2794 = vmatprep.subr.mxu0 0.0
    %2795 = vmatpush1.msra.mxu0 %v449
    %2796 = vmatprep.subr.mxu0 0.0
    %2797 = vmatpush1.msra.mxu0 %v446
    %2798 = vmatprep.subr.mxu0 0.0
    %2799 = vmatpush1.msra.mxu0 %v443
    %2800 = vmatprep.subr.mxu0 0.0
    %2801 = vmatpush1.msra.mxu0 %v440
    %2802 = vmatprep.subr.mxu0 0.0
    %2803 = vmatpush1.msra.mxu0 %v437
    %2804 = vmatprep.subr.mxu0 0.0
    %2805 = vmatpush1.msra.mxu0 %v434
    %2806 = vmatprep.subr.mxu0 0.0
    %2807 = vmatpush1.msra.mxu0 %v431
    %2808 = vmatprep.subr.mxu0 0.0
    %2809 = vmatpush1.msra.mxu0 %v428
    %2810 = vmatprep.subr.mxu0 0.0
    %2811 = vmatpush1.msra.mxu0 %v425
    %2812 = vmatprep.subr.mxu0 0.0
    %2813 = vmatpush1.msra.mxu0 %v422
    %2814 = vmatprep.subr.mxu0 0.0
    %2815 = vmatpush1.msra.mxu0 %v419
    %2816 = vmatprep.subr.mxu0 0.0
    %2817 = vmatpush1.msra.mxu0 %v416
    %2818 = vmatprep.subr.mxu0 0.0
    %2819 = vmatpush1.msra.mxu0 %v413
    %2820 = vmatprep.subr.mxu0 0.0
    %2821 = vmatpush1.msra.mxu0 %v410
    %2822 = vmatprep.subr.mxu0 0.0
    %2823 = vmatpush1.msra.mxu0 %v407
    %2824 = vmatprep.subr.mxu0 0.0
    %2825 = vmatpush2.msra.mxu0 0.0
    %2826 = vmatprep.subr.mxu0 0.0
    %2827 = vmatpush2.msra.mxu0 0.0
    %2828 = vmatprep.subr.mxu0 0.0
    %2829 = vmatpush2.msra.mxu0 0.0
    %2830 = vmatprep.subr.mxu0 0.0
    %2831 = vmatpush2.msra.mxu0 0.0
    %2832 = vmatprep.subr.mxu0 0.0
    %2833 = vmatpush2.msra.mxu0 0.0
    %2834 = vmatprep.subr.mxu0 0.0
    %2835 = vmatpush2.msra.mxu0 0.0
    %2836 = vmatprep.subr.mxu0 0.0
    %2837 = vmatpush2.msra.mxu0 0.0
    %2838 = vmatprep.subr.mxu0 0.0
    %2839 = vmatpush2.msra.mxu0 0.0
    %2840 = vmatprep.subr.mxu0 0.0
    %2841 = vmatpush2.msra.mxu0 0.0
    %2842 = vmatprep.subr.mxu0 0.0
    %2843 = vmatpush2.msra.mxu0 0.0
    %2844 = vmatprep.subr.mxu0 0.0
    %2845 = vmatpush2.msra.mxu0 0.0
    %2846 = vmatprep.subr.mxu0 0.0
    %2847 = vmatpush2.msra.mxu0 0.0
    %2848 = vmatprep.subr.mxu0 0.0
    %2849 = vmatpush2.msra.mxu0 0.0
    %2850 = vmatprep.subr.mxu0 0.0
    %2851 = vmatpush2.msra.mxu0 0.0
    %2852 = vmatprep.subr.mxu0 0.0
    %2853 = vmatpush2.msra.mxu0 0.0
    %2854 = vmatprep.subr.mxu0 0.0
    %2855 = vmatpush2.msra.mxu0 0.0
    %2856 = vmatprep.mubr.f32.mxu0 0.0
    %2857 = vmatmul.mubr.f32.gmra.mxu0 %v2578
    %v2858 = vpop.f32.mrf.mxu0
    %v2859 = vadd.f32 0.0, %v2858
    %v2860 = vpop.f32.mrf.mxu0
    %2861 = vdwg.mxu0
    %v2862 = vadd.f32 %v2646, %v899
    %v2863 = vadd.f32 %v2648, %v903
    %v2864 = vmul.f32 %v2862, 0.5
    %v2865 = vmul.f32 %v2863, 0.5
    %v2866 = vtanh.pop %v2864
    %v2867 = vtanh.pop %v2865
    %v2868 = vmul.f32 %v2866, 0.5
    %v2869 = vmul.f32 %v2867, 0.5
    %v2870 = vadd.f32 %v2868, 0.5
    %v2871 = vadd.f32 %v2869, 0.5
    %v2872 = vadd.f32 %v2717, %v920
    %v2873 = vadd.f32 %v2719, %v927
    %v2874 = vmul.f32 %v2870, %v2873
    %v2875 = vadd.f32 %v2872, %v2874
    %v2876 = vtanh.pop %v2875
    %v2877 = vsub.f32 1.0, %v2871
    %v2878 = vmul.f32 %v2877, %v2876
    %v2879 = vmul.f32 %v2871, %v2556
    %v2880 = vadd.f32 %v2878, %v2879
    %s2881 = scalar_lea.vmem [#allocation2], 168
    %v2882 = vld [vmem:[%s2881] sm:$0xff]
    %v2883 = vld [vmem:[%s2881 + $0x8] sm:$0xff]
    %v2884 = vld [vmem:[%s2881 + $0x10] sm:$0xff]
    %v2885 = vadd.f32 %v2882, %v2788
    %v2886 = vadd.f32 %v2883, %v2790
    %v2887 = vmul.f32 %v2885, 0.5
    %v2888 = vmul.f32 %v2886, 0.5
    %v2889 = vtanh.pop %v2887
    %v2890 = vtanh.pop %v2888
    %v2891 = vmul.f32 %v2889, 0.5
    %v2892 = vmul.f32 %v2890, 0.5
    %v2893 = vadd.f32 %v2891, 0.5
    %v2894 = vadd.f32 %v2892, 0.5
    %v2895 = vadd.f32 %v2859, %v602
    %v2896 = vmul.f32 %v2893, %v2895
    %v2897 = vadd.f32 %v2884, %v2896
    %v2898 = vtanh.pop %v2897
    %v2899 = vsub.f32 1.0, %v2894
    %v2900 = vmul.f32 %v2899, %v2898
    %v2901 = vmul.f32 %v2894, %v2578
    %v2902 = vadd.f32 %v2900, %v2901
    %2903 = vmatprep.subr.mxu0 %v514
    %2904 = vmatpush1.msra.mxu0 %v513
    %2905 = vmatprep.subr.mxu0 %v510
    %2906 = vmatpush1.msra.mxu0 %v509
    %2907 = vmatprep.subr.mxu0 %v506
    %2908 = vmatpush1.msra.mxu0 %v505
    %2909 = vmatprep.subr.mxu0 %v502
    %2910 = vmatpush1.msra.mxu0 %v501
    %2911 = vmatprep.subr.mxu0 %v498
    %2912 = vmatpush1.msra.mxu0 %v497
    %2913 = vmatprep.subr.mxu0 %v494
    %2914 = vmatpush1.msra.mxu0 %v493
    %2915 = vmatprep.subr.mxu0 %v490
    %2916 = vmatpush1.msra.mxu0 %v489
    %2917 = vmatprep.subr.mxu0 %v486
    %2918 = vmatpush1.msra.mxu0 %v485
    %2919 = vmatprep.subr.mxu0 %v482
    %2920 = vmatpush1.msra.mxu0 %v481
    %2921 = vmatprep.subr.mxu0 %v478
    %2922 = vmatpush1.msra.mxu0 %v477
    %2923 = vmatprep.subr.mxu0 %v474
    %2924 = vmatpush1.msra.mxu0 %v473
    %2925 = vmatprep.subr.mxu0 %v470
    %2926 = vmatpush1.msra.mxu0 %v469
    %2927 = vmatprep.subr.mxu0 %v466
    %2928 = vmatpush1.msra.mxu0 %v465
    %2929 = vmatprep.subr.mxu0 %v462
    %2930 = vmatpush1.msra.mxu0 %v461
    %2931 = vmatprep.subr.mxu0 %v458
    %2932 = vmatpush1.msra.mxu0 %v457
    %2933 = vmatprep.subr.mxu0 %v454
    %2934 = vmatpush1.msra.mxu0 %v453
    %2935 = vmatprep.subr.mxu0 %v578
    %2936 = vmatpush2.msra.mxu0 %v577
    %2937 = vmatprep.subr.mxu0 %v574
    %2938 = vmatpush2.msra.mxu0 %v573
    %2939 = vmatprep.subr.mxu0 %v570
    %2940 = vmatpush2.msra.mxu0 %v569
    %2941 = vmatprep.subr.mxu0 %v566
    %2942 = vmatpush2.msra.mxu0 %v565
    %2943 = vmatprep.subr.mxu0 %v562
    %2944 = vmatpush2.msra.mxu0 %v561
    %2945 = vmatprep.subr.mxu0 %v558
    %2946 = vmatpush2.msra.mxu0 %v557
    %2947 = vmatprep.subr.mxu0 %v554
    %2948 = vmatpush2.msra.mxu0 %v553
    %2949 = vmatprep.subr.mxu0 %v550
    %2950 = vmatpush2.msra.mxu0 %v549
    %2951 = vmatprep.subr.mxu0 %v546
    %2952 = vmatpush2.msra.mxu0 %v545
    %2953 = vmatprep.subr.mxu0 %v542
    %2954 = vmatpush2.msra.mxu0 %v541
    %2955 = vmatprep.subr.mxu0 %v538
    %2956 = vmatpush2.msra.mxu0 %v537
    %2957 = vmatprep.subr.mxu0 %v534
    %2958 = vmatpush2.msra.mxu0 %v533
    %2959 = vmatprep.subr.mxu0 %v530
    %2960 = vmatpush2.msra.mxu0 %v529
    %2961 = vmatprep.subr.mxu0 %v526
    %2962 = vmatpush2.msra.mxu0 %v525
    %2963 = vmatprep.subr.mxu0 %v522
    %2964 = vmatpush2.msra.mxu0 %v521
    %2965 = vmatprep.subr.mxu0 %v518
    %2966 = vmatpush2.msra.mxu0 %v517
    %2967 = vmatprep.mubr.f32.mxu0 %v2880
    %2968 = vmatmul.mubr.f32.gmra.mxu0 %v2902
    %v2969 = vpop.f32.mrf.mxu0
    %v2970 = vadd.f32 0.0, %v2969
    %v2971 = vpop.f32.mrf.mxu0
    %v2972 = vadd.f32 0.0, %v2971
    %2973 = vdwg.mxu0
    %2974 = vmatprep.subr.mxu0 %v516
    %2975 = vmatpush1.msra.mxu0 %v515
    %2976 = vmatprep.subr.mxu0 %v512
    %2977 = vmatpush1.msra.mxu0 %v511
    %2978 = vmatprep.subr.mxu0 %v508
    %2979 = vmatpush1.msra.mxu0 %v507
    %2980 = vmatprep.subr.mxu0 %v504
    %2981 = vmatpush1.msra.mxu0 %v503
    %2982 = vmatprep.subr.mxu0 %v500
    %2983 = vmatpush1.msra.mxu0 %v499
    %2984 = vmatprep.subr.mxu0 %v496
    %2985 = vmatpush1.msra.mxu0 %v495
    %2986 = vmatprep.subr.mxu0 %v492
    %2987 = vmatpush1.msra.mxu0 %v491
    %2988 = vmatprep.subr.mxu0 %v488
    %2989 = vmatpush1.msra.mxu0 %v487
    %2990 = vmatprep.subr.mxu0 %v484
    %2991 = vmatpush1.msra.mxu0 %v483
    %2992 = vmatprep.subr.mxu0 %v480
    %2993 = vmatpush1.msra.mxu0 %v479
    %2994 = vmatprep.subr.mxu0 %v476
    %2995 = vmatpush1.msra.mxu0 %v475
    %2996 = vmatprep.subr.mxu0 %v472
    %2997 = vmatpush1.msra.mxu0 %v471
    %2998 = vmatprep.subr.mxu0 %v468
    %2999 = vmatpush1.msra.mxu0 %v467
    %3000 = vmatprep.subr.mxu0 %v464
    %3001 = vmatpush1.msra.mxu0 %v463
    %3002 = vmatprep.subr.mxu0 %v460
    %3003 = vmatpush1.msra.mxu0 %v459
    %3004 = vmatprep.subr.mxu0 %v456
    %3005 = vmatpush1.msra.mxu0 %v455
    %3006 = vmatprep.subr.mxu0 %v580
    %3007 = vmatpush2.msra.mxu0 %v579
    %3008 = vmatprep.subr.mxu0 %v576
    %3009 = vmatpush2.msra.mxu0 %v575
    %3010 = vmatprep.subr.mxu0 %v572
    %3011 = vmatpush2.msra.mxu0 %v571
    %3012 = vmatprep.subr.mxu0 %v568
    %3013 = vmatpush2.msra.mxu0 %v567
    %3014 = vmatprep.subr.mxu0 %v564
    %3015 = vmatpush2.msra.mxu0 %v563
    %3016 = vmatprep.subr.mxu0 %v560
    %3017 = vmatpush2.msra.mxu0 %v559
    %3018 = vmatprep.subr.mxu0 %v556
    %3019 = vmatpush2.msra.mxu0 %v555
    %3020 = vmatprep.subr.mxu0 %v552
    %3021 = vmatpush2.msra.mxu0 %v551
    %3022 = vmatprep.subr.mxu0 %v548
    %3023 = vmatpush2.msra.mxu0 %v547
    %3024 = vmatprep.subr.mxu0 %v544
    %3025 = vmatpush2.msra.mxu0 %v543
    %3026 = vmatprep.subr.mxu0 %v540
    %3027 = vmatpush2.msra.mxu0 %v539
    %3028 = vmatprep.subr.mxu0 %v536
    %3029 = vmatpush2.msra.mxu0 %v535
    %3030 = vmatprep.subr.mxu0 %v532
    %3031 = vmatpush2.msra.mxu0 %v531
    %3032 = vmatprep.subr.mxu0 %v528
    %3033 = vmatpush2.msra.mxu0 %v527
    %3034 = vmatprep.subr.mxu0 %v524
    %3035 = vmatpush2.msra.mxu0 %v523
    %3036 = vmatprep.subr.mxu0 %v520
    %3037 = vmatpush2.msra.mxu0 %v519
    %3038 = vmatprep.mubr.f32.mxu0 %v2880
    %3039 = vmatmul.mubr.f32.gmra.mxu0 %v2902
    %v3040 = vpop.f32.mrf.mxu0
    %v3041 = vadd.f32 0.0, %v3040
    %v3042 = vpop.f32.mrf.mxu0
    %v3043 = vadd.f32 0.0, %v3042
    %3044 = vdwg.mxu0
    %v3045 = vadd.f32 %v2970, %v899
    %v3046 = vadd.f32 %v2972, %v903
    %v3047 = vmul.f32 %v3045, 0.5
    %v3048 = vmul.f32 %v3046, 0.5
    %v3049 = vtanh.pop %v3047
    %v3050 = vtanh.pop %v3048
    %v3051 = vmul.f32 %v3049, 0.5
    %v3052 = vmul.f32 %v3050, 0.5
    %v3053 = vadd.f32 %v3051, 0.5
    %v3054 = vadd.f32 %v3052, 0.5
    %v3055 = vadd.f32 %v3041, %v920
    %v3056 = vadd.f32 %v3043, %v927
    %v3057 = vmul.f32 %v3053, %v3056
    %v3058 = vadd.f32 %v3055, %v3057
    %v3059 = vtanh.pop %v3058
    %v3060 = vsub.f32 1.0, %v3054
    %v3061 = vmul.f32 %v3060, %v3059
    %v3062 = vmul.f32 %v3054, %v2880
    %v3063 = vadd.f32 %v3061, %v3062
    %v3064 = vld [vmem:[#allocation14] sm:$0xff]
    %v3065 = vld [vmem:[#allocation14 + $0x8] sm:$0xff]
    %v3066 = vld [vmem:[#allocation14 + $0x10] sm:$0xff]
    %v3067 = vld [vmem:[#allocation14 + $0x18] sm:$0xff]
    %v3068 = vld [vmem:[#allocation14 + $0x20] sm:$0xff]
    %v3069 = vld [vmem:[#allocation14 + $0x28] sm:$0xff]
    %v3070 = vld [vmem:[#allocation14 + $0x30] sm:$0xff]
    %v3071 = vld [vmem:[#allocation14 + $0x38] sm:$0xff]
    %v3072 = vld [vmem:[#allocation14 + $0x40] sm:$0xff]
    %v3073 = vld [vmem:[#allocation14 + $0x48] sm:$0xff]
    %v3074 = vld [vmem:[#allocation14 + $0x50] sm:$0xff]
    %v3075 = vld [vmem:[#allocation14 + $0x58] sm:$0xff]
    %v3076 = vld [vmem:[#allocation14 + $0x60] sm:$0xff]
    %v3077 = vld [vmem:[#allocation14 + $0x68] sm:$0xff]
    %v3078 = vld [vmem:[#allocation14 + $0x70] sm:$0xff]
    %v3079 = vld [vmem:[#allocation14 + $0x78] sm:$0xff]
    %v3080 = vld [vmem:[%s10] sm:$0x1]
    %v3082 = vlaneseq
    %v3083 = vshrl.u32 %v3082, 7
    %v3084 = vsub.s32 0, %v3083
    %v3085 = vrot.slane %v3080, %v3084
    %3087 = vmatprep.subr.mxu0 0.0
    %3088 = vmatpush1.msra.mxu0 %v3079
    %3089 = vmatprep.subr.mxu0 0.0
    %3090 = vmatpush1.msra.mxu0 %v3078
    %3091 = vmatprep.subr.mxu0 0.0
    %3092 = vmatpush1.msra.mxu0 %v3077
    %3093 = vmatprep.subr.mxu0 0.0
    %3094 = vmatpush1.msra.mxu0 %v3076
    %3095 = vmatprep.subr.mxu0 0.0
    %3096 = vmatpush1.msra.mxu0 %v3075
    %3097 = vmatprep.subr.mxu0 0.0
    %3098 = vmatpush1.msra.mxu0 %v3074
    %3099 = vmatprep.subr.mxu0 0.0
    %3100 = vmatpush1.msra.mxu0 %v3073
    %3101 = vmatprep.subr.mxu0 0.0
    %3102 = vmatpush1.msra.mxu0 %v3072
    %3103 = vmatprep.subr.mxu0 0.0
    %3104 = vmatpush1.msra.mxu0 %v3071
    %3105 = vmatprep.subr.mxu0 0.0
    %3106 = vmatpush1.msra.mxu0 %v3070
    %3107 = vmatprep.subr.mxu0 0.0
    %3108 = vmatpush1.msra.mxu0 %v3069
    %3109 = vmatprep.subr.mxu0 0.0
    %3110 = vmatpush1.msra.mxu0 %v3068
    %3111 = vmatprep.subr.mxu0 0.0
    %3112 = vmatpush1.msra.mxu0 %v3067
    %3113 = vmatprep.subr.mxu0 0.0
    %3114 = vmatpush1.msra.mxu0 %v3066
    %3115 = vmatprep.subr.mxu0 0.0
    %3116 = vmatpush1.msra.mxu0 %v3065
    %3117 = vmatprep.subr.mxu0 0.0
    %3118 = vmatpush1.msra.mxu0 %v3064
    %3119 = vmatprep.subr.mxu0 0.0
    %3120 = vmatpush2.msra.mxu0 0.0
    %3121 = vmatprep.subr.mxu0 0.0
    %3122 = vmatpush2.msra.mxu0 0.0
    %3123 = vmatprep.subr.mxu0 0.0
    %3124 = vmatpush2.msra.mxu0 0.0
    %3125 = vmatprep.subr.mxu0 0.0
    %3126 = vmatpush2.msra.mxu0 0.0
    %3127 = vmatprep.subr.mxu0 0.0
    %3128 = vmatpush2.msra.mxu0 0.0
    %3129 = vmatprep.subr.mxu0 0.0
    %3130 = vmatpush2.msra.mxu0 0.0
    %3131 = vmatprep.subr.mxu0 0.0
    %3132 = vmatpush2.msra.mxu0 0.0
    %3133 = vmatprep.subr.mxu0 0.0
    %3134 = vmatpush2.msra.mxu0 0.0
    %3135 = vmatprep.subr.mxu0 0.0
    %3136 = vmatpush2.msra.mxu0 0.0
    %3137 = vmatprep.subr.mxu0 0.0
    %3138 = vmatpush2.msra.mxu0 0.0
    %3139 = vmatprep.subr.mxu0 0.0
    %3140 = vmatpush2.msra.mxu0 0.0
    %3141 = vmatprep.subr.mxu0 0.0
    %3142 = vmatpush2.msra.mxu0 0.0
    %3143 = vmatprep.subr.mxu0 0.0
    %3144 = vmatpush2.msra.mxu0 0.0
    %3145 = vmatprep.subr.mxu0 0.0
    %3146 = vmatpush2.msra.mxu0 0.0
    %3147 = vmatprep.subr.mxu0 0.0
    %3148 = vmatpush2.msra.mxu0 0.0
    %3149 = vmatprep.subr.mxu0 0.0
    %3150 = vmatpush2.msra.mxu0 0.0
    %3151 = vmatprep.mubr.f32.mxu0 0.0
    %3152 = vmatmul.mubr.f32.gmra.mxu0 %v3063
    %v3153 = vpop.f32.mrf.mxu0
    %v3154 = vadd.f32 %v3085, %v3153
    %v3155 = vpop.f32.mrf.mxu0
    %3156 = vdwg.mxu0
    %3157 = vst [vmem:[#allocation15] sm:$0xff] %v3154
    // Predicated region
    $region66: #{tpu_custom_call.1} parent=1 // pred_check
      _
    $region67: #{tpu_custom_call.1} parent=1 // pred_check_branch
      %3159 = sbr.rel (0) target = $region69
    $region68: #{tpu_custom_call.1} parent=1 // pred_region
      %s3161 = ssub.s32 128, 128
      %3162 = vsyncadd [#allocation8], %s3161
      %s3164 = sshll.u32 [#allocation15], 4
      %s3165 = int_to_ptr.vmem [resolvable:$true] %s3164
      %3167 = dma.vmem_to_hbm [thread:$0]  %s3165, 128, %s11, [#allocation8]
    $region69: #{tpu_custom_call.1} parent=1 // pred_fallthru
      _
    // Predicated region
    $region70: #{tpu_custom_call.1} parent=1 // pred_check
      _
    $region71: #{tpu_custom_call.1} parent=1 // pred_check_branch
      %3169 = sbr.rel (0) target = $region73
    $region72: #{tpu_custom_call.1} parent=1 // pred_region
      %3170 = dma.done [#allocation8], 128
    $region73: #{tpu_custom_call.1} parent=1 // pred_fallthru
      _
    %3171 = vsyncpa [#allocation7], 1
    %3172 = vsyncpa [#allocation10], 1
    %3173 = vsyncpa [#allocation13], 1
    %3174 = vsyncpa [#allocation8], 1

</llo_original>
